<compile_context>
chip_gen: v6e
topology: v6e:2x2x1
jax: 0.10.0
libtpu: 0.0.40
codegen_flags: <defaults>
</compile_context>

<pallas_src>
import jax
import jax.numpy as jnp
from jax.experimental import pallas as pl
from jax.experimental.pallas import tpu as pltpu

# ---------------- small synthetic ViT config (mirrors CLIP visual) ----------
BATCH = 2
IN_CH = 3
IMG = 16
PATCH = 8
GRID = IMG // PATCH
N_PATCHES = GRID * GRID          # 4
TOKENS = N_PATCHES + 1           # 5 (CLS + patches)
TOKENS_PAD = 8                   # sublane-aligned per-image token stride
WIDTH = 32                       # transformer width
HEADS = 4
HEAD_DIM = WIDTH // HEADS        # 8
LAYERS = 2
OUT_DIM = 16                     # visual projection output dim (embed_dim)
OUT_PAD = 128                    # lane-dense output slab width
EPS = 1e-5
PATCH_DIM = IN_CH * PATCH * PATCH   # 192
BTP = BATCH * TOKENS_PAD            # 16 padded token rows total


def _ln(x, g, b):
    """LayerNorm over the last dim (biased variance, matches nn.LayerNorm)."""
    mean = jnp.mean(x, axis=-1, keepdims=True)
    xc = x - mean
    var = jnp.mean(xc * xc, axis=-1, keepdims=True)
    return xc * jax.lax.rsqrt(var + EPS) * g + b


# --------------------------- fused visual kernel -----------------------------
def _clip_visual_kernel(
        patches_ref, conv_w_ref, tok0_ref,
        ln_pre_g_ref, ln_pre_b_ref, ln_post_g_ref, ln_post_b_ref, proj_ref,
        ln1_g_ref, ln1_b_ref, wqkv_ref, bqkv_ref, wo_ref, bo_ref,
        ln2_g_ref, ln2_b_ref, w1_ref, b1_ref, w2_ref, b2_ref,
        o_ref, tok_ref):
    layer = pl.program_id(0)

    # ---- first grid step: patch embed + CLS + pos-emb + ln_pre --------------
    @pl.when(layer == 0)
    def _init():
        # conv1 (stride = kernel = PATCH, no bias) as one aligned matmul over
        # the pre-padded patch matrix; CLS + positional embeddings arrive
        # pre-assembled in tok0 at their padded row slots, so this is a single
        # full-block add with no sub-8-row sublane stores.
        patch_emb = jnp.dot(patches_ref[...], conv_w_ref[...],
                            preferred_element_type=jnp.float32)   # (BTP, W)
        tok_ref[...] = _ln(tok0_ref[...] + patch_emb,
                           ln_pre_g_ref[...], ln_pre_b_ref[...])

    # ---- residual attention block `layer` (weights selected by index_map) ---
    x = tok_ref[...]                                               # (BTP, W)
    xn = _ln(x, ln1_g_ref[0], ln1_b_ref[0])

    scale = 1.0 / float(HEAD_DIM) ** 0.5
    q = (jnp.dot(xn, wqkv_ref[0, 0], preferred_element_type=jnp.float32)
         + bqkv_ref[0, 0]) * scale                  # 1/sqrt(d) folded into q
    k = (jnp.dot(xn, wqkv_ref[0, 1], preferred_element_type=jnp.float32)
         + bqkv_ref[0, 1])
    v = (jnp.dot(xn, wqkv_ref[0, 2], preferred_element_type=jnp.float32)
         + bqkv_ref[0, 2])

    # batch on its own axis: (B, 8, W).  The reshape is layout-preserving
    # because TOKENS_PAD == 8 == vreg sublane count.
    q3 = q.reshape(BATCH, TOKENS_PAD, WIDTH)
    k3 = k.reshape(BATCH, TOKENS_PAD, WIDTH)
    v3 = v.reshape(BATCH, TOKENS_PAD, WIDTH)

    # key-padding mask: only the first TOKENS key slots per image are real.
    key_ids = jax.lax.broadcasted_iota(jnp.int32, (1, 1, TOKENS_PAD), 2)
    key_mask = jnp.where(key_ids < TOKENS, 0.0, -1e30)             # (1,1,8)

    wo = wo_ref[0]                                                 # (W, W)
    attn3 = None
    for h in range(HEADS):                                         # static unroll
        lo, hi = h * HEAD_DIM, (h + 1) * HEAD_DIM
        s = jnp.einsum('bqd,bkd->bqk', q3[:, :, lo:hi], k3[:, :, lo:hi],
                       preferred_element_type=jnp.float32)         # (B, 8, 8)
        s = s + key_mask                                           # mask pad keys
        s = s - jnp.max(s, axis=-1, keepdims=True)                 # stable softmax
        p = jnp.exp(s)
        p = p * pl.reciprocal(jnp.sum(p, axis=-1, keepdims=True), approx=True)
        oh = jnp.einsum('bqk,bkd->bqd', p, v3[:, :, lo:hi],
                        preferred_element_type=jnp.float32)        # (B, 8, HD)
        # output projection accumulated per head: sum_h O_h @ Wo[hD:(h+1)D, :]
        # (wo row slices are 8-aligned sublane slices; no lane concat)
        contrib = jnp.einsum('bqd,dw->bqw', oh, wo[lo:hi, :],
                             preferred_element_type=jnp.float32)   # (B, 8, W)
        attn3 = contrib if attn3 is None else attn3 + contrib
    x = x + attn3.reshape(BTP, WIDTH) + bo_ref[0]

    # ---- MLP (QuickGELU, exact sigmoid) --------------------------------------
    xn = _ln(x, ln2_g_ref[0], ln2_b_ref[0])
    h1 = jnp.dot(xn, w1_ref[0], preferred_element_type=jnp.float32) + b1_ref[0]
    h1 = h1 * (1.0 / (1.0 + jnp.exp(-1.702 * h1)))                 # QuickGELU
    x = x + jnp.dot(h1, w2_ref[0], preferred_element_type=jnp.float32) + b2_ref[0]
    tok_ref[...] = x

    # ---- last grid step: ln_post + projection over the whole padded block ----
    @pl.when(layer == pl.num_programs(0) - 1)
    def _final():
        xo = _ln(tok_ref[...], ln_post_g_ref[...], ln_post_b_ref[...])
        # lane-dense (BTP, 128) store; wrapper picks CLS rows / un-pads OUT_DIM
        o_ref[...] = jnp.dot(xo, proj_ref[...],
                             preferred_element_type=jnp.float32)


# --------------------------- parameters (synthetic) --------------------------
def init_params(key):
    def nrm(k, shape, std=0.02):
        return jax.random.normal(k, shape, jnp.float32) * std

    keys = jax.random.split(key, 8)
    return {
        # conv1 weight [WIDTH, C, P, P] stored pre-flattened as (C*P*P, WIDTH)
        "conv_w": nrm(keys[0], (PATCH_DIM, WIDTH)),
        "class_emb": nrm(keys[1], (1, WIDTH)),
        "pos_emb": nrm(keys[2], (TOKENS, WIDTH)),
        "ln_pre_g": jnp.ones((1, WIDTH), jnp.float32),
        "ln_pre_b": jnp.zeros((1, WIDTH), jnp.float32),
        "ln_post_g": jnp.ones((1, WIDTH), jnp.float32),
        "ln_post_b": jnp.zeros((1, WIDTH), jnp.float32),
        "proj": nrm(keys[3], (WIDTH, OUT_DIM)),
        # per-layer weights stacked along a leading LAYERS axis;
        # qkv pre-split into q/k/v (no in-kernel lane slicing of a fused qkv)
        "ln1_g": jnp.ones((LAYERS, 1, WIDTH), jnp.float32),
        "ln1_b": jnp.zeros((LAYERS, 1, WIDTH), jnp.float32),
        "ln2_g": jnp.ones((LAYERS, 1, WIDTH), jnp.float32),
        "ln2_b": jnp.zeros((LAYERS, 1, WIDTH), jnp.float32),
        "wqkv": nrm(keys[4], (LAYERS, 3, WIDTH, WIDTH)),
        "bqkv": jnp.zeros((LAYERS, 3, 1, WIDTH), jnp.float32),
        "wo": nrm(keys[5], (LAYERS, WIDTH, WIDTH)),
        "bo": jnp.zeros((LAYERS, 1, WIDTH), jnp.float32),
        "w1": nrm(keys[6], (LAYERS, WIDTH, 4 * WIDTH)),
        "b1": jnp.zeros((LAYERS, 1, 4 * WIDTH), jnp.float32),
        "w2": nrm(keys[7], (LAYERS, 4 * WIDTH, WIDTH)),
        "b2": jnp.zeros((LAYERS, 1, WIDTH), jnp.float32),
    }


# ------------------------------ forward pass ---------------------------------
@jax.jit
def clip_visual_forward(images, params):
    B = images.shape[0]

    # unfold non-overlapping patches; flatten order (c, ph, pw) matches the
    # PyTorch conv1 weight layout [WIDTH, C, P, P].
    x = images.reshape(B, IN_CH, GRID, PATCH, GRID, PATCH)
    patches = x.transpose(0, 2, 4, 1, 3, 5).reshape(B, N_PATCHES, PATCH_DIM)
    # pad to the 8-row per-image stride: row 0 is the CLS slot, rows
    # TOKENS..7 are pad rows (all zero -> zero patch embeddings).
    patches_pad = jnp.zeros((B, TOKENS_PAD, PATCH_DIM), jnp.float32)
    patches_pad = patches_pad.at[:, 1:TOKENS, :].set(patches)
    patches_pad = patches_pad.reshape(B * TOKENS_PAD, PATCH_DIM)

    # token init template assembled XLA-side (free): CLS emb + pos[0] at row 0,
    # pos[1:] at rows 1..TOKENS-1, zeros on pad rows.  The kernel only does one
    # aligned full-block add.
    tok0 = jnp.zeros((TOKENS_PAD, WIDTH), jnp.float32)
    tok0 = tok0.at[0:1, :].set(params["class_emb"] + params["pos_emb"][0:1, :])
    tok0 = tok0.at[1:TOKENS, :].set(params["pos_emb"][1:, :])
    tok0 = jnp.tile(tok0[None], (B, 1, 1)).reshape(B * TOKENS_PAD, WIDTH)

    # lane-dense visual projection: zero-pad OUT_DIM -> 128 lanes
    proj_pad = jnp.zeros((WIDTH, OUT_PAD), jnp.float32)
    proj_pad = proj_pad.at[:, :OUT_DIM].set(params["proj"])

    c2 = lambda l: (0, 0)            # layer-invariant 2D operands (loaded once)
    c3 = lambda l: (l, 0, 0)         # per-layer stacked operands
    c4 = lambda l: (l, 0, 0, 0)

    grid_spec = pltpu.PrefetchScalarGridSpec(
        num_scalar_prefetch=0,
        grid=(LAYERS,),
        in_specs=[
            pl.BlockSpec((B * TOKENS_PAD, PATCH_DIM), c2),   # patches (padded)
            pl.BlockSpec((PATCH_DIM, WIDTH), c2),            # conv_w
            pl.BlockSpec((B * TOKENS_PAD, WIDTH), c2),       # tok0 template
            pl.BlockSpec((1, WIDTH), c2),                    # ln_pre_g
            pl.BlockSpec((1, WIDTH), c2),                    # ln_pre_b
            pl.BlockSpec((1, WIDTH), c2),                    # ln_post_g
            pl.BlockSpec((1, WIDTH), c2),                    # ln_post_b
            pl.BlockSpec((WIDTH, OUT_PAD), c2),              # proj (lane-padded)
            pl.BlockSpec((1, 1, WIDTH), c3),                 # ln1_g
            pl.BlockSpec((1, 1, WIDTH), c3),                 # ln1_b
            pl.BlockSpec((1, 3, WIDTH, WIDTH), c4),          # wqkv (pre-split)
            pl.BlockSpec((1, 3, 1, WIDTH), c4),              # bqkv
            pl.BlockSpec((1, WIDTH, WIDTH), c3),             # wo
            pl.BlockSpec((1, 1, WIDTH), c3),                 # bo
            pl.BlockSpec((1, 1, WIDTH), c3),                 # ln2_g
            pl.BlockSpec((1, 1, WIDTH), c3),                 # ln2_b
            pl.BlockSpec((1, WIDTH, 4 * WIDTH), c3),         # w1
            pl.BlockSpec((1, 1, 4 * WIDTH), c3),             # b1
            pl.BlockSpec((1, 4 * WIDTH, WIDTH), c3),         # w2
            pl.BlockSpec((1, 1, WIDTH), c3),                 # b2
        ],
        out_specs=pl.BlockSpec((B * TOKENS_PAD, OUT_PAD), c2),
        scratch_shapes=[pltpu.VMEM((B * TOKENS_PAD, WIDTH), jnp.float32)],
    )

    out = pl.pallas_call(
        _clip_visual_kernel,
        out_shape=jax.ShapeDtypeStruct((B * TOKENS_PAD, OUT_PAD), jnp.float32),
        grid_spec=grid_spec,
        compiler_params=pltpu.CompilerParams(
            dimension_semantics=("arbitrary",)),   # layer loop carries tokens
    )(patches_pad, params["conv_w"], tok0,
      params["ln_pre_g"], params["ln_pre_b"],
      params["ln_post_g"], params["ln_post_b"], proj_pad,
      params["ln1_g"], params["ln1_b"], params["wqkv"], params["bqkv"],
      params["wo"], params["bo"], params["ln2_g"], params["ln2_b"],
      params["w1"], params["b1"], params["w2"], params["b2"])

    # pick the CLS row of every image and drop the lane padding (XLA-side, free)
    feats = out.reshape(B, TOKENS_PAD, OUT_PAD)[:, 0, :OUT_DIM]
    return feats  # [B, OUT_DIM]


if __name__ == "__main__":
    key = jax.random.PRNGKey(0)
    pkey, ikey = jax.random.split(key)
    params = init_params(pkey)
    images = jax.random.normal(ikey, (BATCH, IN_CH, IMG, IMG), jnp.float32)

    feats = clip_visual_forward(images, params)
    jax.block_until_ready(feats)

    assert feats.shape == (BATCH, OUT_DIM)
    assert bool(jnp.all(jnp.isfinite(feats)))
    print("KERNEL_OK")
</pallas_src>

<mosaic_0001>
module attributes {stable_mosaic.version = 11 : i64} {
  func.func @_clip_visual_kernel(%arg0: i32, %arg1: memref<16x192xf32, #tpu.memory_space<vmem>>, %arg2: memref<192x32xf32, #tpu.memory_space<vmem>>, %arg3: memref<16x32xf32, #tpu.memory_space<vmem>>, %arg4: memref<1x32xf32, #tpu.memory_space<vmem>>, %arg5: memref<1x32xf32, #tpu.memory_space<vmem>>, %arg6: memref<1x32xf32, #tpu.memory_space<vmem>>, %arg7: memref<1x32xf32, #tpu.memory_space<vmem>>, %arg8: memref<32x128xf32, #tpu.memory_space<vmem>>, %arg9: memref<1x1x32xf32, #tpu.memory_space<vmem>>, %arg10: memref<1x1x32xf32, #tpu.memory_space<vmem>>, %arg11: memref<1x3x32x32xf32, #tpu.memory_space<vmem>>, %arg12: memref<1x3x1x32xf32, #tpu.memory_space<vmem>>, %arg13: memref<1x32x32xf32, #tpu.memory_space<vmem>>, %arg14: memref<1x1x32xf32, #tpu.memory_space<vmem>>, %arg15: memref<1x1x32xf32, #tpu.memory_space<vmem>>, %arg16: memref<1x1x32xf32, #tpu.memory_space<vmem>>, %arg17: memref<1x32x128xf32, #tpu.memory_space<vmem>>, %arg18: memref<1x1x128xf32, #tpu.memory_space<vmem>>, %arg19: memref<1x128x32xf32, #tpu.memory_space<vmem>>, %arg20: memref<1x1x32xf32, #tpu.memory_space<vmem>>, %arg21: memref<16x128xf32, #tpu.memory_space<vmem>>, %arg22: memref<16x32xf32, #tpu.memory_space<vmem>>) attributes {dimension_semantics = [#tpu.dimension_semantics<arbitrary>], iteration_bounds = array<i64: 2>, scalar_prefetch = 0 : i64, scratch_operands = 1 : i64, tpu.core_type = #tpu.core_type<tc>, window_params = [{pipeline_mode = #tpu.pipeline_mode<synchronous>, transform_indices = @transform_0, window_bounds = array<i64: 16, 192>}, {pipeline_mode = #tpu.pipeline_mode<synchronous>, transform_indices = @transform_1, window_bounds = array<i64: 192, 32>}, {pipeline_mode = #tpu.pipeline_mode<synchronous>, transform_indices = @transform_2, window_bounds = array<i64: 16, 32>}, {pipeline_mode = #tpu.pipeline_mode<synchronous>, transform_indices = @transform_3, window_bounds = array<i64: 1, 32>}, {pipeline_mode = #tpu.pipeline_mode<synchronous>, transform_indices = @transform_4, window_bounds = array<i64: 1, 32>}, {pipeline_mode = #tpu.pipeline_mode<synchronous>, transform_indices = @transform_5, window_bounds = array<i64: 1, 32>}, {pipeline_mode = #tpu.pipeline_mode<synchronous>, transform_indices = @transform_6, window_bounds = array<i64: 1, 32>}, {pipeline_mode = #tpu.pipeline_mode<synchronous>, transform_indices = @transform_7, window_bounds = array<i64: 32, 128>}, {transform_indices = @transform_8, window_bounds = array<i64: 1, 1, 32>}, {transform_indices = @transform_9, window_bounds = array<i64: 1, 1, 32>}, {transform_indices = @transform_10, window_bounds = array<i64: 1, 3, 32, 32>}, {transform_indices = @transform_11, window_bounds = array<i64: 1, 3, 1, 32>}, {transform_indices = @transform_12, window_bounds = array<i64: 1, 32, 32>}, {transform_indices = @transform_13, window_bounds = array<i64: 1, 1, 32>}, {transform_indices = @transform_14, window_bounds = array<i64: 1, 1, 32>}, {transform_indices = @transform_15, window_bounds = array<i64: 1, 1, 32>}, {transform_indices = @transform_16, window_bounds = array<i64: 1, 32, 128>}, {transform_indices = @transform_17, window_bounds = array<i64: 1, 1, 128>}, {transform_indices = @transform_18, window_bounds = array<i64: 1, 128, 32>}, {transform_indices = @transform_19, window_bounds = array<i64: 1, 1, 32>}, {pipeline_mode = #tpu.pipeline_mode<synchronous>, transform_indices = @transform_20, window_bounds = array<i64: 16, 128>}]} {
    %c0_i32 = arith.constant 0 : i32
    %0 = arith.cmpi eq, %arg0, %c0_i32 : i32
    %1 = arith.extui %0 : i1 to i32
    %c0_i32_0 = arith.constant 0 : i32
    %2 = arith.cmpi ne, %1, %c0_i32_0 : i32
    scf.if %2 {
      %c0_97 = arith.constant 0 : index
      %c0_98 = arith.constant 0 : index
      %198 = vector.load %arg1[%c0_97, %c0_98] : memref<16x192xf32, #tpu.memory_space<vmem>>, vector<16x192xf32>
      %c0_99 = arith.constant 0 : index
      %c0_100 = arith.constant 0 : index
      %199 = vector.load %arg2[%c0_99, %c0_100] : memref<192x32xf32, #tpu.memory_space<vmem>>, vector<192x32xf32>
      %cst_101 = arith.constant dense<0.000000e+00> : vector<16x32xf32>
      %200 = tpu.matmul %198, %199, %cst_101 {dimension_numbers = #tpu.dot_dimension_numbers<[1], [0], [0], [1], [0, 0, 1, 1], [], []>} : vector<16x192xf32>, vector<192x32xf32>, vector<16x32xf32> -> vector<16x32xf32>
      %c0_102 = arith.constant 0 : index
      %c0_103 = arith.constant 0 : index
      %201 = vector.load %arg3[%c0_102, %c0_103] : memref<16x32xf32, #tpu.memory_space<vmem>>, vector<16x32xf32>
      %202 = arith.addf %201, %200 : vector<16x32xf32>
      %c0_104 = arith.constant 0 : index
      %c0_105 = arith.constant 0 : index
      %203 = vector.load %arg4[%c0_104, %c0_105] : memref<1x32xf32, #tpu.memory_space<vmem>>, vector<1x32xf32>
      %c0_106 = arith.constant 0 : index
      %c0_107 = arith.constant 0 : index
      %204 = vector.load %arg5[%c0_106, %c0_107] : memref<1x32xf32, #tpu.memory_space<vmem>>, vector<1x32xf32>
      %cst_108 = arith.constant dense<0.000000e+00> : vector<16xf32>
      %205 = vector.multi_reduction <add>, %202, %cst_108 [1] : vector<16x32xf32> to vector<16xf32>
      %206 = vector.shape_cast %205 : vector<16xf32> to vector<16x1xf32>
      %cst_109 = arith.constant 3.200000e+01 : f32
      %207 = vector.broadcast %cst_109 : f32 to vector<16x1xf32>
      %208 = arith.divf %206, %207 : vector<16x1xf32>
      %209 = vector.broadcast %208 : vector<16x1xf32> to vector<16x32xf32>
      %210 = arith.subf %202, %209 : vector<16x32xf32>
      %211 = arith.mulf %210, %210 : vector<16x32xf32>
      %cst_110 = arith.constant dense<0.000000e+00> : vector<16xf32>
      %212 = vector.multi_reduction <add>, %211, %cst_110 [1] : vector<16x32xf32> to vector<16xf32>
      %213 = vector.shape_cast %212 : vector<16xf32> to vector<16x1xf32>
      %cst_111 = arith.constant 3.200000e+01 : f32
      %214 = vector.broadcast %cst_111 : f32 to vector<16x1xf32>
      %215 = arith.divf %213, %214 : vector<16x1xf32>
      %cst_112 = arith.constant 9.99999974E-6 : f32
      %216 = vector.broadcast %cst_112 : f32 to vector<16x1xf32>
      %217 = arith.addf %215, %216 : vector<16x1xf32>
      %218 = math.rsqrt %217 : vector<16x1xf32>
      %219 = vector.broadcast %218 : vector<16x1xf32> to vector<16x32xf32>
      %220 = arith.mulf %210, %219 : vector<16x32xf32>
      %221 = vector.broadcast %203 : vector<1x32xf32> to vector<16x32xf32>
      %222 = arith.mulf %220, %221 : vector<16x32xf32>
      %223 = vector.broadcast %204 : vector<1x32xf32> to vector<16x32xf32>
      %224 = arith.addf %222, %223 : vector<16x32xf32>
      %c0_113 = arith.constant 0 : index
      %c0_114 = arith.constant 0 : index
      %225 = vector.load %arg22[%c0_113, %c0_114] : memref<16x32xf32, #tpu.memory_space<vmem>>, vector<16x32xf32>
      tpu.vector_store %arg22[%c0_113, %c0_114], %224 {strides = array<i32>} : memref<16x32xf32, #tpu.memory_space<vmem>>, vector<16x32xf32>,
    } else {
    }
    %c0 = arith.constant 0 : index
    %c0_1 = arith.constant 0 : index
    %3 = vector.load %arg22[%c0, %c0_1] : memref<16x32xf32, #tpu.memory_space<vmem>>, vector<16x32xf32>
    %c0_2 = arith.constant 0 : index
    %c0_3 = arith.constant 0 : index
    %c0_4 = arith.constant 0 : index
    %4 = vector.load %arg9[%c0_2, %c0_3, %c0_4] : memref<1x1x32xf32, #tpu.memory_space<vmem>>, vector<1x1x32xf32>
    %5 = vector.shape_cast %4 : vector<1x1x32xf32> to vector<1x32xf32>
    %c0_5 = arith.constant 0 : index
    %c0_6 = arith.constant 0 : index
    %c0_7 = arith.constant 0 : index
    %6 = vector.load %arg10[%c0_5, %c0_6, %c0_7] : memref<1x1x32xf32, #tpu.memory_space<vmem>>, vector<1x1x32xf32>
    %7 = vector.shape_cast %6 : vector<1x1x32xf32> to vector<1x32xf32>
    %cst = arith.constant dense<0.000000e+00> : vector<16xf32>
    %8 = vector.multi_reduction <add>, %3, %cst [1] : vector<16x32xf32> to vector<16xf32>
    %9 = vector.shape_cast %8 : vector<16xf32> to vector<16x1xf32>
    %cst_8 = arith.constant 3.200000e+01 : f32
    %10 = vector.broadcast %cst_8 : f32 to vector<16x1xf32>
    %11 = arith.divf %9, %10 : vector<16x1xf32>
    %12 = vector.broadcast %11 : vector<16x1xf32> to vector<16x32xf32>
    %13 = arith.subf %3, %12 : vector<16x32xf32>
    %14 = arith.mulf %13, %13 : vector<16x32xf32>
    %cst_9 = arith.constant dense<0.000000e+00> : vector<16xf32>
    %15 = vector.multi_reduction <add>, %14, %cst_9 [1] : vector<16x32xf32> to vector<16xf32>
    %16 = vector.shape_cast %15 : vector<16xf32> to vector<16x1xf32>
    %cst_10 = arith.constant 3.200000e+01 : f32
    %17 = vector.broadcast %cst_10 : f32 to vector<16x1xf32>
    %18 = arith.divf %16, %17 : vector<16x1xf32>
    %cst_11 = arith.constant 9.99999974E-6 : f32
    %19 = vector.broadcast %cst_11 : f32 to vector<16x1xf32>
    %20 = arith.addf %18, %19 : vector<16x1xf32>
    %21 = math.rsqrt %20 : vector<16x1xf32>
    %22 = vector.broadcast %21 : vector<16x1xf32> to vector<16x32xf32>
    %23 = arith.mulf %13, %22 : vector<16x32xf32>
    %24 = vector.broadcast %5 : vector<1x32xf32> to vector<16x32xf32>
    %25 = arith.mulf %23, %24 : vector<16x32xf32>
    %26 = vector.broadcast %7 : vector<1x32xf32> to vector<16x32xf32>
    %27 = arith.addf %25, %26 : vector<16x32xf32>
    %c0_12 = arith.constant 0 : index
    %c0_13 = arith.constant 0 : index
    %c0_14 = arith.constant 0 : index
    %c0_15 = arith.constant 0 : index
    %28 = vector.load %arg11[%c0_12, %c0_13, %c0_14, %c0_15] : memref<1x3x32x32xf32, #tpu.memory_space<vmem>>, vector<1x1x32x32xf32>
    %29 = vector.shape_cast %28 : vector<1x1x32x32xf32> to vector<32x32xf32>
    %cst_16 = arith.constant dense<0.000000e+00> : vector<16x32xf32>
    %30 = tpu.matmul %27, %29, %cst_16 {dimension_numbers = #tpu.dot_dimension_numbers<[1], [0], [0], [1], [0, 0, 1, 1], [], []>} : vector<16x32xf32>, vector<32x32xf32>, vector<16x32xf32> -> vector<16x32xf32>
    %c0_17 = arith.constant 0 : index
    %c0_18 = arith.constant 0 : index
    %c0_19 = arith.constant 0 : index
    %c0_20 = arith.constant 0 : index
    %31 = vector.load %arg12[%c0_17, %c0_18, %c0_19, %c0_20] : memref<1x3x1x32xf32, #tpu.memory_space<vmem>>, vector<1x1x1x32xf32>
    %32 = vector.shape_cast %31 : vector<1x1x1x32xf32> to vector<1x32xf32>
    %33 = vector.broadcast %32 : vector<1x32xf32> to vector<16x32xf32>
    %34 = arith.addf %30, %33 : vector<16x32xf32>
    %cst_21 = arith.constant 0.353553385 : f32
    %35 = vector.broadcast %cst_21 : f32 to vector<16x32xf32>
    %36 = arith.mulf %34, %35 : vector<16x32xf32>
    %c0_22 = arith.constant 0 : index
    %c1 = arith.constant 1 : index
    %c0_23 = arith.constant 0 : index
    %c0_24 = arith.constant 0 : index
    %37 = vector.load %arg11[%c0_22, %c1, %c0_23, %c0_24] : memref<1x3x32x32xf32, #tpu.memory_space<vmem>>, vector<1x1x32x32xf32>
    %38 = vector.shape_cast %37 : vector<1x1x32x32xf32> to vector<32x32xf32>
    %cst_25 = arith.constant dense<0.000000e+00> : vector<16x32xf32>
    %39 = tpu.matmul %27, %38, %cst_25 {dimension_numbers = #tpu.dot_dimension_numbers<[1], [0], [0], [1], [0, 0, 1, 1], [], []>} : vector<16x32xf32>, vector<32x32xf32>, vector<16x32xf32> -> vector<16x32xf32>
    %c0_26 = arith.constant 0 : index
    %c1_27 = arith.constant 1 : index
    %c0_28 = arith.constant 0 : index
    %c0_29 = arith.constant 0 : index
    %40 = vector.load %arg12[%c0_26, %c1_27, %c0_28, %c0_29] : memref<1x3x1x32xf32, #tpu.memory_space<vmem>>, vector<1x1x1x32xf32>
    %41 = vector.shape_cast %40 : vector<1x1x1x32xf32> to vector<1x32xf32>
    %42 = vector.broadcast %41 : vector<1x32xf32> to vector<16x32xf32>
    %43 = arith.addf %39, %42 : vector<16x32xf32>
    %c0_30 = arith.constant 0 : index
    %c2 = arith.constant 2 : index
    %c0_31 = arith.constant 0 : index
    %c0_32 = arith.constant 0 : index
    %44 = vector.load %arg11[%c0_30, %c2, %c0_31, %c0_32] : memref<1x3x32x32xf32, #tpu.memory_space<vmem>>, vector<1x1x32x32xf32>
    %45 = vector.shape_cast %44 : vector<1x1x32x32xf32> to vector<32x32xf32>
    %cst_33 = arith.constant dense<0.000000e+00> : vector<16x32xf32>
    %46 = tpu.matmul %27, %45, %cst_33 {dimension_numbers = #tpu.dot_dimension_numbers<[1], [0], [0], [1], [0, 0, 1, 1], [], []>} : vector<16x32xf32>, vector<32x32xf32>, vector<16x32xf32> -> vector<16x32xf32>
    %c0_34 = arith.constant 0 : index
    %c2_35 = arith.constant 2 : index
    %c0_36 = arith.constant 0 : index
    %c0_37 = arith.constant 0 : index
    %47 = vector.load %arg12[%c0_34, %c2_35, %c0_36, %c0_37] : memref<1x3x1x32xf32, #tpu.memory_space<vmem>>, vector<1x1x1x32xf32>
    %48 = vector.shape_cast %47 : vector<1x1x1x32xf32> to vector<1x32xf32>
    %49 = vector.broadcast %48 : vector<1x32xf32> to vector<16x32xf32>
    %50 = arith.addf %46, %49 : vector<16x32xf32>
    %51 = vector.shape_cast %36 : vector<16x32xf32> to vector<2x8x32xf32>
    %52 = vector.shape_cast %43 : vector<16x32xf32> to vector<2x8x32xf32>
    %53 = vector.shape_cast %50 : vector<16x32xf32> to vector<2x8x32xf32>
    %54 = tpu.iota {dimensions = array<i32: 2>} : vector<1x1x8xi32>
    %c5_i32 = arith.constant 5 : i32
    %55 = vector.broadcast %c5_i32 : i32 to vector<1x1x8xi32>
    %56 = arith.cmpi slt, %54, %55 : vector<1x1x8xi32>
    %cst_38 = arith.constant 0.000000e+00 : f32
    %cst_39 = arith.constant -1.000000e+30 : f32
    %57 = vector.broadcast %cst_38 : f32 to vector<1x1x8xf32>
    %58 = vector.broadcast %cst_39 : f32 to vector<1x1x8xf32>
    %59 = arith.select %56, %57, %58 : vector<1x1x8xi1>, vector<1x1x8xf32>
    %c0_40 = arith.constant 0 : index
    %c0_41 = arith.constant 0 : index
    %c0_42 = arith.constant 0 : index
    %60 = vector.load %arg13[%c0_40, %c0_41, %c0_42] : memref<1x32x32xf32, #tpu.memory_space<vmem>>, vector<1x32x32xf32>
    %61 = vector.shape_cast %60 : vector<1x32x32xf32> to vector<32x32xf32>
    %62 = vector.extract_strided_slice %51 {offsets = [0, 0, 0], sizes = [2, 8, 8], strides = [1, 1, 1]} : vector<2x8x32xf32> to vector<2x8x8xf32>
    %63 = vector.extract_strided_slice %52 {offsets = [0, 0, 0], sizes = [2, 8, 8], strides = [1, 1, 1]} : vector<2x8x32xf32> to vector<2x8x8xf32>
    "tpu.trace_start"() <{level = 10 : i32, message = "bqd,bkd->bqk"}> : () -> ()
    %cst_43 = arith.constant dense<0.000000e+00> : vector<2x8x8xf32>
    %64 = tpu.matmul %62, %63, %cst_43 {dimension_numbers = #tpu.dot_dimension_numbers<[2], [2], [1], [1], [0, 0, 0, 1, 1, 1], [0], [0]>} : vector<2x8x8xf32>, vector<2x8x8xf32>, vector<2x8x8xf32> -> vector<2x8x8xf32>
    "tpu.trace_stop"() : () -> ()
    %65 = vector.broadcast %59 : vector<1x1x8xf32> to vector<2x8x8xf32>
    %66 = arith.addf %64, %65 : vector<2x8x8xf32>
    %cst_44 = arith.constant dense<0xFF800000> : vector<2x8xf32>
    %67 = vector.multi_reduction <maximumf>, %66, %cst_44 [2] : vector<2x8x8xf32> to vector<2x8xf32>
    %68 = vector.shape_cast %67 : vector<2x8xf32> to vector<2x8x1xf32>
    %69 = vector.broadcast %68 : vector<2x8x1xf32> to vector<2x8x8xf32>
    %70 = arith.subf %66, %69 : vector<2x8x8xf32>
    %71 = math.exp %70 : vector<2x8x8xf32>
    %cst_45 = arith.constant dense<0.000000e+00> : vector<2x8xf32>
    %72 = vector.multi_reduction <add>, %71, %cst_45 [2] : vector<2x8x8xf32> to vector<2x8xf32>
    %73 = vector.shape_cast %72 : vector<2x8xf32> to vector<2x8x1xf32>
    %74 = tpu.reciprocal %73 {approx = true} : vector<2x8x1xf32> -> vector<2x8x1xf32>
    %75 = vector.broadcast %74 : vector<2x8x1xf32> to vector<2x8x8xf32>
    %76 = arith.mulf %71, %75 : vector<2x8x8xf32>
    %77 = vector.extract_strided_slice %53 {offsets = [0, 0, 0], sizes = [2, 8, 8], strides = [1, 1, 1]} : vector<2x8x32xf32> to vector<2x8x8xf32>
    "tpu.trace_start"() <{level = 10 : i32, message = "bqk,bkd->bqd"}> : () -> ()
    %cst_46 = arith.constant dense<0.000000e+00> : vector<2x8x8xf32>
    %78 = tpu.matmul %76, %77, %cst_46 {dimension_numbers = #tpu.dot_dimension_numbers<[2], [1], [1], [2], [0, 0, 0, 1, 1, 2], [0], [0]>} : vector<2x8x8xf32>, vector<2x8x8xf32>, vector<2x8x8xf32> -> vector<2x8x8xf32>
    "tpu.trace_stop"() : () -> ()
    %79 = vector.extract_strided_slice %61 {offsets = [0, 0], sizes = [8, 32], strides = [1, 1]} : vector<32x32xf32> to vector<8x32xf32>
    "tpu.trace_start"() <{level = 10 : i32, message = "bqd,dw->bqw"}> : () -> ()
    %cst_47 = arith.constant dense<0.000000e+00> : vector<2x8x32xf32>
    %80 = tpu.matmul %78, %79, %cst_47 {dimension_numbers = #tpu.dot_dimension_numbers<[2], [0], [0, 1], [1], [0, 0, 0, 1, 1, 1], [], []>} : vector<2x8x8xf32>, vector<8x32xf32>, vector<2x8x32xf32> -> vector<2x8x32xf32>
    "tpu.trace_stop"() : () -> ()
    %81 = vector.extract_strided_slice %51 {offsets = [0, 0, 8], sizes = [2, 8, 8], strides = [1, 1, 1]} : vector<2x8x32xf32> to vector<2x8x8xf32>
    %82 = vector.extract_strided_slice %52 {offsets = [0, 0, 8], sizes = [2, 8, 8], strides = [1, 1, 1]} : vector<2x8x32xf32> to vector<2x8x8xf32>
    "tpu.trace_start"() <{level = 10 : i32, message = "bqd,bkd->bqk"}> : () -> ()
    %cst_48 = arith.constant dense<0.000000e+00> : vector<2x8x8xf32>
    %83 = tpu.matmul %81, %82, %cst_48 {dimension_numbers = #tpu.dot_dimension_numbers<[2], [2], [1], [1], [0, 0, 0, 1, 1, 1], [0], [0]>} : vector<2x8x8xf32>, vector<2x8x8xf32>, vector<2x8x8xf32> -> vector<2x8x8xf32>
    "tpu.trace_stop"() : () -> ()
    %84 = vector.broadcast %59 : vector<1x1x8xf32> to vector<2x8x8xf32>
    %85 = arith.addf %83, %84 : vector<2x8x8xf32>
    %cst_49 = arith.constant dense<0xFF800000> : vector<2x8xf32>
    %86 = vector.multi_reduction <maximumf>, %85, %cst_49 [2] : vector<2x8x8xf32> to vector<2x8xf32>
    %87 = vector.shape_cast %86 : vector<2x8xf32> to vector<2x8x1xf32>
    %88 = vector.broadcast %87 : vector<2x8x1xf32> to vector<2x8x8xf32>
    %89 = arith.subf %85, %88 : vector<2x8x8xf32>
    %90 = math.exp %89 : vector<2x8x8xf32>
    %cst_50 = arith.constant dense<0.000000e+00> : vector<2x8xf32>
    %91 = vector.multi_reduction <add>, %90, %cst_50 [2] : vector<2x8x8xf32> to vector<2x8xf32>
    %92 = vector.shape_cast %91 : vector<2x8xf32> to vector<2x8x1xf32>
    %93 = tpu.reciprocal %92 {approx = true} : vector<2x8x1xf32> -> vector<2x8x1xf32>
    %94 = vector.broadcast %93 : vector<2x8x1xf32> to vector<2x8x8xf32>
    %95 = arith.mulf %90, %94 : vector<2x8x8xf32>
    %96 = vector.extract_strided_slice %53 {offsets = [0, 0, 8], sizes = [2, 8, 8], strides = [1, 1, 1]} : vector<2x8x32xf32> to vector<2x8x8xf32>
    "tpu.trace_start"() <{level = 10 : i32, message = "bqk,bkd->bqd"}> : () -> ()
    %cst_51 = arith.constant dense<0.000000e+00> : vector<2x8x8xf32>
    %97 = tpu.matmul %95, %96, %cst_51 {dimension_numbers = #tpu.dot_dimension_numbers<[2], [1], [1], [2], [0, 0, 0, 1, 1, 2], [0], [0]>} : vector<2x8x8xf32>, vector<2x8x8xf32>, vector<2x8x8xf32> -> vector<2x8x8xf32>
    "tpu.trace_stop"() : () -> ()
    %98 = vector.extract_strided_slice %61 {offsets = [8, 0], sizes = [8, 32], strides = [1, 1]} : vector<32x32xf32> to vector<8x32xf32>
    "tpu.trace_start"() <{level = 10 : i32, message = "bqd,dw->bqw"}> : () -> ()
    %cst_52 = arith.constant dense<0.000000e+00> : vector<2x8x32xf32>
    %99 = tpu.matmul %97, %98, %cst_52 {dimension_numbers = #tpu.dot_dimension_numbers<[2], [0], [0, 1], [1], [0, 0, 0, 1, 1, 1], [], []>} : vector<2x8x8xf32>, vector<8x32xf32>, vector<2x8x32xf32> -> vector<2x8x32xf32>
    "tpu.trace_stop"() : () -> ()
    %100 = arith.addf %80, %99 : vector<2x8x32xf32>
    %101 = vector.extract_strided_slice %51 {offsets = [0, 0, 16], sizes = [2, 8, 8], strides = [1, 1, 1]} : vector<2x8x32xf32> to vector<2x8x8xf32>
    %102 = vector.extract_strided_slice %52 {offsets = [0, 0, 16], sizes = [2, 8, 8], strides = [1, 1, 1]} : vector<2x8x32xf32> to vector<2x8x8xf32>
    "tpu.trace_start"() <{level = 10 : i32, message = "bqd,bkd->bqk"}> : () -> ()
    %cst_53 = arith.constant dense<0.000000e+00> : vector<2x8x8xf32>
    %103 = tpu.matmul %101, %102, %cst_53 {dimension_numbers = #tpu.dot_dimension_numbers<[2], [2], [1], [1], [0, 0, 0, 1, 1, 1], [0], [0]>} : vector<2x8x8xf32>, vector<2x8x8xf32>, vector<2x8x8xf32> -> vector<2x8x8xf32>
    "tpu.trace_stop"() : () -> ()
    %104 = vector.broadcast %59 : vector<1x1x8xf32> to vector<2x8x8xf32>
    %105 = arith.addf %103, %104 : vector<2x8x8xf32>
    %cst_54 = arith.constant dense<0xFF800000> : vector<2x8xf32>
    %106 = vector.multi_reduction <maximumf>, %105, %cst_54 [2] : vector<2x8x8xf32> to vector<2x8xf32>
    %107 = vector.shape_cast %106 : vector<2x8xf32> to vector<2x8x1xf32>
    %108 = vector.broadcast %107 : vector<2x8x1xf32> to vector<2x8x8xf32>
    %109 = arith.subf %105, %108 : vector<2x8x8xf32>
    %110 = math.exp %109 : vector<2x8x8xf32>
    %cst_55 = arith.constant dense<0.000000e+00> : vector<2x8xf32>
    %111 = vector.multi_reduction <add>, %110, %cst_55 [2] : vector<2x8x8xf32> to vector<2x8xf32>
    %112 = vector.shape_cast %111 : vector<2x8xf32> to vector<2x8x1xf32>
    %113 = tpu.reciprocal %112 {approx = true} : vector<2x8x1xf32> -> vector<2x8x1xf32>
    %114 = vector.broadcast %113 : vector<2x8x1xf32> to vector<2x8x8xf32>
    %115 = arith.mulf %110, %114 : vector<2x8x8xf32>
    %116 = vector.extract_strided_slice %53 {offsets = [0, 0, 16], sizes = [2, 8, 8], strides = [1, 1, 1]} : vector<2x8x32xf32> to vector<2x8x8xf32>
    "tpu.trace_start"() <{level = 10 : i32, message = "bqk,bkd->bqd"}> : () -> ()
    %cst_56 = arith.constant dense<0.000000e+00> : vector<2x8x8xf32>
    %117 = tpu.matmul %115, %116, %cst_56 {dimension_numbers = #tpu.dot_dimension_numbers<[2], [1], [1], [2], [0, 0, 0, 1, 1, 2], [0], [0]>} : vector<2x8x8xf32>, vector<2x8x8xf32>, vector<2x8x8xf32> -> vector<2x8x8xf32>
    "tpu.trace_stop"() : () -> ()
    %118 = vector.extract_strided_slice %61 {offsets = [16, 0], sizes = [8, 32], strides = [1, 1]} : vector<32x32xf32> to vector<8x32xf32>
    "tpu.trace_start"() <{level = 10 : i32, message = "bqd,dw->bqw"}> : () -> ()
    %cst_57 = arith.constant dense<0.000000e+00> : vector<2x8x32xf32>
    %119 = tpu.matmul %117, %118, %cst_57 {dimension_numbers = #tpu.dot_dimension_numbers<[2], [0], [0, 1], [1], [0, 0, 0, 1, 1, 1], [], []>} : vector<2x8x8xf32>, vector<8x32xf32>, vector<2x8x32xf32> -> vector<2x8x32xf32>
    "tpu.trace_stop"() : () -> ()
    %120 = arith.addf %100, %119 : vector<2x8x32xf32>
    %121 = vector.extract_strided_slice %51 {offsets = [0, 0, 24], sizes = [2, 8, 8], strides = [1, 1, 1]} : vector<2x8x32xf32> to vector<2x8x8xf32>
    %122 = vector.extract_strided_slice %52 {offsets = [0, 0, 24], sizes = [2, 8, 8], strides = [1, 1, 1]} : vector<2x8x32xf32> to vector<2x8x8xf32>
    "tpu.trace_start"() <{level = 10 : i32, message = "bqd,bkd->bqk"}> : () -> ()
    %cst_58 = arith.constant dense<0.000000e+00> : vector<2x8x8xf32>
    %123 = tpu.matmul %121, %122, %cst_58 {dimension_numbers = #tpu.dot_dimension_numbers<[2], [2], [1], [1], [0, 0, 0, 1, 1, 1], [0], [0]>} : vector<2x8x8xf32>, vector<2x8x8xf32>, vector<2x8x8xf32> -> vector<2x8x8xf32>
    "tpu.trace_stop"() : () -> ()
    %124 = vector.broadcast %59 : vector<1x1x8xf32> to vector<2x8x8xf32>
    %125 = arith.addf %123, %124 : vector<2x8x8xf32>
    %cst_59 = arith.constant dense<0xFF800000> : vector<2x8xf32>
    %126 = vector.multi_reduction <maximumf>, %125, %cst_59 [2] : vector<2x8x8xf32> to vector<2x8xf32>
    %127 = vector.shape_cast %126 : vector<2x8xf32> to vector<2x8x1xf32>
    %128 = vector.broadcast %127 : vector<2x8x1xf32> to vector<2x8x8xf32>
    %129 = arith.subf %125, %128 : vector<2x8x8xf32>
    %130 = math.exp %129 : vector<2x8x8xf32>
    %cst_60 = arith.constant dense<0.000000e+00> : vector<2x8xf32>
    %131 = vector.multi_reduction <add>, %130, %cst_60 [2] : vector<2x8x8xf32> to vector<2x8xf32>
    %132 = vector.shape_cast %131 : vector<2x8xf32> to vector<2x8x1xf32>
    %133 = tpu.reciprocal %132 {approx = true} : vector<2x8x1xf32> -> vector<2x8x1xf32>
    %134 = vector.broadcast %133 : vector<2x8x1xf32> to vector<2x8x8xf32>
    %135 = arith.mulf %130, %134 : vector<2x8x8xf32>
    %136 = vector.extract_strided_slice %53 {offsets = [0, 0, 24], sizes = [2, 8, 8], strides = [1, 1, 1]} : vector<2x8x32xf32> to vector<2x8x8xf32>
    "tpu.trace_start"() <{level = 10 : i32, message = "bqk,bkd->bqd"}> : () -> ()
    %cst_61 = arith.constant dense<0.000000e+00> : vector<2x8x8xf32>
    %137 = tpu.matmul %135, %136, %cst_61 {dimension_numbers = #tpu.dot_dimension_numbers<[2], [1], [1], [2], [0, 0, 0, 1, 1, 2], [0], [0]>} : vector<2x8x8xf32>, vector<2x8x8xf32>, vector<2x8x8xf32> -> vector<2x8x8xf32>
    "tpu.trace_stop"() : () -> ()
    %138 = vector.extract_strided_slice %61 {offsets = [24, 0], sizes = [8, 32], strides = [1, 1]} : vector<32x32xf32> to vector<8x32xf32>
    "tpu.trace_start"() <{level = 10 : i32, message = "bqd,dw->bqw"}> : () -> ()
    %cst_62 = arith.constant dense<0.000000e+00> : vector<2x8x32xf32>
    %139 = tpu.matmul %137, %138, %cst_62 {dimension_numbers = #tpu.dot_dimension_numbers<[2], [0], [0, 1], [1], [0, 0, 0, 1, 1, 1], [], []>} : vector<2x8x8xf32>, vector<8x32xf32>, vector<2x8x32xf32> -> vector<2x8x32xf32>
    "tpu.trace_stop"() : () -> ()
    %140 = arith.addf %120, %139 : vector<2x8x32xf32>
    %141 = vector.shape_cast %140 : vector<2x8x32xf32> to vector<16x32xf32>
    %142 = arith.addf %3, %141 : vector<16x32xf32>
    %c0_63 = arith.constant 0 : index
    %c0_64 = arith.constant 0 : index
    %c0_65 = arith.constant 0 : index
    %143 = vector.load %arg14[%c0_63, %c0_64, %c0_65] : memref<1x1x32xf32, #tpu.memory_space<vmem>>, vector<1x1x32xf32>
    %144 = vector.shape_cast %143 : vector<1x1x32xf32> to vector<1x32xf32>
    %145 = vector.broadcast %144 : vector<1x32xf32> to vector<16x32xf32>
    %146 = arith.addf %142, %145 : vector<16x32xf32>
    %c0_66 = arith.constant 0 : index
    %c0_67 = arith.constant 0 : index
    %c0_68 = arith.constant 0 : index
    %147 = vector.load %arg15[%c0_66, %c0_67, %c0_68] : memref<1x1x32xf32, #tpu.memory_space<vmem>>, vector<1x1x32xf32>
    %148 = vector.shape_cast %147 : vector<1x1x32xf32> to vector<1x32xf32>
    %c0_69 = arith.constant 0 : index
    %c0_70 = arith.constant 0 : index
    %c0_71 = arith.constant 0 : index
    %149 = vector.load %arg16[%c0_69, %c0_70, %c0_71] : memref<1x1x32xf32, #tpu.memory_space<vmem>>, vector<1x1x32xf32>
    %150 = vector.shape_cast %149 : vector<1x1x32xf32> to vector<1x32xf32>
    %cst_72 = arith.constant dense<0.000000e+00> : vector<16xf32>
    %151 = vector.multi_reduction <add>, %146, %cst_72 [1] : vector<16x32xf32> to vector<16xf32>
    %152 = vector.shape_cast %151 : vector<16xf32> to vector<16x1xf32>
    %cst_73 = arith.constant 3.200000e+01 : f32
    %153 = vector.broadcast %cst_73 : f32 to vector<16x1xf32>
    %154 = arith.divf %152, %153 : vector<16x1xf32>
    %155 = vector.broadcast %154 : vector<16x1xf32> to vector<16x32xf32>
    %156 = arith.subf %146, %155 : vector<16x32xf32>
    %157 = arith.mulf %156, %156 : vector<16x32xf32>
    %cst_74 = arith.constant dense<0.000000e+00> : vector<16xf32>
    %158 = vector.multi_reduction <add>, %157, %cst_74 [1] : vector<16x32xf32> to vector<16xf32>
    %159 = vector.shape_cast %158 : vector<16xf32> to vector<16x1xf32>
    %cst_75 = arith.constant 3.200000e+01 : f32
    %160 = vector.broadcast %cst_75 : f32 to vector<16x1xf32>
    %161 = arith.divf %159, %160 : vector<16x1xf32>
    %cst_76 = arith.constant 9.99999974E-6 : f32
    %162 = vector.broadcast %cst_76 : f32 to vector<16x1xf32>
    %163 = arith.addf %161, %162 : vector<16x1xf32>
    %164 = math.rsqrt %163 : vector<16x1xf32>
    %165 = vector.broadcast %164 : vector<16x1xf32> to vector<16x32xf32>
    %166 = arith.mulf %156, %165 : vector<16x32xf32>
    %167 = vector.broadcast %148 : vector<1x32xf32> to vector<16x32xf32>
    %168 = arith.mulf %166, %167 : vector<16x32xf32>
    %169 = vector.broadcast %150 : vector<1x32xf32> to vector<16x32xf32>
    %170 = arith.addf %168, %169 : vector<16x32xf32>
    %c0_77 = arith.constant 0 : index
    %c0_78 = arith.constant 0 : index
    %c0_79 = arith.constant 0 : index
    %171 = vector.load %arg17[%c0_77, %c0_78, %c0_79] : memref<1x32x128xf32, #tpu.memory_space<vmem>>, vector<1x32x128xf32>
    %172 = vector.shape_cast %171 : vector<1x32x128xf32> to vector<32x128xf32>
    %cst_80 = arith.constant dense<0.000000e+00> : vector<16x128xf32>
    %173 = tpu.matmul %170, %172, %cst_80 {dimension_numbers = #tpu.dot_dimension_numbers<[1], [0], [0], [1], [0, 0, 1, 1], [], []>} : vector<16x32xf32>, vector<32x128xf32>, vector<16x128xf32> -> vector<16x128xf32>
    %c0_81 = arith.constant 0 : index
    %c0_82 = arith.constant 0 : index
    %c0_83 = arith.constant 0 : index
    %174 = vector.load %arg18[%c0_81, %c0_82, %c0_83] : memref<1x1x128xf32, #tpu.memory_space<vmem>>, vector<1x1x128xf32>
    %175 = vector.shape_cast %174 : vector<1x1x128xf32> to vector<1x128xf32>
    %176 = vector.broadcast %175 : vector<1x128xf32> to vector<16x128xf32>
    %177 = arith.addf %173, %176 : vector<16x128xf32>
    %cst_84 = arith.constant -1.702000e+00 : f32
    %178 = vector.broadcast %cst_84 : f32 to vector<16x128xf32>
    %179 = arith.mulf %178, %177 : vector<16x128xf32>
    %180 = math.exp %179 : vector<16x128xf32>
    %cst_85 = arith.constant 1.000000e+00 : f32
    %181 = vector.broadcast %cst_85 : f32 to vector<16x128xf32>
    %182 = arith.addf %181, %180 : vector<16x128xf32>
    %cst_86 = arith.constant 1.000000e+00 : f32
    %183 = vector.broadcast %cst_86 : f32 to vector<16x128xf32>
    %184 = arith.divf %183, %182 : vector<16x128xf32>
    %185 = arith.mulf %177, %184 : vector<16x128xf32>
    %c0_87 = arith.constant 0 : index
    %c0_88 = arith.constant 0 : index
    %c0_89 = arith.constant 0 : index
    %186 = vector.load %arg19[%c0_87, %c0_88, %c0_89] : memref<1x128x32xf32, #tpu.memory_space<vmem>>, vector<1x128x32xf32>
    %187 = vector.shape_cast %186 : vector<1x128x32xf32> to vector<128x32xf32>
    %cst_90 = arith.constant dense<0.000000e+00> : vector<16x32xf32>
    %188 = tpu.matmul %185, %187, %cst_90 {dimension_numbers = #tpu.dot_dimension_numbers<[1], [0], [0], [1], [0, 0, 1, 1], [], []>} : vector<16x128xf32>, vector<128x32xf32>, vector<16x32xf32> -> vector<16x32xf32>
    %189 = arith.addf %146, %188 : vector<16x32xf32>
    %c0_91 = arith.constant 0 : index
    %c0_92 = arith.constant 0 : index
    %c0_93 = arith.constant 0 : index
    %190 = vector.load %arg20[%c0_91, %c0_92, %c0_93] : memref<1x1x32xf32, #tpu.memory_space<vmem>>, vector<1x1x32xf32>
    %191 = vector.shape_cast %190 : vector<1x1x32xf32> to vector<1x32xf32>
    %192 = vector.broadcast %191 : vector<1x32xf32> to vector<16x32xf32>
    %193 = arith.addf %189, %192 : vector<16x32xf32>
    %c0_94 = arith.constant 0 : index
    %c0_95 = arith.constant 0 : index
    %194 = vector.load %arg22[%c0_94, %c0_95] : memref<16x32xf32, #tpu.memory_space<vmem>>, vector<16x32xf32>
    tpu.vector_store %arg22[%c0_94, %c0_95], %193 {strides = array<i32>} : memref<16x32xf32, #tpu.memory_space<vmem>>, vector<16x32xf32>,
    %c1_i32 = arith.constant 1 : i32
    %195 = arith.cmpi eq, %arg0, %c1_i32 : i32
    %196 = arith.extui %195 : i1 to i32
    %c0_i32_96 = arith.constant 0 : i32
    %197 = arith.cmpi ne, %196, %c0_i32_96 : i32
    scf.if %197 {
      %c0_97 = arith.constant 0 : index
      %c0_98 = arith.constant 0 : index
      %198 = vector.load %arg22[%c0_97, %c0_98] : memref<16x32xf32, #tpu.memory_space<vmem>>, vector<16x32xf32>
      %c0_99 = arith.constant 0 : index
      %c0_100 = arith.constant 0 : index
      %199 = vector.load %arg6[%c0_99, %c0_100] : memref<1x32xf32, #tpu.memory_space<vmem>>, vector<1x32xf32>
      %c0_101 = arith.constant 0 : index
      %c0_102 = arith.constant 0 : index
      %200 = vector.load %arg7[%c0_101, %c0_102] : memref<1x32xf32, #tpu.memory_space<vmem>>, vector<1x32xf32>
      %cst_103 = arith.constant dense<0.000000e+00> : vector<16xf32>
      %201 = vector.multi_reduction <add>, %198, %cst_103 [1] : vector<16x32xf32> to vector<16xf32>
      %202 = vector.shape_cast %201 : vector<16xf32> to vector<16x1xf32>
      %cst_104 = arith.constant 3.200000e+01 : f32
      %203 = vector.broadcast %cst_104 : f32 to vector<16x1xf32>
      %204 = arith.divf %202, %203 : vector<16x1xf32>
      %205 = vector.broadcast %204 : vector<16x1xf32> to vector<16x32xf32>
      %206 = arith.subf %198, %205 : vector<16x32xf32>
      %207 = arith.mulf %206, %206 : vector<16x32xf32>
      %cst_105 = arith.constant dense<0.000000e+00> : vector<16xf32>
      %208 = vector.multi_reduction <add>, %207, %cst_105 [1] : vector<16x32xf32> to vector<16xf32>
      %209 = vector.shape_cast %208 : vector<16xf32> to vector<16x1xf32>
      %cst_106 = arith.constant 3.200000e+01 : f32
      %210 = vector.broadcast %cst_106 : f32 to vector<16x1xf32>
      %211 = arith.divf %209, %210 : vector<16x1xf32>
      %cst_107 = arith.constant 9.99999974E-6 : f32
      %212 = vector.broadcast %cst_107 : f32 to vector<16x1xf32>
      %213 = arith.addf %211, %212 : vector<16x1xf32>
      %214 = math.rsqrt %213 : vector<16x1xf32>
      %215 = vector.broadcast %214 : vector<16x1xf32> to vector<16x32xf32>
      %216 = arith.mulf %206, %215 : vector<16x32xf32>
      %217 = vector.broadcast %199 : vector<1x32xf32> to vector<16x32xf32>
      %218 = arith.mulf %216, %217 : vector<16x32xf32>
      %219 = vector.broadcast %200 : vector<1x32xf32> to vector<16x32xf32>
      %220 = arith.addf %218, %219 : vector<16x32xf32>
      %c0_108 = arith.constant 0 : index
      %c0_109 = arith.constant 0 : index
      %221 = vector.load %arg8[%c0_108, %c0_109] : memref<32x128xf32, #tpu.memory_space<vmem>>, vector<32x128xf32>
      %cst_110 = arith.constant dense<0.000000e+00> : vector<16x128xf32>
      %222 = tpu.matmul %220, %221, %cst_110 {dimension_numbers = #tpu.dot_dimension_numbers<[1], [0], [0], [1], [0, 0, 1, 1], [], []>} : vector<16x32xf32>, vector<32x128xf32>, vector<16x128xf32> -> vector<16x128xf32>
      %c0_111 = arith.constant 0 : index
      %c0_112 = arith.constant 0 : index
      %223 = vector.load %arg21[%c0_111, %c0_112] : memref<16x128xf32, #tpu.memory_space<vmem>>, vector<16x128xf32>
      tpu.vector_store %arg21[%c0_111, %c0_112], %222 {strides = array<i32>} : memref<16x128xf32, #tpu.memory_space<vmem>>, vector<16x128xf32>,
    } else {
    }
    return
  }
  func.func @transform_0(%arg0: i32) -> (i32, i32) {
    %c0_i32 = arith.constant 0 : i32
    %c0_i32_0 = arith.constant 0 : i32
    %c0_i32_1 = arith.constant 0 : i32
    return %c0_i32, %c0_i32_0 : i32, i32
  }
  func.func @transform_1(%arg0: i32) -> (i32, i32) {
    %c0_i32 = arith.constant 0 : i32
    %c0_i32_0 = arith.constant 0 : i32
    %c0_i32_1 = arith.constant 0 : i32
    return %c0_i32, %c0_i32_0 : i32, i32
  }
  func.func @transform_2(%arg0: i32) -> (i32, i32) {
    %c0_i32 = arith.constant 0 : i32
    %c0_i32_0 = arith.constant 0 : i32
    %c0_i32_1 = arith.constant 0 : i32
    return %c0_i32, %c0_i32_0 : i32, i32
  }
  func.func @transform_3(%arg0: i32) -> (i32, i32) {
    %c0_i32 = arith.constant 0 : i32
    %c0_i32_0 = arith.constant 0 : i32
    %c0_i32_1 = arith.constant 0 : i32
    return %c0_i32, %c0_i32_0 : i32, i32
  }
  func.func @transform_4(%arg0: i32) -> (i32, i32) {
    %c0_i32 = arith.constant 0 : i32
    %c0_i32_0 = arith.constant 0 : i32
    %c0_i32_1 = arith.constant 0 : i32
    return %c0_i32, %c0_i32_0 : i32, i32
  }
  func.func @transform_5(%arg0: i32) -> (i32, i32) {
    %c0_i32 = arith.constant 0 : i32
    %c0_i32_0 = arith.constant 0 : i32
    %c0_i32_1 = arith.constant 0 : i32
    return %c0_i32, %c0_i32_0 : i32, i32
  }
  func.func @transform_6(%arg0: i32) -> (i32, i32) {
    %c0_i32 = arith.constant 0 : i32
    %c0_i32_0 = arith.constant 0 : i32
    %c0_i32_1 = arith.constant 0 : i32
    return %c0_i32, %c0_i32_0 : i32, i32
  }
  func.func @transform_7(%arg0: i32) -> (i32, i32) {
    %c0_i32 = arith.constant 0 : i32
    %c0_i32_0 = arith.constant 0 : i32
    %c0_i32_1 = arith.constant 0 : i32
    return %c0_i32, %c0_i32_0 : i32, i32
  }
  func.func @transform_8(%arg0: i32) -> (i32, i32, i32) {
    %c0_i32 = arith.constant 0 : i32
    %c0_i32_0 = arith.constant 0 : i32
    %c0_i32_1 = arith.constant 0 : i32
    return %arg0, %c0_i32, %c0_i32_0 : i32, i32, i32
  }
  func.func @transform_9(%arg0: i32) -> (i32, i32, i32) {
    %c0_i32 = arith.constant 0 : i32
    %c0_i32_0 = arith.constant 0 : i32
    %c0_i32_1 = arith.constant 0 : i32
    return %arg0, %c0_i32, %c0_i32_0 : i32, i32, i32
  }
  func.func @transform_10(%arg0: i32) -> (i32, i32, i32, i32) {
    %c0_i32 = arith.constant 0 : i32
    %c0_i32_0 = arith.constant 0 : i32
    %c0_i32_1 = arith.constant 0 : i32
    %c0_i32_2 = arith.constant 0 : i32
    return %arg0, %c0_i32, %c0_i32_0, %c0_i32_1 : i32, i32, i32, i32
  }
  func.func @transform_11(%arg0: i32) -> (i32, i32, i32, i32) {
    %c0_i32 = arith.constant 0 : i32
    %c0_i32_0 = arith.constant 0 : i32
    %c0_i32_1 = arith.constant 0 : i32
    %c0_i32_2 = arith.constant 0 : i32
    return %arg0, %c0_i32, %c0_i32_0, %c0_i32_1 : i32, i32, i32, i32
  }
  func.func @transform_12(%arg0: i32) -> (i32, i32, i32) {
    %c0_i32 = arith.constant 0 : i32
    %c0_i32_0 = arith.constant 0 : i32
    %c0_i32_1 = arith.constant 0 : i32
    return %arg0, %c0_i32, %c0_i32_0 : i32, i32, i32
  }
  func.func @transform_13(%arg0: i32) -> (i32, i32, i32) {
    %c0_i32 = arith.constant 0 : i32
    %c0_i32_0 = arith.constant 0 : i32
    %c0_i32_1 = arith.constant 0 : i32
    return %arg0, %c0_i32, %c0_i32_0 : i32, i32, i32
  }
  func.func @transform_14(%arg0: i32) -> (i32, i32, i32) {
    %c0_i32 = arith.constant 0 : i32
    %c0_i32_0 = arith.constant 0 : i32
    %c0_i32_1 = arith.constant 0 : i32
    return %arg0, %c0_i32, %c0_i32_0 : i32, i32, i32
  }
  func.func @transform_15(%arg0: i32) -> (i32, i32, i32) {
    %c0_i32 = arith.constant 0 : i32
    %c0_i32_0 = arith.constant 0 : i32
    %c0_i32_1 = arith.constant 0 : i32
    return %arg0, %c0_i32, %c0_i32_0 : i32, i32, i32
  }
  func.func @transform_16(%arg0: i32) -> (i32, i32, i32) {
    %c0_i32 = arith.constant 0 : i32
    %c0_i32_0 = arith.constant 0 : i32
    %c0_i32_1 = arith.constant 0 : i32
    return %arg0, %c0_i32, %c0_i32_0 : i32, i32, i32
  }
  func.func @transform_17(%arg0: i32) -> (i32, i32, i32) {
    %c0_i32 = arith.constant 0 : i32
    %c0_i32_0 = arith.constant 0 : i32
    %c0_i32_1 = arith.constant 0 : i32
    return %arg0, %c0_i32, %c0_i32_0 : i32, i32, i32
  }
  func.func @transform_18(%arg0: i32) -> (i32, i32, i32) {
    %c0_i32 = arith.constant 0 : i32
    %c0_i32_0 = arith.constant 0 : i32
    %c0_i32_1 = arith.constant 0 : i32
    return %arg0, %c0_i32, %c0_i32_0 : i32, i32, i32
  }
  func.func @transform_19(%arg0: i32) -> (i32, i32, i32) {
    %c0_i32 = arith.constant 0 : i32
    %c0_i32_0 = arith.constant 0 : i32
    %c0_i32_1 = arith.constant 0 : i32
    return %arg0, %c0_i32, %c0_i32_0 : i32, i32, i32
  }
  func.func @transform_20(%arg0: i32) -> (i32, i32) {
    %c0_i32 = arith.constant 0 : i32
    %c0_i32_0 = arith.constant 0 : i32
    %c0_i32_1 = arith.constant 0 : i32
    return %c0_i32, %c0_i32_0 : i32, i32
  }
}

</mosaic_0001>

<llo_original>
// kernel: clip_visual_forward.1
$region0: #{clip_visual_forward.1}
  #allocation0 [shape = 'u32[]', space=smem, size = 0x4, offset = 0x4, fixed_abs, tag = 'smem constant byte address 0x4 - core index']
  #allocation1 [shape = 'u32[144,128]{1,0:T(1,128)}', space=vmem, size = 0x12000, scoped, tag = 'internal scratch']
  #allocation2 [shape = 'f32[16,32]{1,0:T(8,128)}', space=vmem, size = 0x2000, scoped, tag = 'scratch operand']
  %s0 = inlined_call_operand.vmem [shape: f32[16,192], index: 0, kind: input, shape index: {}]
  %s1 = inlined_call_operand.vmem [shape: f32[192,32], index: 1, kind: input, shape index: {}]
  %s2 = inlined_call_operand.vmem [shape: f32[16,32], index: 2, kind: input, shape index: {}]
  %s3 = inlined_call_operand.vmem [shape: f32[1,32], index: 3, kind: input, shape index: {}]
  %s4 = inlined_call_operand.vmem [shape: f32[1,32], index: 4, kind: input, shape index: {}]
  %s5 = inlined_call_operand.vmem [shape: f32[1,32], index: 5, kind: input, shape index: {}]
  %s6 = inlined_call_operand.vmem [shape: f32[1,32], index: 6, kind: input, shape index: {}]
  %s7 = inlined_call_operand.vmem [shape: f32[32,128], index: 7, kind: input, shape index: {}]
  %s8 = inlined_call_operand.vmem [shape: f32[2,1,32], index: 8, kind: input, shape index: {}]
  %s9 = inlined_call_operand.vmem [shape: f32[2,1,32], index: 9, kind: input, shape index: {}]
  %s10 = inlined_call_operand.vmem [shape: f32[2,3,32,32], index: 10, kind: input, shape index: {}]
  %s11 = inlined_call_operand.vmem [shape: f32[2,3,1,32], index: 11, kind: input, shape index: {}]
  %s12 = inlined_call_operand.vmem [shape: f32[2,32,32], index: 12, kind: input, shape index: {}]
  %s13 = inlined_call_operand.vmem [shape: f32[2,1,32], index: 13, kind: input, shape index: {}]
  %s14 = inlined_call_operand.vmem [shape: f32[2,1,32], index: 14, kind: input, shape index: {}]
  %s15 = inlined_call_operand.vmem [shape: f32[2,1,32], index: 15, kind: input, shape index: {}]
  %s16 = inlined_call_operand.vmem [shape: f32[2,32,128], index: 16, kind: input, shape index: {}]
  %s17 = inlined_call_operand.vmem [shape: f32[2,1,128], index: 17, kind: input, shape index: {}]
  %s18 = inlined_call_operand.vmem [shape: f32[2,128,32], index: 18, kind: input, shape index: {}]
  %s19 = inlined_call_operand.vmem [shape: f32[2,1,32], index: 19, kind: input, shape index: {}]
  %s20 = inlined_call_operand.vmem [shape: f32[16,128], index: 20, kind: output, shape index: {}]
  %s21 = sld [smem:[#allocation0]]
  $region121: #{clip_visual_forward.1} parent=0
    _
  %s23 = ssub.s32 1, %s21
  %s24 = scalar_select 0, %s23, %s21
  loop: start=0, step=1, limit=4
  $region2: #{clip_visual_forward.1} parent=0 // loop_pre_header
    _
  $region3: #{clip_visual_forward.1} parent=0 // loop_header
    %s26 = sphi 0, %s30
    %p27 = scmp.ge.s32.totalorder %s26, 4
    %s34 = sphi 0, %s34
    %s36 = sphi 0, %s34
    %s37 = sphi 0, %s36
    %s51 = sphi 0, %s37
    %s55 = sphi 0, %s55
    %s57 = sphi 0, %s55
    %s58 = sphi 0, %s57
    %s72 = sphi 0, %s58
    %s76 = sphi 0, %s76
    %s78 = sphi 0, %s76
    %s79 = sphi 0, %s78
    %s93 = sphi 0, %s79
    %s97 = sphi 0, %s97
    %s99 = sphi 0, %s97
    %s100 = sphi 0, %s99
    %s114 = sphi 0, %s100
    %s118 = sphi 0, %s118
    %s120 = sphi 0, %s118
    %s121 = sphi 0, %s120
    %s135 = sphi 0, %s121
    %s139 = sphi 0, %s139
    %s141 = sphi 0, %s139
    %s142 = sphi 0, %s141
    %s156 = sphi 0, %s142
    %s160 = sphi 0, %s160
    %s162 = sphi 0, %s160
    %s163 = sphi 0, %s162
    %s177 = sphi 0, %s163
    %s181 = sphi 0, %s181
    %s183 = sphi 0, %s181
    %s184 = sphi 0, %s183
    %s198 = sphi 0, %s184
    %s204 = sphi 0, %s206
    %s207 = sphi 0, %s204
    %s208 = sphi 0, %s207
    %s224 = sphi 0, %s208
    %s230 = sphi 0, %s232
    %s233 = sphi 0, %s230
    %s234 = sphi 0, %s233
    %s250 = sphi 0, %s234
    %s256 = sphi 0, %s258
    %s259 = sphi 0, %s256
    %s260 = sphi 0, %s259
    %s276 = sphi 0, %s260
    %s282 = sphi 0, %s284
    %s285 = sphi 0, %s282
    %s286 = sphi 0, %s285
    %s302 = sphi 0, %s286
    %s308 = sphi 0, %s310
    %s311 = sphi 0, %s308
    %s312 = sphi 0, %s311
    %s328 = sphi 0, %s312
    %s334 = sphi 0, %s336
    %s337 = sphi 0, %s334
    %s338 = sphi 0, %s337
    %s354 = sphi 0, %s338
    %s360 = sphi 0, %s362
    %s363 = sphi 0, %s360
    %s364 = sphi 0, %s363
    %s380 = sphi 0, %s364
    %s386 = sphi 0, %s388
    %s389 = sphi 0, %s386
    %s390 = sphi 0, %s389
    %s406 = sphi 0, %s390
    %s412 = sphi 0, %s414
    %s415 = sphi 0, %s412
    %s416 = sphi 0, %s415
    %s432 = sphi 0, %s416
    %s438 = sphi 0, %s440
    %s441 = sphi 0, %s438
    %s442 = sphi 0, %s441
    %s458 = sphi 0, %s442
    %s464 = sphi 0, %s466
    %s467 = sphi 0, %s464
    %s468 = sphi 0, %s467
    %s484 = sphi 0, %s468
    %s490 = sphi 0, %s492
    %s493 = sphi 0, %s490
    %s494 = sphi 0, %s493
    %s510 = sphi 0, %s494
    %s514 = sphi 0, %s514
    %s516 = sphi 0, %s514
    %s517 = sphi 0, %s516
    %s531 = sphi 0, %s517
  $region4: #{clip_visual_forward.1} parent=0 // loop_header_branch
    %29 = sbr.rel (%p27) target = $region8
  $region5: #{clip_visual_forward.1} parent=0 // loop_body
    %s31 = ssub.s32 %s26, 1
    %s32 = ssub.s32 %s26, 2
    %s33 = sadd.s32 %s26, 1
    %s35 = sadd.s32 %s34, 1
    %p38 = scmp.eq.s32.totalorder %s26, 1
    %p39 = scmp.ne.s32.totalorder %s34, %s36
    %p40 = scmp.eq.s32.totalorder %s26, 0
    %p41 = por %p39, %p40
    %p42 = scmp.ne.s32.totalorder %s34, %s36
    %p43 = scmp.eq.s32.totalorder %s31, 1
    %p44 = por %p42, %p43
    %p45 = scmp.ne.s32.totalorder %s36, %s37
    %p46 = scmp.eq.s32.totalorder %s31, 0
    %p47 = por %p45, %p46
    %p48 = scmp.ne.s32.totalorder %s36, %s37
    %p49 = scmp.eq.s32.totalorder %s32, 1
    %p50 = por %p48, %p49
    %p52 = scmp.ne.s32.totalorder %s37, %s51
    %p53 = scmp.eq.s32.totalorder %s32, 0
    %p54 = por %p52, %p53
    %s56 = sadd.s32 %s55, 1
    %p59 = scmp.eq.s32.totalorder %s26, 1
    %p60 = scmp.ne.s32.totalorder %s55, %s57
    %p61 = scmp.eq.s32.totalorder %s26, 0
    %p62 = por %p60, %p61
    %p63 = scmp.ne.s32.totalorder %s55, %s57
    %p64 = scmp.eq.s32.totalorder %s31, 1
    %p65 = por %p63, %p64
    %p66 = scmp.ne.s32.totalorder %s57, %s58
    %p67 = scmp.eq.s32.totalorder %s31, 0
    %p68 = por %p66, %p67
    %p69 = scmp.ne.s32.totalorder %s57, %s58
    %p70 = scmp.eq.s32.totalorder %s32, 1
    %p71 = por %p69, %p70
    %p73 = scmp.ne.s32.totalorder %s58, %s72
    %p74 = scmp.eq.s32.totalorder %s32, 0
    %p75 = por %p73, %p74
    %s77 = sadd.s32 %s76, 1
    %p80 = scmp.eq.s32.totalorder %s26, 1
    %p81 = scmp.ne.s32.totalorder %s76, %s78
    %p82 = scmp.eq.s32.totalorder %s26, 0
    %p83 = por %p81, %p82
    %p84 = scmp.ne.s32.totalorder %s76, %s78
    %p85 = scmp.eq.s32.totalorder %s31, 1
    %p86 = por %p84, %p85
    %p87 = scmp.ne.s32.totalorder %s78, %s79
    %p88 = scmp.eq.s32.totalorder %s31, 0
    %p89 = por %p87, %p88
    %p90 = scmp.ne.s32.totalorder %s78, %s79
    %p91 = scmp.eq.s32.totalorder %s32, 1
    %p92 = por %p90, %p91
    %p94 = scmp.ne.s32.totalorder %s79, %s93
    %p95 = scmp.eq.s32.totalorder %s32, 0
    %p96 = por %p94, %p95
    %s98 = sadd.s32 %s97, 1
    %p101 = scmp.eq.s32.totalorder %s26, 1
    %p102 = scmp.ne.s32.totalorder %s97, %s99
    %p103 = scmp.eq.s32.totalorder %s26, 0
    %p104 = por %p102, %p103
    %p105 = scmp.ne.s32.totalorder %s97, %s99
    %p106 = scmp.eq.s32.totalorder %s31, 1
    %p107 = por %p105, %p106
    %p108 = scmp.ne.s32.totalorder %s99, %s100
    %p109 = scmp.eq.s32.totalorder %s31, 0
    %p110 = por %p108, %p109
    %p111 = scmp.ne.s32.totalorder %s99, %s100
    %p112 = scmp.eq.s32.totalorder %s32, 1
    %p113 = por %p111, %p112
    %p115 = scmp.ne.s32.totalorder %s100, %s114
    %p116 = scmp.eq.s32.totalorder %s32, 0
    %p117 = por %p115, %p116
    %s119 = sadd.s32 %s118, 1
    %p122 = scmp.eq.s32.totalorder %s26, 1
    %p123 = scmp.ne.s32.totalorder %s118, %s120
    %p124 = scmp.eq.s32.totalorder %s26, 0
    %p125 = por %p123, %p124
    %p126 = scmp.ne.s32.totalorder %s118, %s120
    %p127 = scmp.eq.s32.totalorder %s31, 1
    %p128 = por %p126, %p127
    %p129 = scmp.ne.s32.totalorder %s120, %s121
    %p130 = scmp.eq.s32.totalorder %s31, 0
    %p131 = por %p129, %p130
    %p132 = scmp.ne.s32.totalorder %s120, %s121
    %p133 = scmp.eq.s32.totalorder %s32, 1
    %p134 = por %p132, %p133
    %p136 = scmp.ne.s32.totalorder %s121, %s135
    %p137 = scmp.eq.s32.totalorder %s32, 0
    %p138 = por %p136, %p137
    %s140 = sadd.s32 %s139, 1
    %p143 = scmp.eq.s32.totalorder %s26, 1
    %p144 = scmp.ne.s32.totalorder %s139, %s141
    %p145 = scmp.eq.s32.totalorder %s26, 0
    %p146 = por %p144, %p145
    %p147 = scmp.ne.s32.totalorder %s139, %s141
    %p148 = scmp.eq.s32.totalorder %s31, 1
    %p149 = por %p147, %p148
    %p150 = scmp.ne.s32.totalorder %s141, %s142
    %p151 = scmp.eq.s32.totalorder %s31, 0
    %p152 = por %p150, %p151
    %p153 = scmp.ne.s32.totalorder %s141, %s142
    %p154 = scmp.eq.s32.totalorder %s32, 1
    %p155 = por %p153, %p154
    %p157 = scmp.ne.s32.totalorder %s142, %s156
    %p158 = scmp.eq.s32.totalorder %s32, 0
    %p159 = por %p157, %p158
    %s161 = sadd.s32 %s160, 1
    %p164 = scmp.eq.s32.totalorder %s26, 1
    %p165 = scmp.ne.s32.totalorder %s160, %s162
    %p166 = scmp.eq.s32.totalorder %s26, 0
    %p167 = por %p165, %p166
    %p168 = scmp.ne.s32.totalorder %s160, %s162
    %p169 = scmp.eq.s32.totalorder %s31, 1
    %p170 = por %p168, %p169
    %p171 = scmp.ne.s32.totalorder %s162, %s163
    %p172 = scmp.eq.s32.totalorder %s31, 0
    %p173 = por %p171, %p172
    %p174 = scmp.ne.s32.totalorder %s162, %s163
    %p175 = scmp.eq.s32.totalorder %s32, 1
    %p176 = por %p174, %p175
    %p178 = scmp.ne.s32.totalorder %s163, %s177
    %p179 = scmp.eq.s32.totalorder %s32, 0
    %p180 = por %p178, %p179
    %s182 = sadd.s32 %s181, 1
    %p185 = scmp.eq.s32.totalorder %s26, 1
    %p186 = scmp.ne.s32.totalorder %s181, %s183
    %p187 = scmp.eq.s32.totalorder %s26, 0
    %p188 = por %p186, %p187
    %p189 = scmp.ne.s32.totalorder %s181, %s183
    %p190 = scmp.eq.s32.totalorder %s31, 1
    %p191 = por %p189, %p190
    %p192 = scmp.ne.s32.totalorder %s183, %s184
    %p193 = scmp.eq.s32.totalorder %s31, 0
    %p194 = por %p192, %p193
    %p195 = scmp.ne.s32.totalorder %s183, %s184
    %p196 = scmp.eq.s32.totalorder %s32, 1
    %p197 = por %p195, %p196
    %p199 = scmp.ne.s32.totalorder %s184, %s198
    %p200 = scmp.eq.s32.totalorder %s32, 0
    %p201 = por %p199, %p200
    %s202 = ssub.s32 %s26, %s33
    %p203 = scmp.eq.s32.totalorder %s202, 0
    %s205 = sadd.s32 %s204, 1
    %s206 = scalar_select %p203, %s204, %s205
    %p209 = pneg %p203
    %p210 = scmp.eq.s32.totalorder %s26, 1
    %p211 = por %p209, %p210
    %p212 = scmp.ne.s32.totalorder %s204, %s207
    %p213 = scmp.eq.s32.totalorder %s26, 0
    %p214 = por %p212, %p213
    %p215 = scmp.ne.s32.totalorder %s204, %s207
    %p216 = scmp.eq.s32.totalorder %s31, 1
    %p217 = por %p215, %p216
    %p218 = scmp.ne.s32.totalorder %s207, %s208
    %p219 = scmp.eq.s32.totalorder %s31, 0
    %p220 = por %p218, %p219
    %p221 = scmp.ne.s32.totalorder %s207, %s208
    %p222 = scmp.eq.s32.totalorder %s32, 1
    %p223 = por %p221, %p222
    %p225 = scmp.ne.s32.totalorder %s208, %s224
    %p226 = scmp.eq.s32.totalorder %s32, 0
    %p227 = por %p225, %p226
    %s228 = ssub.s32 %s26, %s33
    %p229 = scmp.eq.s32.totalorder %s228, 0
    %s231 = sadd.s32 %s230, 1
    %s232 = scalar_select %p229, %s230, %s231
    %p235 = pneg %p229
    %p236 = scmp.eq.s32.totalorder %s26, 1
    %p237 = por %p235, %p236
    %p238 = scmp.ne.s32.totalorder %s230, %s233
    %p239 = scmp.eq.s32.totalorder %s26, 0
    %p240 = por %p238, %p239
    %p241 = scmp.ne.s32.totalorder %s230, %s233
    %p242 = scmp.eq.s32.totalorder %s31, 1
    %p243 = por %p241, %p242
    %p244 = scmp.ne.s32.totalorder %s233, %s234
    %p245 = scmp.eq.s32.totalorder %s31, 0
    %p246 = por %p244, %p245
    %p247 = scmp.ne.s32.totalorder %s233, %s234
    %p248 = scmp.eq.s32.totalorder %s32, 1
    %p249 = por %p247, %p248
    %p251 = scmp.ne.s32.totalorder %s234, %s250
    %p252 = scmp.eq.s32.totalorder %s32, 0
    %p253 = por %p251, %p252
    %s254 = ssub.s32 %s26, %s33
    %p255 = scmp.eq.s32.totalorder %s254, 0
    %s257 = sadd.s32 %s256, 1
    %s258 = scalar_select %p255, %s256, %s257
    %p261 = pneg %p255
    %p262 = scmp.eq.s32.totalorder %s26, 1
    %p263 = por %p261, %p262
    %p264 = scmp.ne.s32.totalorder %s256, %s259
    %p265 = scmp.eq.s32.totalorder %s26, 0
    %p266 = por %p264, %p265
    %p267 = scmp.ne.s32.totalorder %s256, %s259
    %p268 = scmp.eq.s32.totalorder %s31, 1
    %p269 = por %p267, %p268
    %p270 = scmp.ne.s32.totalorder %s259, %s260
    %p271 = scmp.eq.s32.totalorder %s31, 0
    %p272 = por %p270, %p271
    %p273 = scmp.ne.s32.totalorder %s259, %s260
    %p274 = scmp.eq.s32.totalorder %s32, 1
    %p275 = por %p273, %p274
    %p277 = scmp.ne.s32.totalorder %s260, %s276
    %p278 = scmp.eq.s32.totalorder %s32, 0
    %p279 = por %p277, %p278
    %s280 = ssub.s32 %s26, %s33
    %p281 = scmp.eq.s32.totalorder %s280, 0
    %s283 = sadd.s32 %s282, 1
    %s284 = scalar_select %p281, %s282, %s283
    %p287 = pneg %p281
    %p288 = scmp.eq.s32.totalorder %s26, 1
    %p289 = por %p287, %p288
    %p290 = scmp.ne.s32.totalorder %s282, %s285
    %p291 = scmp.eq.s32.totalorder %s26, 0
    %p292 = por %p290, %p291
    %p293 = scmp.ne.s32.totalorder %s282, %s285
    %p294 = scmp.eq.s32.totalorder %s31, 1
    %p295 = por %p293, %p294
    %p296 = scmp.ne.s32.totalorder %s285, %s286
    %p297 = scmp.eq.s32.totalorder %s31, 0
    %p298 = por %p296, %p297
    %p299 = scmp.ne.s32.totalorder %s285, %s286
    %p300 = scmp.eq.s32.totalorder %s32, 1
    %p301 = por %p299, %p300
    %p303 = scmp.ne.s32.totalorder %s286, %s302
    %p304 = scmp.eq.s32.totalorder %s32, 0
    %p305 = por %p303, %p304
    %s306 = ssub.s32 %s26, %s33
    %p307 = scmp.eq.s32.totalorder %s306, 0
    %s309 = sadd.s32 %s308, 1
    %s310 = scalar_select %p307, %s308, %s309
    %p313 = pneg %p307
    %p314 = scmp.eq.s32.totalorder %s26, 1
    %p315 = por %p313, %p314
    %p316 = scmp.ne.s32.totalorder %s308, %s311
    %p317 = scmp.eq.s32.totalorder %s26, 0
    %p318 = por %p316, %p317
    %p319 = scmp.ne.s32.totalorder %s308, %s311
    %p320 = scmp.eq.s32.totalorder %s31, 1
    %p321 = por %p319, %p320
    %p322 = scmp.ne.s32.totalorder %s311, %s312
    %p323 = scmp.eq.s32.totalorder %s31, 0
    %p324 = por %p322, %p323
    %p325 = scmp.ne.s32.totalorder %s311, %s312
    %p326 = scmp.eq.s32.totalorder %s32, 1
    %p327 = por %p325, %p326
    %p329 = scmp.ne.s32.totalorder %s312, %s328
    %p330 = scmp.eq.s32.totalorder %s32, 0
    %p331 = por %p329, %p330
    %s332 = ssub.s32 %s26, %s33
    %p333 = scmp.eq.s32.totalorder %s332, 0
    %s335 = sadd.s32 %s334, 1
    %s336 = scalar_select %p333, %s334, %s335
    %p339 = pneg %p333
    %p340 = scmp.eq.s32.totalorder %s26, 1
    %p341 = por %p339, %p340
    %p342 = scmp.ne.s32.totalorder %s334, %s337
    %p343 = scmp.eq.s32.totalorder %s26, 0
    %p344 = por %p342, %p343
    %p345 = scmp.ne.s32.totalorder %s334, %s337
    %p346 = scmp.eq.s32.totalorder %s31, 1
    %p347 = por %p345, %p346
    %p348 = scmp.ne.s32.totalorder %s337, %s338
    %p349 = scmp.eq.s32.totalorder %s31, 0
    %p350 = por %p348, %p349
    %p351 = scmp.ne.s32.totalorder %s337, %s338
    %p352 = scmp.eq.s32.totalorder %s32, 1
    %p353 = por %p351, %p352
    %p355 = scmp.ne.s32.totalorder %s338, %s354
    %p356 = scmp.eq.s32.totalorder %s32, 0
    %p357 = por %p355, %p356
    %s358 = ssub.s32 %s26, %s33
    %p359 = scmp.eq.s32.totalorder %s358, 0
    %s361 = sadd.s32 %s360, 1
    %s362 = scalar_select %p359, %s360, %s361
    %p365 = pneg %p359
    %p366 = scmp.eq.s32.totalorder %s26, 1
    %p367 = por %p365, %p366
    %p368 = scmp.ne.s32.totalorder %s360, %s363
    %p369 = scmp.eq.s32.totalorder %s26, 0
    %p370 = por %p368, %p369
    %p371 = scmp.ne.s32.totalorder %s360, %s363
    %p372 = scmp.eq.s32.totalorder %s31, 1
    %p373 = por %p371, %p372
    %p374 = scmp.ne.s32.totalorder %s363, %s364
    %p375 = scmp.eq.s32.totalorder %s31, 0
    %p376 = por %p374, %p375
    %p377 = scmp.ne.s32.totalorder %s363, %s364
    %p378 = scmp.eq.s32.totalorder %s32, 1
    %p379 = por %p377, %p378
    %p381 = scmp.ne.s32.totalorder %s364, %s380
    %p382 = scmp.eq.s32.totalorder %s32, 0
    %p383 = por %p381, %p382
    %s384 = ssub.s32 %s26, %s33
    %p385 = scmp.eq.s32.totalorder %s384, 0
    %s387 = sadd.s32 %s386, 1
    %s388 = scalar_select %p385, %s386, %s387
    %p391 = pneg %p385
    %p392 = scmp.eq.s32.totalorder %s26, 1
    %p393 = por %p391, %p392
    %p394 = scmp.ne.s32.totalorder %s386, %s389
    %p395 = scmp.eq.s32.totalorder %s26, 0
    %p396 = por %p394, %p395
    %p397 = scmp.ne.s32.totalorder %s386, %s389
    %p398 = scmp.eq.s32.totalorder %s31, 1
    %p399 = por %p397, %p398
    %p400 = scmp.ne.s32.totalorder %s389, %s390
    %p401 = scmp.eq.s32.totalorder %s31, 0
    %p402 = por %p400, %p401
    %p403 = scmp.ne.s32.totalorder %s389, %s390
    %p404 = scmp.eq.s32.totalorder %s32, 1
    %p405 = por %p403, %p404
    %p407 = scmp.ne.s32.totalorder %s390, %s406
    %p408 = scmp.eq.s32.totalorder %s32, 0
    %p409 = por %p407, %p408
    %s410 = ssub.s32 %s26, %s33
    %p411 = scmp.eq.s32.totalorder %s410, 0
    %s413 = sadd.s32 %s412, 1
    %s414 = scalar_select %p411, %s412, %s413
    %p417 = pneg %p411
    %p418 = scmp.eq.s32.totalorder %s26, 1
    %p419 = por %p417, %p418
    %p420 = scmp.ne.s32.totalorder %s412, %s415
    %p421 = scmp.eq.s32.totalorder %s26, 0
    %p422 = por %p420, %p421
    %p423 = scmp.ne.s32.totalorder %s412, %s415
    %p424 = scmp.eq.s32.totalorder %s31, 1
    %p425 = por %p423, %p424
    %p426 = scmp.ne.s32.totalorder %s415, %s416
    %p427 = scmp.eq.s32.totalorder %s31, 0
    %p428 = por %p426, %p427
    %p429 = scmp.ne.s32.totalorder %s415, %s416
    %p430 = scmp.eq.s32.totalorder %s32, 1
    %p431 = por %p429, %p430
    %p433 = scmp.ne.s32.totalorder %s416, %s432
    %p434 = scmp.eq.s32.totalorder %s32, 0
    %p435 = por %p433, %p434
    %s436 = ssub.s32 %s26, %s33
    %p437 = scmp.eq.s32.totalorder %s436, 0
    %s439 = sadd.s32 %s438, 1
    %s440 = scalar_select %p437, %s438, %s439
    %p443 = pneg %p437
    %p444 = scmp.eq.s32.totalorder %s26, 1
    %p445 = por %p443, %p444
    %p446 = scmp.ne.s32.totalorder %s438, %s441
    %p447 = scmp.eq.s32.totalorder %s26, 0
    %p448 = por %p446, %p447
    %p449 = scmp.ne.s32.totalorder %s438, %s441
    %p450 = scmp.eq.s32.totalorder %s31, 1
    %p451 = por %p449, %p450
    %p452 = scmp.ne.s32.totalorder %s441, %s442
    %p453 = scmp.eq.s32.totalorder %s31, 0
    %p454 = por %p452, %p453
    %p455 = scmp.ne.s32.totalorder %s441, %s442
    %p456 = scmp.eq.s32.totalorder %s32, 1
    %p457 = por %p455, %p456
    %p459 = scmp.ne.s32.totalorder %s442, %s458
    %p460 = scmp.eq.s32.totalorder %s32, 0
    %p461 = por %p459, %p460
    %s462 = ssub.s32 %s26, %s33
    %p463 = scmp.eq.s32.totalorder %s462, 0
    %s465 = sadd.s32 %s464, 1
    %s466 = scalar_select %p463, %s464, %s465
    %p469 = pneg %p463
    %p470 = scmp.eq.s32.totalorder %s26, 1
    %p471 = por %p469, %p470
    %p472 = scmp.ne.s32.totalorder %s464, %s467
    %p473 = scmp.eq.s32.totalorder %s26, 0
    %p474 = por %p472, %p473
    %p475 = scmp.ne.s32.totalorder %s464, %s467
    %p476 = scmp.eq.s32.totalorder %s31, 1
    %p477 = por %p475, %p476
    %p478 = scmp.ne.s32.totalorder %s467, %s468
    %p479 = scmp.eq.s32.totalorder %s31, 0
    %p480 = por %p478, %p479
    %p481 = scmp.ne.s32.totalorder %s467, %s468
    %p482 = scmp.eq.s32.totalorder %s32, 1
    %p483 = por %p481, %p482
    %p485 = scmp.ne.s32.totalorder %s468, %s484
    %p486 = scmp.eq.s32.totalorder %s32, 0
    %p487 = por %p485, %p486
    %s488 = ssub.s32 %s26, %s33
    %p489 = scmp.eq.s32.totalorder %s488, 0
    %s491 = sadd.s32 %s490, 1
    %s492 = scalar_select %p489, %s490, %s491
    %p495 = pneg %p489
    %p496 = scmp.eq.s32.totalorder %s26, 1
    %p497 = por %p495, %p496
    %p498 = scmp.ne.s32.totalorder %s490, %s493
    %p499 = scmp.eq.s32.totalorder %s26, 0
    %p500 = por %p498, %p499
    %p501 = scmp.ne.s32.totalorder %s490, %s493
    %p502 = scmp.eq.s32.totalorder %s31, 1
    %p503 = por %p501, %p502
    %p504 = scmp.ne.s32.totalorder %s493, %s494
    %p505 = scmp.eq.s32.totalorder %s31, 0
    %p506 = por %p504, %p505
    %p507 = scmp.ne.s32.totalorder %s493, %s494
    %p508 = scmp.eq.s32.totalorder %s32, 1
    %p509 = por %p507, %p508
    %p511 = scmp.ne.s32.totalorder %s494, %s510
    %p512 = scmp.eq.s32.totalorder %s32, 0
    %p513 = por %p511, %p512
    %s515 = sadd.s32 %s514, 1
    %p518 = scmp.eq.s32.totalorder %s26, 1
    %p519 = scmp.ne.s32.totalorder %s514, %s516
    %p520 = scmp.eq.s32.totalorder %s26, 0
    %p521 = por %p519, %p520
    %p522 = scmp.ne.s32.totalorder %s514, %s516
    %p523 = scmp.eq.s32.totalorder %s31, 1
    %p524 = por %p522, %p523
    %p525 = scmp.ne.s32.totalorder %s516, %s517
    %p526 = scmp.eq.s32.totalorder %s31, 0
    %p527 = por %p525, %p526
    %p528 = scmp.ne.s32.totalorder %s516, %s517
    %p529 = scmp.eq.s32.totalorder %s32, 1
    %p530 = por %p528, %p529
    %p532 = scmp.ne.s32.totalorder %s517, %s531
    %p533 = scmp.eq.s32.totalorder %s32, 0
    %p534 = por %p532, %p533
    %p535 = scmp.le.s32.totalorder 1, %s26
    %p536 = scmp.lt.s32.totalorder %s26, 3
    %p537 = pnand %p535, %p536
    %p538 = pneg %p537
    // Predicated region
    $region9: #{clip_visual_forward.1} parent=5 // pred_check
      _
    $region10: #{clip_visual_forward.1} parent=5 // pred_check_branch
      %540 = sbr.rel (%p537) target = $region12
    $region11: #{clip_visual_forward.1} parent=5 // pred_region
      %s541 = ssub.s32 %s26, 1
      // Predicated region
      $region13: #{clip_visual_forward.1} parent=11 // pred_check
        %p542 = pneg %p47
      $region14: #{clip_visual_forward.1} parent=11 // pred_check_branch
        %544 = sbr.rel (%p542) target = $region16
      $region15: #{clip_visual_forward.1} parent=11 // pred_region
        _
      $region16: #{clip_visual_forward.1} parent=11 // pred_fallthru
        _
      // Predicated region
      $region17: #{clip_visual_forward.1} parent=11 // pred_check
        %p545 = pneg %p68
      $region18: #{clip_visual_forward.1} parent=11 // pred_check_branch
        %547 = sbr.rel (%p545) target = $region20
      $region19: #{clip_visual_forward.1} parent=11 // pred_region
        _
      $region20: #{clip_visual_forward.1} parent=11 // pred_fallthru
        _
      // Predicated region
      $region21: #{clip_visual_forward.1} parent=11 // pred_check
        %p548 = pneg %p89
      $region22: #{clip_visual_forward.1} parent=11 // pred_check_branch
        %550 = sbr.rel (%p548) target = $region24
      $region23: #{clip_visual_forward.1} parent=11 // pred_region
        _
      $region24: #{clip_visual_forward.1} parent=11 // pred_fallthru
        _
      // Predicated region
      $region25: #{clip_visual_forward.1} parent=11 // pred_check
        %p551 = pneg %p110
      $region26: #{clip_visual_forward.1} parent=11 // pred_check_branch
        %553 = sbr.rel (%p551) target = $region28
      $region27: #{clip_visual_forward.1} parent=11 // pred_region
        _
      $region28: #{clip_visual_forward.1} parent=11 // pred_fallthru
        _
      // Predicated region
      $region29: #{clip_visual_forward.1} parent=11 // pred_check
        %p554 = pneg %p131
      $region30: #{clip_visual_forward.1} parent=11 // pred_check_branch
        %556 = sbr.rel (%p554) target = $region32
      $region31: #{clip_visual_forward.1} parent=11 // pred_region
        _
      $region32: #{clip_visual_forward.1} parent=11 // pred_fallthru
        _
      // Predicated region
      $region33: #{clip_visual_forward.1} parent=11 // pred_check
        %p557 = pneg %p152
      $region34: #{clip_visual_forward.1} parent=11 // pred_check_branch
        %559 = sbr.rel (%p557) target = $region36
      $region35: #{clip_visual_forward.1} parent=11 // pred_region
        _
      $region36: #{clip_visual_forward.1} parent=11 // pred_fallthru
        _
      // Predicated region
      $region37: #{clip_visual_forward.1} parent=11 // pred_check
        %p560 = pneg %p173
      $region38: #{clip_visual_forward.1} parent=11 // pred_check_branch
        %562 = sbr.rel (%p560) target = $region40
      $region39: #{clip_visual_forward.1} parent=11 // pred_region
        _
      $region40: #{clip_visual_forward.1} parent=11 // pred_fallthru
        _
      // Predicated region
      $region41: #{clip_visual_forward.1} parent=11 // pred_check
        %p563 = pneg %p194
      $region42: #{clip_visual_forward.1} parent=11 // pred_check_branch
        %565 = sbr.rel (%p563) target = $region44
      $region43: #{clip_visual_forward.1} parent=11 // pred_region
        _
      $region44: #{clip_visual_forward.1} parent=11 // pred_fallthru
        _
    $region12: #{clip_visual_forward.1} parent=5 // pred_fallthru
      _
    %p566 = scmp.lt.s32.totalorder %s26, 2
    // Predicated region
    $region45: #{clip_visual_forward.1} parent=5 // pred_check
      %p567 = pneg %p566
    $region46: #{clip_visual_forward.1} parent=5 // pred_check_branch
      %569 = sbr.rel (%p567) target = $region48
    $region47: #{clip_visual_forward.1} parent=5 // pred_region
      // Predicated region
      $region49: #{clip_visual_forward.1} parent=47 // pred_check
        %p570 = pneg %p214
      $region50: #{clip_visual_forward.1} parent=47 // pred_check_branch
        %572 = sbr.rel (%p570) target = $region52
      $region51: #{clip_visual_forward.1} parent=47 // pred_region
        %p573 = scmp.lt.s32.totalorder %s26, 1
        %s574 = scalar_select %p573, %s26, 1
        %s575 = scalar_lea.vmem %s8, %s574
      $region52: #{clip_visual_forward.1} parent=47 // pred_fallthru
        _
      // Predicated region
      $region53: #{clip_visual_forward.1} parent=47 // pred_check
        %p576 = pneg %p240
      $region54: #{clip_visual_forward.1} parent=47 // pred_check_branch
        %578 = sbr.rel (%p576) target = $region56
      $region55: #{clip_visual_forward.1} parent=47 // pred_region
        %p579 = scmp.lt.s32.totalorder %s26, 1
        %s580 = scalar_select %p579, %s26, 1
        %s581 = scalar_lea.vmem %s9, %s580
      $region56: #{clip_visual_forward.1} parent=47 // pred_fallthru
        _
      // Predicated region
      $region57: #{clip_visual_forward.1} parent=47 // pred_check
        %p582 = pneg %p266
      $region58: #{clip_visual_forward.1} parent=47 // pred_check_branch
        %584 = sbr.rel (%p582) target = $region60
      $region59: #{clip_visual_forward.1} parent=47 // pred_region
        %p585 = scmp.lt.s32.totalorder %s26, 1
        %s586 = scalar_select %p585, %s26, 1
        %s587 = smul.addr %s586, 12
        %s588 = smul.addr %s587, 8
        %s589 = scalar_lea.vmem %s10, %s588
      $region60: #{clip_visual_forward.1} parent=47 // pred_fallthru
        _
      // Predicated region
      $region61: #{clip_visual_forward.1} parent=47 // pred_check
        %p590 = pneg %p292
      $region62: #{clip_visual_forward.1} parent=47 // pred_check_branch
        %592 = sbr.rel (%p590) target = $region64
      $region63: #{clip_visual_forward.1} parent=47 // pred_region
        %p593 = scmp.lt.s32.totalorder %s26, 1
        %s594 = scalar_select %p593, %s26, 1
        %s595 = smul.addr %s594, 3
        %s596 = scalar_lea.vmem %s11, %s595
      $region64: #{clip_visual_forward.1} parent=47 // pred_fallthru
        _
      // Predicated region
      $region65: #{clip_visual_forward.1} parent=47 // pred_check
        %p597 = pneg %p318
      $region66: #{clip_visual_forward.1} parent=47 // pred_check_branch
        %599 = sbr.rel (%p597) target = $region68
      $region67: #{clip_visual_forward.1} parent=47 // pred_region
        %p600 = scmp.lt.s32.totalorder %s26, 1
        %s601 = scalar_select %p600, %s26, 1
        %s602 = smul.addr %s601, 4
        %s603 = smul.addr %s602, 8
        %s604 = scalar_lea.vmem %s12, %s603
      $region68: #{clip_visual_forward.1} parent=47 // pred_fallthru
        _
      // Predicated region
      $region69: #{clip_visual_forward.1} parent=47 // pred_check
        %p605 = pneg %p344
      $region70: #{clip_visual_forward.1} parent=47 // pred_check_branch
        %607 = sbr.rel (%p605) target = $region72
      $region71: #{clip_visual_forward.1} parent=47 // pred_region
        %p608 = scmp.lt.s32.totalorder %s26, 1
        %s609 = scalar_select %p608, %s26, 1
        %s610 = scalar_lea.vmem %s13, %s609
      $region72: #{clip_visual_forward.1} parent=47 // pred_fallthru
        _
      // Predicated region
      $region73: #{clip_visual_forward.1} parent=47 // pred_check
        %p611 = pneg %p370
      $region74: #{clip_visual_forward.1} parent=47 // pred_check_branch
        %613 = sbr.rel (%p611) target = $region76
      $region75: #{clip_visual_forward.1} parent=47 // pred_region
        %p614 = scmp.lt.s32.totalorder %s26, 1
        %s615 = scalar_select %p614, %s26, 1
        %s616 = scalar_lea.vmem %s14, %s615
      $region76: #{clip_visual_forward.1} parent=47 // pred_fallthru
        _
      // Predicated region
      $region77: #{clip_visual_forward.1} parent=47 // pred_check
        %p617 = pneg %p396
      $region78: #{clip_visual_forward.1} parent=47 // pred_check_branch
        %619 = sbr.rel (%p617) target = $region80
      $region79: #{clip_visual_forward.1} parent=47 // pred_region
        %p620 = scmp.lt.s32.totalorder %s26, 1
        %s621 = scalar_select %p620, %s26, 1
        %s622 = scalar_lea.vmem %s15, %s621
      $region80: #{clip_visual_forward.1} parent=47 // pred_fallthru
        _
      // Predicated region
      $region81: #{clip_visual_forward.1} parent=47 // pred_check
        %p623 = pneg %p422
      $region82: #{clip_visual_forward.1} parent=47 // pred_check_branch
        %625 = sbr.rel (%p623) target = $region84
      $region83: #{clip_visual_forward.1} parent=47 // pred_region
        %p626 = scmp.lt.s32.totalorder %s26, 1
        %s627 = scalar_select %p626, %s26, 1
        %s628 = smul.addr %s627, 4
        %s629 = smul.addr %s628, 8
        %s630 = scalar_lea.vmem %s16, %s629
      $region84: #{clip_visual_forward.1} parent=47 // pred_fallthru
        _
      // Predicated region
      $region85: #{clip_visual_forward.1} parent=47 // pred_check
        %p631 = pneg %p448
      $region86: #{clip_visual_forward.1} parent=47 // pred_check_branch
        %633 = sbr.rel (%p631) target = $region88
      $region87: #{clip_visual_forward.1} parent=47 // pred_region
        %p634 = scmp.lt.s32.totalorder %s26, 1
        %s635 = scalar_select %p634, %s26, 1
        %s636 = scalar_lea.vmem %s17, %s635
      $region88: #{clip_visual_forward.1} parent=47 // pred_fallthru
        _
      // Predicated region
      $region89: #{clip_visual_forward.1} parent=47 // pred_check
        %p637 = pneg %p474
      $region90: #{clip_visual_forward.1} parent=47 // pred_check_branch
        %639 = sbr.rel (%p637) target = $region92
      $region91: #{clip_visual_forward.1} parent=47 // pred_region
        %p640 = scmp.lt.s32.totalorder %s26, 1
        %s641 = scalar_select %p640, %s26, 1
        %s642 = smul.addr %s641, 16
        %s643 = smul.addr %s642, 8
        %s644 = scalar_lea.vmem %s18, %s643
      $region92: #{clip_visual_forward.1} parent=47 // pred_fallthru
        _
      // Predicated region
      $region93: #{clip_visual_forward.1} parent=47 // pred_check
        %p645 = pneg %p500
      $region94: #{clip_visual_forward.1} parent=47 // pred_check_branch
        %647 = sbr.rel (%p645) target = $region96
      $region95: #{clip_visual_forward.1} parent=47 // pred_region
        %p648 = scmp.lt.s32.totalorder %s26, 1
        %s649 = scalar_select %p648, %s26, 1
        %s650 = scalar_lea.vmem %s19, %s649
      $region96: #{clip_visual_forward.1} parent=47 // pred_fallthru
        _
    $region48: #{clip_visual_forward.1} parent=5 // pred_fallthru
      _
    %p651 = scmp.le.s32.totalorder 1, %s26
    %p652 = scmp.lt.s32.totalorder %s26, 3
    %p653 = pnand %p651, %p652
    %p654 = pneg %p653
    // Predicated region
    $region97: #{clip_visual_forward.1} parent=5 // pred_check
      _
    $region98: #{clip_visual_forward.1} parent=5 // pred_check_branch
      %656 = sbr.rel (%p653) target = $region100
    $region99: #{clip_visual_forward.1} parent=5 // pred_region
      %s657 = ssub.s32 %s26, 1
      %p658 = pneg %p47
      %p659 = pneg %p44
      %p660 = pneg %p68
      %p661 = pneg %p65
      %p662 = pneg %p89
      %p663 = pneg %p86
      %p664 = pneg %p110
      %p665 = pneg %p107
      %p666 = pneg %p131
      %p667 = pneg %p128
      %p668 = pneg %p152
      %p669 = pneg %p149
      %p670 = pneg %p173
      %p671 = pneg %p170
      %p672 = pneg %p194
      %p673 = pneg %p191
      %p674 = scmp.lt.s32.totalorder %s31, 1
      %s675 = scalar_select %p674, %s31, 1
      %s676 = scalar_lea.vmem %s8, %s675
      %p677 = pneg %p220
      %p678 = pneg %p217
      %p679 = scmp.lt.s32.totalorder %s31, 1
      %s680 = scalar_select %p679, %s31, 1
      %s681 = scalar_lea.vmem %s9, %s680
      %p682 = pneg %p246
      %p683 = pneg %p243
      %p684 = scmp.lt.s32.totalorder %s31, 1
      %s685 = scalar_select %p684, %s31, 1
      %s686 = smul.addr %s685, 12
      %s687 = smul.addr %s686, 8
      %s688 = scalar_lea.vmem %s10, %s687
      %p689 = pneg %p272
      %p690 = pneg %p269
      %p691 = scmp.lt.s32.totalorder %s31, 1
      %s692 = scalar_select %p691, %s31, 1
      %s693 = smul.addr %s692, 3
      %s694 = scalar_lea.vmem %s11, %s693
      %p695 = pneg %p298
      %p696 = pneg %p295
      %p697 = scmp.lt.s32.totalorder %s31, 1
      %s698 = scalar_select %p697, %s31, 1
      %s699 = smul.addr %s698, 4
      %s700 = smul.addr %s699, 8
      %s701 = scalar_lea.vmem %s12, %s700
      %p702 = pneg %p324
      %p703 = pneg %p321
      %p704 = scmp.lt.s32.totalorder %s31, 1
      %s705 = scalar_select %p704, %s31, 1
      %s706 = scalar_lea.vmem %s13, %s705
      %p707 = pneg %p350
      %p708 = pneg %p347
      %p709 = scmp.lt.s32.totalorder %s31, 1
      %s710 = scalar_select %p709, %s31, 1
      %s711 = scalar_lea.vmem %s14, %s710
      %p712 = pneg %p376
      %p713 = pneg %p373
      %p714 = scmp.lt.s32.totalorder %s31, 1
      %s715 = scalar_select %p714, %s31, 1
      %s716 = scalar_lea.vmem %s15, %s715
      %p717 = pneg %p402
      %p718 = pneg %p399
      %p719 = scmp.lt.s32.totalorder %s31, 1
      %s720 = scalar_select %p719, %s31, 1
      %s721 = smul.addr %s720, 4
      %s722 = smul.addr %s721, 8
      %s723 = scalar_lea.vmem %s16, %s722
      %p724 = pneg %p428
      %p725 = pneg %p425
      %p726 = scmp.lt.s32.totalorder %s31, 1
      %s727 = scalar_select %p726, %s31, 1
      %s728 = scalar_lea.vmem %s17, %s727
      %p729 = pneg %p454
      %p730 = pneg %p451
      %p731 = scmp.lt.s32.totalorder %s31, 1
      %s732 = scalar_select %p731, %s31, 1
      %s733 = smul.addr %s732, 16
      %s734 = smul.addr %s733, 8
      %s735 = scalar_lea.vmem %s18, %s734
      %p736 = pneg %p480
      %p737 = pneg %p477
      %p738 = scmp.lt.s32.totalorder %s31, 1
      %s739 = scalar_select %p738, %s31, 1
      %s740 = scalar_lea.vmem %s19, %s739
      %p741 = pneg %p506
      %p742 = pneg %p503
      %p743 = pneg %p527
      %p744 = pneg %p524
      %p745 = scmp.lt.s32.totalorder %s31, 1
      %s746 = scalar_select %p745, %s31, 1
      %s747 = scalar_lea.vmem %s8, %s746
      %p748 = scmp.lt.s32.totalorder %s31, 1
      %s749 = scalar_select %p748, %s31, 1
      %s750 = scalar_lea.vmem %s9, %s749
      %p751 = scmp.lt.s32.totalorder %s31, 1
      %s752 = scalar_select %p751, %s31, 1
      %s753 = smul.addr %s752, 12
      %s754 = smul.addr %s753, 8
      %s755 = scalar_lea.vmem %s10, %s754
      %p756 = scmp.lt.s32.totalorder %s31, 1
      %s757 = scalar_select %p756, %s31, 1
      %s758 = smul.addr %s757, 3
      %s759 = scalar_lea.vmem %s11, %s758
      %p760 = scmp.lt.s32.totalorder %s31, 1
      %s761 = scalar_select %p760, %s31, 1
      %s762 = smul.addr %s761, 4
      %s763 = smul.addr %s762, 8
      %s764 = scalar_lea.vmem %s12, %s763
      %p765 = scmp.lt.s32.totalorder %s31, 1
      %s766 = scalar_select %p765, %s31, 1
      %s767 = scalar_lea.vmem %s13, %s766
      %p768 = scmp.lt.s32.totalorder %s31, 1
      %s769 = scalar_select %p768, %s31, 1
      %s770 = scalar_lea.vmem %s14, %s769
      %p771 = scmp.lt.s32.totalorder %s31, 1
      %s772 = scalar_select %p771, %s31, 1
      %s773 = scalar_lea.vmem %s15, %s772
      %p774 = scmp.lt.s32.totalorder %s31, 1
      %s775 = scalar_select %p774, %s31, 1
      %s776 = smul.addr %s775, 4
      %s777 = smul.addr %s776, 8
      %s778 = scalar_lea.vmem %s16, %s777
      %p779 = scmp.lt.s32.totalorder %s31, 1
      %s780 = scalar_select %p779, %s31, 1
      %s781 = scalar_lea.vmem %s17, %s780
      %p782 = scmp.lt.s32.totalorder %s31, 1
      %s783 = scalar_select %p782, %s31, 1
      %s784 = smul.addr %s783, 16
      %s785 = smul.addr %s784, 8
      %s786 = scalar_lea.vmem %s18, %s785
      %p787 = scmp.lt.s32.totalorder %s31, 1
      %s788 = scalar_select %p787, %s31, 1
      %s789 = scalar_lea.vmem %s19, %s788
      %p790 = scmp.eq.s32.totalorder %s31, 0
      // Predicated region
      $region101: #{clip_visual_forward.1} parent=99 // pred_check
        %p791 = pneg %p790
      $region102: #{clip_visual_forward.1} parent=99 // pred_check_branch
        %793 = sbr.rel (%p791) target = $region104
      $region103: #{clip_visual_forward.1} parent=99 // pred_region
        %v794 = vld [vmem:[%s0] sm:$0xff]
        %v795 = vld [vmem:[%s0 + $0x8] sm:$0xff]
        %v796 = vld [vmem:[%s0 + $0x10] sm:$0xff]
        %v797 = vld [vmem:[%s0 + $0x18] sm:$0xff]
        %v798 = vld [vmem:[%s1] sm:$0xff]
        %v799 = vld [vmem:[%s1 + $0x8] sm:$0xff]
        %v800 = vld [vmem:[%s1 + $0x10] sm:$0xff]
        %v801 = vld [vmem:[%s1 + $0x18] sm:$0xff]
        %v802 = vld [vmem:[%s1 + $0x20] sm:$0xff]
        %v803 = vld [vmem:[%s1 + $0x28] sm:$0xff]
        %v804 = vld [vmem:[%s1 + $0x30] sm:$0xff]
        %v805 = vld [vmem:[%s1 + $0x38] sm:$0xff]
        %v806 = vld [vmem:[%s1 + $0x40] sm:$0xff]
        %v807 = vld [vmem:[%s1 + $0x48] sm:$0xff]
        %v808 = vld [vmem:[%s1 + $0x50] sm:$0xff]
        %v809 = vld [vmem:[%s1 + $0x58] sm:$0xff]
        %v810 = vld [vmem:[%s1 + $0x60] sm:$0xff]
        %v811 = vld [vmem:[%s1 + $0x68] sm:$0xff]
        %v812 = vld [vmem:[%s1 + $0x70] sm:$0xff]
        %v813 = vld [vmem:[%s1 + $0x78] sm:$0xff]
        %v814 = vld [vmem:[%s1 + $0x80] sm:$0xff]
        %v815 = vld [vmem:[%s1 + $0x88] sm:$0xff]
        %v816 = vld [vmem:[%s1 + $0x90] sm:$0xff]
        %v817 = vld [vmem:[%s1 + $0x98] sm:$0xff]
        %v818 = vld [vmem:[%s1 + $0xa0] sm:$0xff]
        %v819 = vld [vmem:[%s1 + $0xa8] sm:$0xff]
        %v820 = vld [vmem:[%s1 + $0xb0] sm:$0xff]
        %v821 = vld [vmem:[%s1 + $0xb8] sm:$0xff]
        %vm822 = vcmask 523264
        %v824 = vsel %vm822, %v795, 0
        %v827 = vsel %vm822, %v797, 0
        %829 = vmatprep.subr.mxu0 0.0
        %830 = vmatpush1.msra.mxu0 %v813
        %831 = vmatprep.subr.mxu0 0.0
        %832 = vmatpush1.msra.mxu0 %v812
        %833 = vmatprep.subr.mxu0 0.0
        %834 = vmatpush1.msra.mxu0 %v811
        %835 = vmatprep.subr.mxu0 0.0
        %836 = vmatpush1.msra.mxu0 %v810
        %837 = vmatprep.subr.mxu0 0.0
        %838 = vmatpush1.msra.mxu0 %v809
        %839 = vmatprep.subr.mxu0 0.0
        %840 = vmatpush1.msra.mxu0 %v808
        %841 = vmatprep.subr.mxu0 0.0
        %842 = vmatpush1.msra.mxu0 %v807
        %843 = vmatprep.subr.mxu0 0.0
        %844 = vmatpush1.msra.mxu0 %v806
        %845 = vmatprep.subr.mxu0 0.0
        %846 = vmatpush1.msra.mxu0 %v805
        %847 = vmatprep.subr.mxu0 0.0
        %848 = vmatpush1.msra.mxu0 %v804
        %849 = vmatprep.subr.mxu0 0.0
        %850 = vmatpush1.msra.mxu0 %v803
        %851 = vmatprep.subr.mxu0 0.0
        %852 = vmatpush1.msra.mxu0 %v802
        %853 = vmatprep.subr.mxu0 0.0
        %854 = vmatpush1.msra.mxu0 %v801
        %855 = vmatprep.subr.mxu0 0.0
        %856 = vmatpush1.msra.mxu0 %v800
        %857 = vmatprep.subr.mxu0 0.0
        %858 = vmatpush1.msra.mxu0 %v799
        %859 = vmatprep.subr.mxu0 0.0
        %860 = vmatpush1.msra.mxu0 %v798
        %861 = vmatprep.subr.mxu0 0.0
        %862 = vmatpush2.msra.mxu0 0.0
        %863 = vmatprep.subr.mxu0 0.0
        %864 = vmatpush2.msra.mxu0 0.0
        %865 = vmatprep.subr.mxu0 0.0
        %866 = vmatpush2.msra.mxu0 0.0
        %867 = vmatprep.subr.mxu0 0.0
        %868 = vmatpush2.msra.mxu0 0.0
        %869 = vmatprep.subr.mxu0 0.0
        %870 = vmatpush2.msra.mxu0 0.0
        %871 = vmatprep.subr.mxu0 0.0
        %872 = vmatpush2.msra.mxu0 0.0
        %873 = vmatprep.subr.mxu0 0.0
        %874 = vmatpush2.msra.mxu0 0.0
        %875 = vmatprep.subr.mxu0 0.0
        %876 = vmatpush2.msra.mxu0 0.0
        %877 = vmatprep.subr.mxu0 0.0
        %878 = vmatpush2.msra.mxu0 %v821
        %879 = vmatprep.subr.mxu0 0.0
        %880 = vmatpush2.msra.mxu0 %v820
        %881 = vmatprep.subr.mxu0 0.0
        %882 = vmatpush2.msra.mxu0 %v819
        %883 = vmatprep.subr.mxu0 0.0
        %884 = vmatpush2.msra.mxu0 %v818
        %885 = vmatprep.subr.mxu0 0.0
        %886 = vmatpush2.msra.mxu0 %v817
        %887 = vmatprep.subr.mxu0 0.0
        %888 = vmatpush2.msra.mxu0 %v816
        %889 = vmatprep.subr.mxu0 0.0
        %890 = vmatpush2.msra.mxu0 %v815
        %891 = vmatprep.subr.mxu0 0.0
        %892 = vmatpush2.msra.mxu0 %v814
        %893 = vmatprep.mubr.f32.mxu0 %v824
        %894 = vmatmul.mubr.f32.gmra.mxu0 %v794
        %v895 = vpop.f32.mrf.mxu0
        %v896 = vadd.f32 0.0, %v895
        %v897 = vpop.f32.mrf.mxu0
        %898 = vmatprep.mubr.f32.mxu0 %v827
        %899 = vmatmul.mubr.f32.gmra.mxu0 %v796
        %v900 = vpop.f32.mrf.mxu0
        %v901 = vadd.f32 0.0, %v900
        %v902 = vpop.f32.mrf.mxu0
        %903 = vdwg.mxu0
        %v904 = vld [vmem:[%s2] sm:$0xff]
        %v905 = vld [vmem:[%s2 + $0x8] sm:$0xff]
        %v906 = vadd.f32 %v904, %v896
        %v907 = vadd.f32 %v905, %v901
        %v908 = vld [vmem:[%s3] sm:$0x1]
        %v909 = vld [vmem:[%s4] sm:$0x1]
        %vm910 = vcmask 261120
        %v911 = vsel %vm910, %v906, 0.0
        %912 = vadd.xlane.f32.xlu0 %v911
        %v913 = vpop.xlane.xlu0 %912
        %v914 = vsel %vm910, %v907, 0.0
        %915 = vadd.xlane.f32.xlu0 %v914
        %v916 = vpop.xlane.xlu0 %915
        %v917 = vrcp.pop 32.0
        %v918 = vmul.f32 %v913, %v917
        %v919 = vmul.f32 %v916, %v917
        %v920 = vsub.f32 %v906, %v918
        %v921 = vsub.f32 %v907, %v919
        %v922 = vmul.f32 %v920, %v920
        %v923 = vmul.f32 %v921, %v921
        %v924 = vsel %vm910, %v922, 0.0
        %925 = vadd.xlane.f32.xlu0 %v924
        %v926 = vpop.xlane.xlu0 %925
        %v927 = vsel %vm910, %v923, 0.0
        %928 = vadd.xlane.f32.xlu0 %v927
        %v929 = vpop.xlane.xlu0 %928
        %v930 = vmul.f32 %v926, %v917
        %v931 = vmul.f32 %v929, %v917
        %v932 = vadd.f32 %v930, 1e-05
        %v933 = vadd.f32 %v931, 1e-05
        %v934 = vrsqrt.pop %v932
        %v935 = vrsqrt.pop %v933
        %v936 = vmul.f32 %v920, %v934
        %v937 = vmul.f32 %v921, %v935
        %v939 = vlaneseq
        %v940 = vshrl.u32 %v939, 7
        %v941 = vsub.s32 0, %v940
        %v942 = vrot.slane %v908, %v941
        %v944 = vmul.f32 %v936, %v942
        %v945 = vmul.f32 %v937, %v942
        %v947 = vlaneseq
        %v948 = vshrl.u32 %v947, 7
        %v949 = vsub.s32 0, %v948
        %v950 = vrot.slane %v909, %v949
        %v952 = vadd.f32 %v944, %v950
        %v953 = vadd.f32 %v945, %v950
        %954 = vst.msk [vmem:[#allocation2] sm:$0xff] %vm910, %v952
        %955 = vst.msk [vmem:[#allocation2 + $0x8] sm:$0xff] %vm910, %v953
      $region104: #{clip_visual_forward.1} parent=99 // pred_fallthru
        _
      %v956 = vld [vmem:[#allocation2] sm:$0xff]
      %v957 = vld [vmem:[#allocation2 + $0x8] sm:$0xff]
      %v958 = vld [vmem:[%s747] sm:$0x1]
      %v959 = vld [vmem:[%s750] sm:$0x1]
      %vm960 = vcmask 261120
      %v961 = vsel %vm960, %v956, 0.0
      %962 = vadd.xlane.f32.xlu0 %v961
      %v963 = vpop.xlane.xlu0 %962
      %v964 = vsel %vm960, %v957, 0.0
      %965 = vadd.xlane.f32.xlu0 %v964
      %v966 = vpop.xlane.xlu0 %965
      %v967 = vrcp.pop 32.0
      %v968 = vmul.f32 %v963, %v967
      %v969 = vmul.f32 %v966, %v967
      %v970 = vsub.f32 %v956, %v968
      %v971 = vsub.f32 %v957, %v969
      %v972 = vmul.f32 %v970, %v970
      %v973 = vmul.f32 %v971, %v971
      %v974 = vsel %vm960, %v972, 0.0
      %975 = vadd.xlane.f32.xlu0 %v974
      %v976 = vpop.xlane.xlu0 %975
      %v977 = vsel %vm960, %v973, 0.0
      %978 = vadd.xlane.f32.xlu0 %v977
      %v979 = vpop.xlane.xlu0 %978
      %v980 = vmul.f32 %v976, %v967
      %v981 = vmul.f32 %v979, %v967
      %v982 = vadd.f32 %v980, 1e-05
      %v983 = vadd.f32 %v981, 1e-05
      %v984 = vrsqrt.pop %v982
      %v985 = vrsqrt.pop %v983
      %v986 = vmul.f32 %v970, %v984
      %v987 = vmul.f32 %v971, %v985
      %v989 = vlaneseq
      %v990 = vshrl.u32 %v989, 7
      %v991 = vsub.s32 0, %v990
      %v992 = vrot.slane %v958, %v991
      %v994 = vmul.f32 %v986, %v992
      %v995 = vmul.f32 %v987, %v992
      %v997 = vlaneseq
      %v998 = vshrl.u32 %v997, 7
      %v999 = vsub.s32 0, %v998
      %v1000 = vrot.slane %v959, %v999
      %v1002 = vadd.f32 %v994, %v1000
      %v1003 = vadd.f32 %v995, %v1000
      %v1004 = vld [vmem:[%s755] sm:$0xff]
      %v1005 = vld [vmem:[%s755 + $0x8] sm:$0xff]
      %v1006 = vld [vmem:[%s755 + $0x10] sm:$0xff]
      %v1007 = vld [vmem:[%s755 + $0x18] sm:$0xff]
      %v1008 = vld [vmem:[%s759] sm:$0x1]
      %v1010 = vlaneseq
      %v1011 = vshrl.u32 %v1010, 7
      %v1012 = vsub.s32 0, %v1011
      %v1013 = vrot.slane %v1008, %v1012
      %v1016 = vsel %vm960, %v1002, 0
      %v1019 = vsel %vm960, %v1003, 0
      %1021 = vmatprep.subr.mxu0 0.0
      %1022 = vmatpush1.msra.mxu0 0.0
      %1023 = vmatprep.subr.mxu0 0.0
      %1024 = vmatpush1.msra.mxu0 0.0
      %1025 = vmatprep.subr.mxu0 0.0
      %1026 = vmatpush1.msra.mxu0 0.0
      %1027 = vmatprep.subr.mxu0 0.0
      %1028 = vmatpush1.msra.mxu0 0.0
      %1029 = vmatprep.subr.mxu0 0.0
      %1030 = vmatpush1.msra.mxu0 0.0
      %1031 = vmatprep.subr.mxu0 0.0
      %1032 = vmatpush1.msra.mxu0 0.0
      %1033 = vmatprep.subr.mxu0 0.0
      %1034 = vmatpush1.msra.mxu0 0.0
      %1035 = vmatprep.subr.mxu0 0.0
      %1036 = vmatpush1.msra.mxu0 0.0
      %1037 = vmatprep.subr.mxu0 0.0
      %1038 = vmatpush1.msra.mxu0 0.0
      %1039 = vmatprep.subr.mxu0 0.0
      %1040 = vmatpush1.msra.mxu0 0.0
      %1041 = vmatprep.subr.mxu0 0.0
      %1042 = vmatpush1.msra.mxu0 0.0
      %1043 = vmatprep.subr.mxu0 0.0
      %1044 = vmatpush1.msra.mxu0 0.0
      %1045 = vmatprep.subr.mxu0 0.0
      %1046 = vmatpush1.msra.mxu0 %v1007
      %1047 = vmatprep.subr.mxu0 0.0
      %1048 = vmatpush1.msra.mxu0 %v1006
      %1049 = vmatprep.subr.mxu0 0.0
      %1050 = vmatpush1.msra.mxu0 %v1005
      %1051 = vmatprep.subr.mxu0 0.0
      %1052 = vmatpush1.msra.mxu0 %v1004
      %1053 = vmatprep.subr.mxu0 0.0
      %1054 = vmatpush2.msra.mxu0 0.0
      %1055 = vmatprep.subr.mxu0 0.0
      %1056 = vmatpush2.msra.mxu0 0.0
      %1057 = vmatprep.subr.mxu0 0.0
      %1058 = vmatpush2.msra.mxu0 0.0
      %1059 = vmatprep.subr.mxu0 0.0
      %1060 = vmatpush2.msra.mxu0 0.0
      %1061 = vmatprep.subr.mxu0 0.0
      %1062 = vmatpush2.msra.mxu0 0.0
      %1063 = vmatprep.subr.mxu0 0.0
      %1064 = vmatpush2.msra.mxu0 0.0
      %1065 = vmatprep.subr.mxu0 0.0
      %1066 = vmatpush2.msra.mxu0 0.0
      %1067 = vmatprep.subr.mxu0 0.0
      %1068 = vmatpush2.msra.mxu0 0.0
      %1069 = vmatprep.subr.mxu0 0.0
      %1070 = vmatpush2.msra.mxu0 0.0
      %1071 = vmatprep.subr.mxu0 0.0
      %1072 = vmatpush2.msra.mxu0 0.0
      %1073 = vmatprep.subr.mxu0 0.0
      %1074 = vmatpush2.msra.mxu0 0.0
      %1075 = vmatprep.subr.mxu0 0.0
      %1076 = vmatpush2.msra.mxu0 0.0
      %1077 = vmatprep.subr.mxu0 0.0
      %1078 = vmatpush2.msra.mxu0 0.0
      %1079 = vmatprep.subr.mxu0 0.0
      %1080 = vmatpush2.msra.mxu0 0.0
      %1081 = vmatprep.subr.mxu0 0.0
      %1082 = vmatpush2.msra.mxu0 0.0
      %1083 = vmatprep.subr.mxu0 0.0
      %1084 = vmatpush2.msra.mxu0 0.0
      %1085 = vmatprep.mubr.f32.mxu0 0.0
      %1086 = vmatmul.mubr.f32.gmra.mxu0 %v1016
      %v1087 = vpop.f32.mrf.mxu0
      %v1088 = vadd.f32 %v1013, %v1087
      %v1089 = vpop.f32.mrf.mxu0
      %1090 = vmatprep.mubr.f32.mxu0 0.0
      %1091 = vmatmul.mubr.f32.gmra.mxu0 %v1019
      %v1092 = vpop.f32.mrf.mxu0
      %v1093 = vadd.f32 %v1013, %v1092
      %v1094 = vpop.f32.mrf.mxu0
      %1095 = vdwg.mxu0
      %v1096 = vmul.f32 %v1088, 0.35355338
      %v1097 = vmul.f32 %v1093, 0.35355338
      %s1098 = scalar_lea.vmem %s755, 32
      %v1099 = vld [vmem:[%s1098] sm:$0xff]
      %v1100 = vld [vmem:[%s1098 + $0x8] sm:$0xff]
      %v1101 = vld [vmem:[%s1098 + $0x10] sm:$0xff]
      %v1102 = vld [vmem:[%s1098 + $0x18] sm:$0xff]
      %s1103 = scalar_lea.vmem %s759, 1
      %v1104 = vld [vmem:[%s1103] sm:$0x1]
      %v1106 = vlaneseq
      %v1107 = vshrl.u32 %v1106, 7
      %v1108 = vsub.s32 0, %v1107
      %v1109 = vrot.slane %v1104, %v1108
      %1111 = vmatprep.subr.mxu0 0.0
      %1112 = vmatpush1.msra.mxu0 0.0
      %1113 = vmatprep.subr.mxu0 0.0
      %1114 = vmatpush1.msra.mxu0 0.0
      %1115 = vmatprep.subr.mxu0 0.0
      %1116 = vmatpush1.msra.mxu0 0.0
      %1117 = vmatprep.subr.mxu0 0.0
      %1118 = vmatpush1.msra.mxu0 0.0
      %1119 = vmatprep.subr.mxu0 0.0
      %1120 = vmatpush1.msra.mxu0 0.0
      %1121 = vmatprep.subr.mxu0 0.0
      %1122 = vmatpush1.msra.mxu0 0.0
      %1123 = vmatprep.subr.mxu0 0.0
      %1124 = vmatpush1.msra.mxu0 0.0
      %1125 = vmatprep.subr.mxu0 0.0
      %1126 = vmatpush1.msra.mxu0 0.0
      %1127 = vmatprep.subr.mxu0 0.0
      %1128 = vmatpush1.msra.mxu0 0.0
      %1129 = vmatprep.subr.mxu0 0.0
      %1130 = vmatpush1.msra.mxu0 0.0
      %1131 = vmatprep.subr.mxu0 0.0
      %1132 = vmatpush1.msra.mxu0 0.0
      %1133 = vmatprep.subr.mxu0 0.0
      %1134 = vmatpush1.msra.mxu0 0.0
      %1135 = vmatprep.subr.mxu0 0.0
      %1136 = vmatpush1.msra.mxu0 %v1102
      %1137 = vmatprep.subr.mxu0 0.0
      %1138 = vmatpush1.msra.mxu0 %v1101
      %1139 = vmatprep.subr.mxu0 0.0
      %1140 = vmatpush1.msra.mxu0 %v1100
      %1141 = vmatprep.subr.mxu0 0.0
      %1142 = vmatpush1.msra.mxu0 %v1099
      %1143 = vmatprep.subr.mxu0 0.0
      %1144 = vmatpush2.msra.mxu0 0.0
      %1145 = vmatprep.subr.mxu0 0.0
      %1146 = vmatpush2.msra.mxu0 0.0
      %1147 = vmatprep.subr.mxu0 0.0
      %1148 = vmatpush2.msra.mxu0 0.0
      %1149 = vmatprep.subr.mxu0 0.0
      %1150 = vmatpush2.msra.mxu0 0.0
      %1151 = vmatprep.subr.mxu0 0.0
      %1152 = vmatpush2.msra.mxu0 0.0
      %1153 = vmatprep.subr.mxu0 0.0
      %1154 = vmatpush2.msra.mxu0 0.0
      %1155 = vmatprep.subr.mxu0 0.0
      %1156 = vmatpush2.msra.mxu0 0.0
      %1157 = vmatprep.subr.mxu0 0.0
      %1158 = vmatpush2.msra.mxu0 0.0
      %1159 = vmatprep.subr.mxu0 0.0
      %1160 = vmatpush2.msra.mxu0 0.0
      %1161 = vmatprep.subr.mxu0 0.0
      %1162 = vmatpush2.msra.mxu0 0.0
      %1163 = vmatprep.subr.mxu0 0.0
      %1164 = vmatpush2.msra.mxu0 0.0
      %1165 = vmatprep.subr.mxu0 0.0
      %1166 = vmatpush2.msra.mxu0 0.0
      %1167 = vmatprep.subr.mxu0 0.0
      %1168 = vmatpush2.msra.mxu0 0.0
      %1169 = vmatprep.subr.mxu0 0.0
      %1170 = vmatpush2.msra.mxu0 0.0
      %1171 = vmatprep.subr.mxu0 0.0
      %1172 = vmatpush2.msra.mxu0 0.0
      %1173 = vmatprep.subr.mxu0 0.0
      %1174 = vmatpush2.msra.mxu0 0.0
      %1175 = vmatprep.mubr.f32.mxu0 0.0
      %1176 = vmatmul.mubr.f32.gmra.mxu0 %v1016
      %v1177 = vpop.f32.mrf.mxu0
      %v1178 = vadd.f32 %v1109, %v1177
      %v1179 = vpop.f32.mrf.mxu0
      %1180 = vmatprep.mubr.f32.mxu0 0.0
      %1181 = vmatmul.mubr.f32.gmra.mxu0 %v1019
      %v1182 = vpop.f32.mrf.mxu0
      %v1183 = vadd.f32 %v1109, %v1182
      %v1184 = vpop.f32.mrf.mxu0
      %1185 = vdwg.mxu0
      %s1186 = scalar_lea.vmem %s755, 64
      %v1187 = vld [vmem:[%s1186] sm:$0xff]
      %v1188 = vld [vmem:[%s1186 + $0x8] sm:$0xff]
      %v1189 = vld [vmem:[%s1186 + $0x10] sm:$0xff]
      %v1190 = vld [vmem:[%s1186 + $0x18] sm:$0xff]
      %s1191 = scalar_lea.vmem %s759, 2
      %v1192 = vld [vmem:[%s1191] sm:$0x1]
      %v1194 = vlaneseq
      %v1195 = vshrl.u32 %v1194, 7
      %v1196 = vsub.s32 0, %v1195
      %v1197 = vrot.slane %v1192, %v1196
      %1199 = vmatprep.subr.mxu0 0.0
      %1200 = vmatpush1.msra.mxu0 0.0
      %1201 = vmatprep.subr.mxu0 0.0
      %1202 = vmatpush1.msra.mxu0 0.0
      %1203 = vmatprep.subr.mxu0 0.0
      %1204 = vmatpush1.msra.mxu0 0.0
      %1205 = vmatprep.subr.mxu0 0.0
      %1206 = vmatpush1.msra.mxu0 0.0
      %1207 = vmatprep.subr.mxu0 0.0
      %1208 = vmatpush1.msra.mxu0 0.0
      %1209 = vmatprep.subr.mxu0 0.0
      %1210 = vmatpush1.msra.mxu0 0.0
      %1211 = vmatprep.subr.mxu0 0.0
      %1212 = vmatpush1.msra.mxu0 0.0
      %1213 = vmatprep.subr.mxu0 0.0
      %1214 = vmatpush1.msra.mxu0 0.0
      %1215 = vmatprep.subr.mxu0 0.0
      %1216 = vmatpush1.msra.mxu0 0.0
      %1217 = vmatprep.subr.mxu0 0.0
      %1218 = vmatpush1.msra.mxu0 0.0
      %1219 = vmatprep.subr.mxu0 0.0
      %1220 = vmatpush1.msra.mxu0 0.0
      %1221 = vmatprep.subr.mxu0 0.0
      %1222 = vmatpush1.msra.mxu0 0.0
      %1223 = vmatprep.subr.mxu0 0.0
      %1224 = vmatpush1.msra.mxu0 %v1190
      %1225 = vmatprep.subr.mxu0 0.0
      %1226 = vmatpush1.msra.mxu0 %v1189
      %1227 = vmatprep.subr.mxu0 0.0
      %1228 = vmatpush1.msra.mxu0 %v1188
      %1229 = vmatprep.subr.mxu0 0.0
      %1230 = vmatpush1.msra.mxu0 %v1187
      %1231 = vmatprep.subr.mxu0 0.0
      %1232 = vmatpush2.msra.mxu0 0.0
      %1233 = vmatprep.subr.mxu0 0.0
      %1234 = vmatpush2.msra.mxu0 0.0
      %1235 = vmatprep.subr.mxu0 0.0
      %1236 = vmatpush2.msra.mxu0 0.0
      %1237 = vmatprep.subr.mxu0 0.0
      %1238 = vmatpush2.msra.mxu0 0.0
      %1239 = vmatprep.subr.mxu0 0.0
      %1240 = vmatpush2.msra.mxu0 0.0
      %1241 = vmatprep.subr.mxu0 0.0
      %1242 = vmatpush2.msra.mxu0 0.0
      %1243 = vmatprep.subr.mxu0 0.0
      %1244 = vmatpush2.msra.mxu0 0.0
      %1245 = vmatprep.subr.mxu0 0.0
      %1246 = vmatpush2.msra.mxu0 0.0
      %1247 = vmatprep.subr.mxu0 0.0
      %1248 = vmatpush2.msra.mxu0 0.0
      %1249 = vmatprep.subr.mxu0 0.0
      %1250 = vmatpush2.msra.mxu0 0.0
      %1251 = vmatprep.subr.mxu0 0.0
      %1252 = vmatpush2.msra.mxu0 0.0
      %1253 = vmatprep.subr.mxu0 0.0
      %1254 = vmatpush2.msra.mxu0 0.0
      %1255 = vmatprep.subr.mxu0 0.0
      %1256 = vmatpush2.msra.mxu0 0.0
      %1257 = vmatprep.subr.mxu0 0.0
      %1258 = vmatpush2.msra.mxu0 0.0
      %1259 = vmatprep.subr.mxu0 0.0
      %1260 = vmatpush2.msra.mxu0 0.0
      %1261 = vmatprep.subr.mxu0 0.0
      %1262 = vmatpush2.msra.mxu0 0.0
      %1263 = vmatprep.mubr.f32.mxu0 0.0
      %1264 = vmatmul.mubr.f32.gmra.mxu0 %v1016
      %v1265 = vpop.f32.mrf.mxu0
      %v1266 = vadd.f32 %v1197, %v1265
      %v1267 = vpop.f32.mrf.mxu0
      %1268 = vmatprep.mubr.f32.mxu0 0.0
      %1269 = vmatmul.mubr.f32.gmra.mxu0 %v1019
      %v1270 = vpop.f32.mrf.mxu0
      %v1271 = vadd.f32 %v1197, %v1270
      %v1272 = vpop.f32.mrf.mxu0
      %1273 = vdwg.mxu0
      %v1274 = vlaneseq
      %v1275 = vand.u32 %v1274, 127
      %vm1276 = vcmp.lt.s32.totalorder %v1275, 5
      %v1277 = vsel %vm1276, 0.0, -1e+30
      %v1278 = vld [vmem:[%s764] sm:$0xff]
      %v1279 = vld [vmem:[%s764 + $0x8] sm:$0xff]
      %v1280 = vld [vmem:[%s764 + $0x10] sm:$0xff]
      %v1281 = vld [vmem:[%s764 + $0x18] sm:$0xff]
      %vm1282 = vcmask 64512
      %v1284 = vsel %vm1282, %v1096, 0
      %v1287 = vsel %vm1282, %v1178, 0
      %1289 = vmatprep.subr.mxu0 0.0
      %1290 = vmatpush1.xpose.msra.mxu0 0.0
      %1291 = vmatprep.subr.mxu0 0.0
      %1292 = vmatpush1.xpose.msra.mxu0 0.0
      %1293 = vmatprep.subr.mxu0 0.0
      %1294 = vmatpush1.xpose.msra.mxu0 0.0
      %1295 = vmatprep.subr.mxu0 0.0
      %1296 = vmatpush1.xpose.msra.mxu0 0.0
      %1297 = vmatprep.subr.mxu0 0.0
      %1298 = vmatpush1.xpose.msra.mxu0 0.0
      %1299 = vmatprep.subr.mxu0 0.0
      %1300 = vmatpush1.xpose.msra.mxu0 0.0
      %1301 = vmatprep.subr.mxu0 0.0
      %1302 = vmatpush1.xpose.msra.mxu0 0.0
      %1303 = vmatprep.subr.mxu0 0.0
      %1304 = vmatpush1.xpose.msra.mxu0 0.0
      %1305 = vmatprep.subr.mxu0 0.0
      %1306 = vmatpush1.xpose.msra.mxu0 0.0
      %1307 = vmatprep.subr.mxu0 0.0
      %1308 = vmatpush1.xpose.msra.mxu0 0.0
      %1309 = vmatprep.subr.mxu0 0.0
      %1310 = vmatpush1.xpose.msra.mxu0 0.0
      %1311 = vmatprep.subr.mxu0 0.0
      %1312 = vmatpush1.xpose.msra.mxu0 0.0
      %1313 = vmatprep.subr.mxu0 0.0
      %1314 = vmatpush1.xpose.msra.mxu0 0.0
      %1315 = vmatprep.subr.mxu0 0.0
      %1316 = vmatpush1.xpose.msra.mxu0 0.0
      %1317 = vmatprep.subr.mxu0 0.0
      %1318 = vmatpush1.xpose.msra.mxu0 0.0
      %1319 = vmatprep.subr.mxu0 0.0
      %1320 = vmatpush1.xpose.msra.mxu0 %v1287
      %1321 = vmatprep.subr.mxu0 0.0
      %1322 = vmatpush2.xpose.msra.mxu0 0.0
      %1323 = vmatprep.subr.mxu0 0.0
      %1324 = vmatpush2.xpose.msra.mxu0 0.0
      %1325 = vmatprep.subr.mxu0 0.0
      %1326 = vmatpush2.xpose.msra.mxu0 0.0
      %1327 = vmatprep.subr.mxu0 0.0
      %1328 = vmatpush2.xpose.msra.mxu0 0.0
      %1329 = vmatprep.subr.mxu0 0.0
      %1330 = vmatpush2.xpose.msra.mxu0 0.0
      %1331 = vmatprep.subr.mxu0 0.0
      %1332 = vmatpush2.xpose.msra.mxu0 0.0
      %1333 = vmatprep.subr.mxu0 0.0
      %1334 = vmatpush2.xpose.msra.mxu0 0.0
      %1335 = vmatprep.subr.mxu0 0.0
      %1336 = vmatpush2.xpose.msra.mxu0 0.0
      %1337 = vmatprep.subr.mxu0 0.0
      %1338 = vmatpush2.xpose.msra.mxu0 0.0
      %1339 = vmatprep.subr.mxu0 0.0
      %1340 = vmatpush2.xpose.msra.mxu0 0.0
      %1341 = vmatprep.subr.mxu0 0.0
      %1342 = vmatpush2.xpose.msra.mxu0 0.0
      %1343 = vmatprep.subr.mxu0 0.0
      %1344 = vmatpush2.xpose.msra.mxu0 0.0
      %1345 = vmatprep.subr.mxu0 0.0
      %1346 = vmatpush2.xpose.msra.mxu0 0.0
      %1347 = vmatprep.subr.mxu0 0.0
      %1348 = vmatpush2.xpose.msra.mxu0 0.0
      %1349 = vmatprep.subr.mxu0 0.0
      %1350 = vmatpush2.xpose.msra.mxu0 0.0
      %1351 = vmatprep.subr.mxu0 0.0
      %1352 = vmatpush2.xpose.msra.mxu0 0.0
      %1353 = vmatprep.mubr.f32.mxu0 0.0
      %1354 = vmatmul.mubr.f32.gmra.mxu0 %v1284
      %v1355 = vpop.f32.mrf.mxu0
      %v1356 = vadd.f32 %v1277, %v1355
      %v1357 = vpop.f32.mrf.mxu0
      %1358 = vdwg.mxu0
      %v1360 = vsel %vm1282, %v1097, 0
      %v1363 = vsel %vm1282, %v1183, 0
      %1365 = vmatprep.subr.mxu0 0.0
      %1366 = vmatpush1.xpose.msra.mxu0 0.0
      %1367 = vmatprep.subr.mxu0 0.0
      %1368 = vmatpush1.xpose.msra.mxu0 0.0
      %1369 = vmatprep.subr.mxu0 0.0
      %1370 = vmatpush1.xpose.msra.mxu0 0.0
      %1371 = vmatprep.subr.mxu0 0.0
      %1372 = vmatpush1.xpose.msra.mxu0 0.0
      %1373 = vmatprep.subr.mxu0 0.0
      %1374 = vmatpush1.xpose.msra.mxu0 0.0
      %1375 = vmatprep.subr.mxu0 0.0
      %1376 = vmatpush1.xpose.msra.mxu0 0.0
      %1377 = vmatprep.subr.mxu0 0.0
      %1378 = vmatpush1.xpose.msra.mxu0 0.0
      %1379 = vmatprep.subr.mxu0 0.0
      %1380 = vmatpush1.xpose.msra.mxu0 0.0
      %1381 = vmatprep.subr.mxu0 0.0
      %1382 = vmatpush1.xpose.msra.mxu0 0.0
      %1383 = vmatprep.subr.mxu0 0.0
      %1384 = vmatpush1.xpose.msra.mxu0 0.0
      %1385 = vmatprep.subr.mxu0 0.0
      %1386 = vmatpush1.xpose.msra.mxu0 0.0
      %1387 = vmatprep.subr.mxu0 0.0
      %1388 = vmatpush1.xpose.msra.mxu0 0.0
      %1389 = vmatprep.subr.mxu0 0.0
      %1390 = vmatpush1.xpose.msra.mxu0 0.0
      %1391 = vmatprep.subr.mxu0 0.0
      %1392 = vmatpush1.xpose.msra.mxu0 0.0
      %1393 = vmatprep.subr.mxu0 0.0
      %1394 = vmatpush1.xpose.msra.mxu0 0.0
      %1395 = vmatprep.subr.mxu0 0.0
      %1396 = vmatpush1.xpose.msra.mxu0 %v1363
      %1397 = vmatprep.subr.mxu0 0.0
      %1398 = vmatpush2.xpose.msra.mxu0 0.0
      %1399 = vmatprep.subr.mxu0 0.0
      %1400 = vmatpush2.xpose.msra.mxu0 0.0
      %1401 = vmatprep.subr.mxu0 0.0
      %1402 = vmatpush2.xpose.msra.mxu0 0.0
      %1403 = vmatprep.subr.mxu0 0.0
      %1404 = vmatpush2.xpose.msra.mxu0 0.0
      %1405 = vmatprep.subr.mxu0 0.0
      %1406 = vmatpush2.xpose.msra.mxu0 0.0
      %1407 = vmatprep.subr.mxu0 0.0
      %1408 = vmatpush2.xpose.msra.mxu0 0.0
      %1409 = vmatprep.subr.mxu0 0.0
      %1410 = vmatpush2.xpose.msra.mxu0 0.0
      %1411 = vmatprep.subr.mxu0 0.0
      %1412 = vmatpush2.xpose.msra.mxu0 0.0
      %1413 = vmatprep.subr.mxu0 0.0
      %1414 = vmatpush2.xpose.msra.mxu0 0.0
      %1415 = vmatprep.subr.mxu0 0.0
      %1416 = vmatpush2.xpose.msra.mxu0 0.0
      %1417 = vmatprep.subr.mxu0 0.0
      %1418 = vmatpush2.xpose.msra.mxu0 0.0
      %1419 = vmatprep.subr.mxu0 0.0
      %1420 = vmatpush2.xpose.msra.mxu0 0.0
      %1421 = vmatprep.subr.mxu0 0.0
      %1422 = vmatpush2.xpose.msra.mxu0 0.0
      %1423 = vmatprep.subr.mxu0 0.0
      %1424 = vmatpush2.xpose.msra.mxu0 0.0
      %1425 = vmatprep.subr.mxu0 0.0
      %1426 = vmatpush2.xpose.msra.mxu0 0.0
      %1427 = vmatprep.subr.mxu0 0.0
      %1428 = vmatpush2.xpose.msra.mxu0 0.0
      %1429 = vmatprep.mubr.f32.mxu0 0.0
      %1430 = vmatmul.mubr.f32.gmra.mxu0 %v1360
      %v1431 = vpop.f32.mrf.mxu0
      %v1432 = vadd.f32 %v1277, %v1431
      %v1433 = vpop.f32.mrf.mxu0
      %1434 = vdwg.mxu0
      %v1435 = vsel %vm1282, %v1356, -inf
      %1436 = vmax.xlane.f32.xlu0 %v1435
      %v1437 = vpop.xlane.xlu0 %1436
      %v1438 = vsel %vm1282, %v1432, -inf
      %1439 = vmax.xlane.f32.xlu0 %v1438
      %v1440 = vpop.xlane.xlu0 %1439
      %v1441 = vsub.f32 %v1356, %v1437
      %v1442 = vsub.f32 %v1432, %v1440
      %v1443 = vmul.f32 %v1441, 1.442695
      %v1444 = vpow.pop %v1443
      %v1445 = vmul.f32 %v1442, 1.442695
      %v1446 = vpow.pop %v1445
      %v1447 = vsel %vm1282, %v1444, 0.0
      %1448 = vadd.xlane.f32.xlu0 %v1447
      %v1449 = vpop.xlane.xlu0 %1448
      %v1450 = vsel %vm1282, %v1446, 0.0
      %1451 = vadd.xlane.f32.xlu0 %v1450
      %v1452 = vpop.xlane.xlu0 %1451
      %v1453 = vrcp.pop %v1449
      %v1454 = vrcp.pop %v1452
      %v1455 = vmul.f32 %v1444, %v1453
      %v1456 = vmul.f32 %v1446, %v1454
      %v1458 = vsel %vm1282, %v1455, 0
      %1460 = vmatprep.subr.mxu0 0.0
      %1461 = vmatpush1.msra.mxu0 0.0
      %1462 = vmatprep.subr.mxu0 0.0
      %1463 = vmatpush1.msra.mxu0 0.0
      %1464 = vmatprep.subr.mxu0 0.0
      %1465 = vmatpush1.msra.mxu0 0.0
      %1466 = vmatprep.subr.mxu0 0.0
      %1467 = vmatpush1.msra.mxu0 0.0
      %1468 = vmatprep.subr.mxu0 0.0
      %1469 = vmatpush1.msra.mxu0 0.0
      %1470 = vmatprep.subr.mxu0 0.0
      %1471 = vmatpush1.msra.mxu0 0.0
      %1472 = vmatprep.subr.mxu0 0.0
      %1473 = vmatpush1.msra.mxu0 0.0
      %1474 = vmatprep.subr.mxu0 0.0
      %1475 = vmatpush1.msra.mxu0 0.0
      %1476 = vmatprep.subr.mxu0 0.0
      %1477 = vmatpush1.msra.mxu0 0.0
      %1478 = vmatprep.subr.mxu0 0.0
      %1479 = vmatpush1.msra.mxu0 0.0
      %1480 = vmatprep.subr.mxu0 0.0
      %1481 = vmatpush1.msra.mxu0 0.0
      %1482 = vmatprep.subr.mxu0 0.0
      %1483 = vmatpush1.msra.mxu0 0.0
      %1484 = vmatprep.subr.mxu0 0.0
      %1485 = vmatpush1.msra.mxu0 0.0
      %1486 = vmatprep.subr.mxu0 0.0
      %1487 = vmatpush1.msra.mxu0 0.0
      %1488 = vmatprep.subr.mxu0 0.0
      %1489 = vmatpush1.msra.mxu0 0.0
      %1490 = vmatprep.subr.mxu0 0.0
      %1491 = vmatpush1.msra.mxu0 %v1266
      %1492 = vmatprep.subr.mxu0 0.0
      %1493 = vmatpush2.msra.mxu0 0.0
      %1494 = vmatprep.subr.mxu0 0.0
      %1495 = vmatpush2.msra.mxu0 0.0
      %1496 = vmatprep.subr.mxu0 0.0
      %1497 = vmatpush2.msra.mxu0 0.0
      %1498 = vmatprep.subr.mxu0 0.0
      %1499 = vmatpush2.msra.mxu0 0.0
      %1500 = vmatprep.subr.mxu0 0.0
      %1501 = vmatpush2.msra.mxu0 0.0
      %1502 = vmatprep.subr.mxu0 0.0
      %1503 = vmatpush2.msra.mxu0 0.0
      %1504 = vmatprep.subr.mxu0 0.0
      %1505 = vmatpush2.msra.mxu0 0.0
      %1506 = vmatprep.subr.mxu0 0.0
      %1507 = vmatpush2.msra.mxu0 0.0
      %1508 = vmatprep.subr.mxu0 0.0
      %1509 = vmatpush2.msra.mxu0 0.0
      %1510 = vmatprep.subr.mxu0 0.0
      %1511 = vmatpush2.msra.mxu0 0.0
      %1512 = vmatprep.subr.mxu0 0.0
      %1513 = vmatpush2.msra.mxu0 0.0
      %1514 = vmatprep.subr.mxu0 0.0
      %1515 = vmatpush2.msra.mxu0 0.0
      %1516 = vmatprep.subr.mxu0 0.0
      %1517 = vmatpush2.msra.mxu0 0.0
      %1518 = vmatprep.subr.mxu0 0.0
      %1519 = vmatpush2.msra.mxu0 0.0
      %1520 = vmatprep.subr.mxu0 0.0
      %1521 = vmatpush2.msra.mxu0 0.0
      %1522 = vmatprep.subr.mxu0 0.0
      %1523 = vmatpush2.msra.mxu0 0.0
      %1524 = vmatprep.mubr.f32.mxu0 0.0
      %1525 = vmatmul.mubr.f32.gmra.mxu0 %v1458
      %v1526 = vpop.f32.mrf.mxu0
      %v1527 = vadd.f32 0.0, %v1526
      %v1528 = vpop.f32.mrf.mxu0
      %1529 = vdwg.mxu0
      %v1531 = vsel %vm1282, %v1456, 0
      %1533 = vmatprep.subr.mxu0 0.0
      %1534 = vmatpush1.msra.mxu0 0.0
      %1535 = vmatprep.subr.mxu0 0.0
      %1536 = vmatpush1.msra.mxu0 0.0
      %1537 = vmatprep.subr.mxu0 0.0
      %1538 = vmatpush1.msra.mxu0 0.0
      %1539 = vmatprep.subr.mxu0 0.0
      %1540 = vmatpush1.msra.mxu0 0.0
      %1541 = vmatprep.subr.mxu0 0.0
      %1542 = vmatpush1.msra.mxu0 0.0
      %1543 = vmatprep.subr.mxu0 0.0
      %1544 = vmatpush1.msra.mxu0 0.0
      %1545 = vmatprep.subr.mxu0 0.0
      %1546 = vmatpush1.msra.mxu0 0.0
      %1547 = vmatprep.subr.mxu0 0.0
      %1548 = vmatpush1.msra.mxu0 0.0
      %1549 = vmatprep.subr.mxu0 0.0
      %1550 = vmatpush1.msra.mxu0 0.0
      %1551 = vmatprep.subr.mxu0 0.0
      %1552 = vmatpush1.msra.mxu0 0.0
      %1553 = vmatprep.subr.mxu0 0.0
      %1554 = vmatpush1.msra.mxu0 0.0
      %1555 = vmatprep.subr.mxu0 0.0
      %1556 = vmatpush1.msra.mxu0 0.0
      %1557 = vmatprep.subr.mxu0 0.0
      %1558 = vmatpush1.msra.mxu0 0.0
      %1559 = vmatprep.subr.mxu0 0.0
      %1560 = vmatpush1.msra.mxu0 0.0
      %1561 = vmatprep.subr.mxu0 0.0
      %1562 = vmatpush1.msra.mxu0 0.0
      %1563 = vmatprep.subr.mxu0 0.0
      %1564 = vmatpush1.msra.mxu0 %v1271
      %1565 = vmatprep.subr.mxu0 0.0
      %1566 = vmatpush2.msra.mxu0 0.0
      %1567 = vmatprep.subr.mxu0 0.0
      %1568 = vmatpush2.msra.mxu0 0.0
      %1569 = vmatprep.subr.mxu0 0.0
      %1570 = vmatpush2.msra.mxu0 0.0
      %1571 = vmatprep.subr.mxu0 0.0
      %1572 = vmatpush2.msra.mxu0 0.0
      %1573 = vmatprep.subr.mxu0 0.0
      %1574 = vmatpush2.msra.mxu0 0.0
      %1575 = vmatprep.subr.mxu0 0.0
      %1576 = vmatpush2.msra.mxu0 0.0
      %1577 = vmatprep.subr.mxu0 0.0
      %1578 = vmatpush2.msra.mxu0 0.0
      %1579 = vmatprep.subr.mxu0 0.0
      %1580 = vmatpush2.msra.mxu0 0.0
      %1581 = vmatprep.subr.mxu0 0.0
      %1582 = vmatpush2.msra.mxu0 0.0
      %1583 = vmatprep.subr.mxu0 0.0
      %1584 = vmatpush2.msra.mxu0 0.0
      %1585 = vmatprep.subr.mxu0 0.0
      %1586 = vmatpush2.msra.mxu0 0.0
      %1587 = vmatprep.subr.mxu0 0.0
      %1588 = vmatpush2.msra.mxu0 0.0
      %1589 = vmatprep.subr.mxu0 0.0
      %1590 = vmatpush2.msra.mxu0 0.0
      %1591 = vmatprep.subr.mxu0 0.0
      %1592 = vmatpush2.msra.mxu0 0.0
      %1593 = vmatprep.subr.mxu0 0.0
      %1594 = vmatpush2.msra.mxu0 0.0
      %1595 = vmatprep.subr.mxu0 0.0
      %1596 = vmatpush2.msra.mxu0 0.0
      %1597 = vmatprep.mubr.f32.mxu0 0.0
      %1598 = vmatmul.mubr.f32.gmra.mxu0 %v1531
      %v1599 = vpop.f32.mrf.mxu0
      %v1600 = vadd.f32 0.0, %v1599
      %v1601 = vpop.f32.mrf.mxu0
      %1602 = vdwg.mxu0
      %1603 = vrot.lane.b32.xlu0 %v1096, 120
      %v1604 = vpop.permute.xlu0 %1603
      %1605 = vrot.lane.b32.xlu0 %v1178, 120
      %v1606 = vpop.permute.xlu0 %1605
      %v1607 = vsel %vm1282, %v1604, 0
      %v1609 = vsel %vm1282, %v1606, 0
      %1611 = vmatprep.subr.mxu0 0.0
      %1612 = vmatpush1.xpose.msra.mxu0 0.0
      %1613 = vmatprep.subr.mxu0 0.0
      %1614 = vmatpush1.xpose.msra.mxu0 0.0
      %1615 = vmatprep.subr.mxu0 0.0
      %1616 = vmatpush1.xpose.msra.mxu0 0.0
      %1617 = vmatprep.subr.mxu0 0.0
      %1618 = vmatpush1.xpose.msra.mxu0 0.0
      %1619 = vmatprep.subr.mxu0 0.0
      %1620 = vmatpush1.xpose.msra.mxu0 0.0
      %1621 = vmatprep.subr.mxu0 0.0
      %1622 = vmatpush1.xpose.msra.mxu0 0.0
      %1623 = vmatprep.subr.mxu0 0.0
      %1624 = vmatpush1.xpose.msra.mxu0 0.0
      %1625 = vmatprep.subr.mxu0 0.0
      %1626 = vmatpush1.xpose.msra.mxu0 0.0
      %1627 = vmatprep.subr.mxu0 0.0
      %1628 = vmatpush1.xpose.msra.mxu0 0.0
      %1629 = vmatprep.subr.mxu0 0.0
      %1630 = vmatpush1.xpose.msra.mxu0 0.0
      %1631 = vmatprep.subr.mxu0 0.0
      %1632 = vmatpush1.xpose.msra.mxu0 0.0
      %1633 = vmatprep.subr.mxu0 0.0
      %1634 = vmatpush1.xpose.msra.mxu0 0.0
      %1635 = vmatprep.subr.mxu0 0.0
      %1636 = vmatpush1.xpose.msra.mxu0 0.0
      %1637 = vmatprep.subr.mxu0 0.0
      %1638 = vmatpush1.xpose.msra.mxu0 0.0
      %1639 = vmatprep.subr.mxu0 0.0
      %1640 = vmatpush1.xpose.msra.mxu0 0.0
      %1641 = vmatprep.subr.mxu0 0.0
      %1642 = vmatpush1.xpose.msra.mxu0 %v1609
      %1643 = vmatprep.subr.mxu0 0.0
      %1644 = vmatpush2.xpose.msra.mxu0 0.0
      %1645 = vmatprep.subr.mxu0 0.0
      %1646 = vmatpush2.xpose.msra.mxu0 0.0
      %1647 = vmatprep.subr.mxu0 0.0
      %1648 = vmatpush2.xpose.msra.mxu0 0.0
      %1649 = vmatprep.subr.mxu0 0.0
      %1650 = vmatpush2.xpose.msra.mxu0 0.0
      %1651 = vmatprep.subr.mxu0 0.0
      %1652 = vmatpush2.xpose.msra.mxu0 0.0
      %1653 = vmatprep.subr.mxu0 0.0
      %1654 = vmatpush2.xpose.msra.mxu0 0.0
      %1655 = vmatprep.subr.mxu0 0.0
      %1656 = vmatpush2.xpose.msra.mxu0 0.0
      %1657 = vmatprep.subr.mxu0 0.0
      %1658 = vmatpush2.xpose.msra.mxu0 0.0
      %1659 = vmatprep.subr.mxu0 0.0
      %1660 = vmatpush2.xpose.msra.mxu0 0.0
      %1661 = vmatprep.subr.mxu0 0.0
      %1662 = vmatpush2.xpose.msra.mxu0 0.0
      %1663 = vmatprep.subr.mxu0 0.0
      %1664 = vmatpush2.xpose.msra.mxu0 0.0
      %1665 = vmatprep.subr.mxu0 0.0
      %1666 = vmatpush2.xpose.msra.mxu0 0.0
      %1667 = vmatprep.subr.mxu0 0.0
      %1668 = vmatpush2.xpose.msra.mxu0 0.0
      %1669 = vmatprep.subr.mxu0 0.0
      %1670 = vmatpush2.xpose.msra.mxu0 0.0
      %1671 = vmatprep.subr.mxu0 0.0
      %1672 = vmatpush2.xpose.msra.mxu0 0.0
      %1673 = vmatprep.subr.mxu0 0.0
      %1674 = vmatpush2.xpose.msra.mxu0 0.0
      %1675 = vmatprep.mubr.f32.mxu0 0.0
      %1676 = vmatmul.mubr.f32.gmra.mxu0 %v1607
      %v1677 = vpop.f32.mrf.mxu0
      %v1678 = vadd.f32 %v1277, %v1677
      %v1679 = vpop.f32.mrf.mxu0
      %1680 = vdwg.mxu0
      %1681 = vrot.lane.b32.xlu0 %v1097, 120
      %v1682 = vpop.permute.xlu0 %1681
      %1683 = vrot.lane.b32.xlu0 %v1183, 120
      %v1684 = vpop.permute.xlu0 %1683
      %v1685 = vsel %vm1282, %v1682, 0
      %v1687 = vsel %vm1282, %v1684, 0
      %1689 = vmatprep.subr.mxu0 0.0
      %1690 = vmatpush1.xpose.msra.mxu0 0.0
      %1691 = vmatprep.subr.mxu0 0.0
      %1692 = vmatpush1.xpose.msra.mxu0 0.0
      %1693 = vmatprep.subr.mxu0 0.0
      %1694 = vmatpush1.xpose.msra.mxu0 0.0
      %1695 = vmatprep.subr.mxu0 0.0
      %1696 = vmatpush1.xpose.msra.mxu0 0.0
      %1697 = vmatprep.subr.mxu0 0.0
      %1698 = vmatpush1.xpose.msra.mxu0 0.0
      %1699 = vmatprep.subr.mxu0 0.0
      %1700 = vmatpush1.xpose.msra.mxu0 0.0
      %1701 = vmatprep.subr.mxu0 0.0
      %1702 = vmatpush1.xpose.msra.mxu0 0.0
      %1703 = vmatprep.subr.mxu0 0.0
      %1704 = vmatpush1.xpose.msra.mxu0 0.0
      %1705 = vmatprep.subr.mxu0 0.0
      %1706 = vmatpush1.xpose.msra.mxu0 0.0
      %1707 = vmatprep.subr.mxu0 0.0
      %1708 = vmatpush1.xpose.msra.mxu0 0.0
      %1709 = vmatprep.subr.mxu0 0.0
      %1710 = vmatpush1.xpose.msra.mxu0 0.0
      %1711 = vmatprep.subr.mxu0 0.0
      %1712 = vmatpush1.xpose.msra.mxu0 0.0
      %1713 = vmatprep.subr.mxu0 0.0
      %1714 = vmatpush1.xpose.msra.mxu0 0.0
      %1715 = vmatprep.subr.mxu0 0.0
      %1716 = vmatpush1.xpose.msra.mxu0 0.0
      %1717 = vmatprep.subr.mxu0 0.0
      %1718 = vmatpush1.xpose.msra.mxu0 0.0
      %1719 = vmatprep.subr.mxu0 0.0
      %1720 = vmatpush1.xpose.msra.mxu0 %v1687
      %1721 = vmatprep.subr.mxu0 0.0
      %1722 = vmatpush2.xpose.msra.mxu0 0.0
      %1723 = vmatprep.subr.mxu0 0.0
      %1724 = vmatpush2.xpose.msra.mxu0 0.0
      %1725 = vmatprep.subr.mxu0 0.0
      %1726 = vmatpush2.xpose.msra.mxu0 0.0
      %1727 = vmatprep.subr.mxu0 0.0
      %1728 = vmatpush2.xpose.msra.mxu0 0.0
      %1729 = vmatprep.subr.mxu0 0.0
      %1730 = vmatpush2.xpose.msra.mxu0 0.0
      %1731 = vmatprep.subr.mxu0 0.0
      %1732 = vmatpush2.xpose.msra.mxu0 0.0
      %1733 = vmatprep.subr.mxu0 0.0
      %1734 = vmatpush2.xpose.msra.mxu0 0.0
      %1735 = vmatprep.subr.mxu0 0.0
      %1736 = vmatpush2.xpose.msra.mxu0 0.0
      %1737 = vmatprep.subr.mxu0 0.0
      %1738 = vmatpush2.xpose.msra.mxu0 0.0
      %1739 = vmatprep.subr.mxu0 0.0
      %1740 = vmatpush2.xpose.msra.mxu0 0.0
      %1741 = vmatprep.subr.mxu0 0.0
      %1742 = vmatpush2.xpose.msra.mxu0 0.0
      %1743 = vmatprep.subr.mxu0 0.0
      %1744 = vmatpush2.xpose.msra.mxu0 0.0
      %1745 = vmatprep.subr.mxu0 0.0
      %1746 = vmatpush2.xpose.msra.mxu0 0.0
      %1747 = vmatprep.subr.mxu0 0.0
      %1748 = vmatpush2.xpose.msra.mxu0 0.0
      %1749 = vmatprep.subr.mxu0 0.0
      %1750 = vmatpush2.xpose.msra.mxu0 0.0
      %1751 = vmatprep.subr.mxu0 0.0
      %1752 = vmatpush2.xpose.msra.mxu0 0.0
      %1753 = vmatprep.mubr.f32.mxu0 0.0
      %1754 = vmatmul.mubr.f32.gmra.mxu0 %v1685
      %v1755 = vpop.f32.mrf.mxu0
      %v1756 = vadd.f32 %v1277, %v1755
      %v1757 = vpop.f32.mrf.mxu0
      %1758 = vdwg.mxu0
      %v1759 = vsel %vm1282, %v1678, -inf
      %1760 = vmax.xlane.f32.xlu0 %v1759
      %v1761 = vpop.xlane.xlu0 %1760
      %v1762 = vsel %vm1282, %v1756, -inf
      %1763 = vmax.xlane.f32.xlu0 %v1762
      %v1764 = vpop.xlane.xlu0 %1763
      %v1765 = vsub.f32 %v1678, %v1761
      %v1766 = vsub.f32 %v1756, %v1764
      %v1767 = vmul.f32 %v1765, 1.442695
      %v1768 = vpow.pop %v1767
      %v1769 = vmul.f32 %v1766, 1.442695
      %v1770 = vpow.pop %v1769
      %v1771 = vsel %vm1282, %v1768, 0.0
      %1772 = vadd.xlane.f32.xlu0 %v1771
      %v1773 = vpop.xlane.xlu0 %1772
      %v1774 = vsel %vm1282, %v1770, 0.0
      %1775 = vadd.xlane.f32.xlu0 %v1774
      %v1776 = vpop.xlane.xlu0 %1775
      %v1777 = vrcp.pop %v1773
      %v1778 = vrcp.pop %v1776
      %v1779 = vmul.f32 %v1768, %v1777
      %v1780 = vmul.f32 %v1770, %v1778
      %1782 = vrot.lane.b32.xlu0 %v1266, 120
      %v1783 = vpop.permute.xlu0 %1782
      %v1786 = vsel %vm1282, %v1779, 0
      %1788 = vmatprep.subr.mxu0 0.0
      %1789 = vmatpush1.msra.mxu0 0.0
      %1790 = vmatprep.subr.mxu0 0.0
      %1791 = vmatpush1.msra.mxu0 0.0
      %1792 = vmatprep.subr.mxu0 0.0
      %1793 = vmatpush1.msra.mxu0 0.0
      %1794 = vmatprep.subr.mxu0 0.0
      %1795 = vmatpush1.msra.mxu0 0.0
      %1796 = vmatprep.subr.mxu0 0.0
      %1797 = vmatpush1.msra.mxu0 0.0
      %1798 = vmatprep.subr.mxu0 0.0
      %1799 = vmatpush1.msra.mxu0 0.0
      %1800 = vmatprep.subr.mxu0 0.0
      %1801 = vmatpush1.msra.mxu0 0.0
      %1802 = vmatprep.subr.mxu0 0.0
      %1803 = vmatpush1.msra.mxu0 0.0
      %1804 = vmatprep.subr.mxu0 0.0
      %1805 = vmatpush1.msra.mxu0 0.0
      %1806 = vmatprep.subr.mxu0 0.0
      %1807 = vmatpush1.msra.mxu0 0.0
      %1808 = vmatprep.subr.mxu0 0.0
      %1809 = vmatpush1.msra.mxu0 0.0
      %1810 = vmatprep.subr.mxu0 0.0
      %1811 = vmatpush1.msra.mxu0 0.0
      %1812 = vmatprep.subr.mxu0 0.0
      %1813 = vmatpush1.msra.mxu0 0.0
      %1814 = vmatprep.subr.mxu0 0.0
      %1815 = vmatpush1.msra.mxu0 0.0
      %1816 = vmatprep.subr.mxu0 0.0
      %1817 = vmatpush1.msra.mxu0 0.0
      %1818 = vmatprep.subr.mxu0 0.0
      %1819 = vmatpush1.msra.mxu0 %v1783
      %1820 = vmatprep.subr.mxu0 0.0
      %1821 = vmatpush2.msra.mxu0 0.0
      %1822 = vmatprep.subr.mxu0 0.0
      %1823 = vmatpush2.msra.mxu0 0.0
      %1824 = vmatprep.subr.mxu0 0.0
      %1825 = vmatpush2.msra.mxu0 0.0
      %1826 = vmatprep.subr.mxu0 0.0
      %1827 = vmatpush2.msra.mxu0 0.0
      %1828 = vmatprep.subr.mxu0 0.0
      %1829 = vmatpush2.msra.mxu0 0.0
      %1830 = vmatprep.subr.mxu0 0.0
      %1831 = vmatpush2.msra.mxu0 0.0
      %1832 = vmatprep.subr.mxu0 0.0
      %1833 = vmatpush2.msra.mxu0 0.0
      %1834 = vmatprep.subr.mxu0 0.0
      %1835 = vmatpush2.msra.mxu0 0.0
      %1836 = vmatprep.subr.mxu0 0.0
      %1837 = vmatpush2.msra.mxu0 0.0
      %1838 = vmatprep.subr.mxu0 0.0
      %1839 = vmatpush2.msra.mxu0 0.0
      %1840 = vmatprep.subr.mxu0 0.0
      %1841 = vmatpush2.msra.mxu0 0.0
      %1842 = vmatprep.subr.mxu0 0.0
      %1843 = vmatpush2.msra.mxu0 0.0
      %1844 = vmatprep.subr.mxu0 0.0
      %1845 = vmatpush2.msra.mxu0 0.0
      %1846 = vmatprep.subr.mxu0 0.0
      %1847 = vmatpush2.msra.mxu0 0.0
      %1848 = vmatprep.subr.mxu0 0.0
      %1849 = vmatpush2.msra.mxu0 0.0
      %1850 = vmatprep.subr.mxu0 0.0
      %1851 = vmatpush2.msra.mxu0 0.0
      %1852 = vmatprep.mubr.f32.mxu0 0.0
      %1853 = vmatmul.mubr.f32.gmra.mxu0 %v1786
      %v1854 = vpop.f32.mrf.mxu0
      %v1855 = vadd.f32 0.0, %v1854
      %v1856 = vpop.f32.mrf.mxu0
      %1857 = vdwg.mxu0
      %1859 = vrot.lane.b32.xlu0 %v1271, 120
      %v1860 = vpop.permute.xlu0 %1859
      %v1863 = vsel %vm1282, %v1780, 0
      %1865 = vmatprep.subr.mxu0 0.0
      %1866 = vmatpush1.msra.mxu0 0.0
      %1867 = vmatprep.subr.mxu0 0.0
      %1868 = vmatpush1.msra.mxu0 0.0
      %1869 = vmatprep.subr.mxu0 0.0
      %1870 = vmatpush1.msra.mxu0 0.0
      %1871 = vmatprep.subr.mxu0 0.0
      %1872 = vmatpush1.msra.mxu0 0.0
      %1873 = vmatprep.subr.mxu0 0.0
      %1874 = vmatpush1.msra.mxu0 0.0
      %1875 = vmatprep.subr.mxu0 0.0
      %1876 = vmatpush1.msra.mxu0 0.0
      %1877 = vmatprep.subr.mxu0 0.0
      %1878 = vmatpush1.msra.mxu0 0.0
      %1879 = vmatprep.subr.mxu0 0.0
      %1880 = vmatpush1.msra.mxu0 0.0
      %1881 = vmatprep.subr.mxu0 0.0
      %1882 = vmatpush1.msra.mxu0 0.0
      %1883 = vmatprep.subr.mxu0 0.0
      %1884 = vmatpush1.msra.mxu0 0.0
      %1885 = vmatprep.subr.mxu0 0.0
      %1886 = vmatpush1.msra.mxu0 0.0
      %1887 = vmatprep.subr.mxu0 0.0
      %1888 = vmatpush1.msra.mxu0 0.0
      %1889 = vmatprep.subr.mxu0 0.0
      %1890 = vmatpush1.msra.mxu0 0.0
      %1891 = vmatprep.subr.mxu0 0.0
      %1892 = vmatpush1.msra.mxu0 0.0
      %1893 = vmatprep.subr.mxu0 0.0
      %1894 = vmatpush1.msra.mxu0 0.0
      %1895 = vmatprep.subr.mxu0 0.0
      %1896 = vmatpush1.msra.mxu0 %v1860
      %1897 = vmatprep.subr.mxu0 0.0
      %1898 = vmatpush2.msra.mxu0 0.0
      %1899 = vmatprep.subr.mxu0 0.0
      %1900 = vmatpush2.msra.mxu0 0.0
      %1901 = vmatprep.subr.mxu0 0.0
      %1902 = vmatpush2.msra.mxu0 0.0
      %1903 = vmatprep.subr.mxu0 0.0
      %1904 = vmatpush2.msra.mxu0 0.0
      %1905 = vmatprep.subr.mxu0 0.0
      %1906 = vmatpush2.msra.mxu0 0.0
      %1907 = vmatprep.subr.mxu0 0.0
      %1908 = vmatpush2.msra.mxu0 0.0
      %1909 = vmatprep.subr.mxu0 0.0
      %1910 = vmatpush2.msra.mxu0 0.0
      %1911 = vmatprep.subr.mxu0 0.0
      %1912 = vmatpush2.msra.mxu0 0.0
      %1913 = vmatprep.subr.mxu0 0.0
      %1914 = vmatpush2.msra.mxu0 0.0
      %1915 = vmatprep.subr.mxu0 0.0
      %1916 = vmatpush2.msra.mxu0 0.0
      %1917 = vmatprep.subr.mxu0 0.0
      %1918 = vmatpush2.msra.mxu0 0.0
      %1919 = vmatprep.subr.mxu0 0.0
      %1920 = vmatpush2.msra.mxu0 0.0
      %1921 = vmatprep.subr.mxu0 0.0
      %1922 = vmatpush2.msra.mxu0 0.0
      %1923 = vmatprep.subr.mxu0 0.0
      %1924 = vmatpush2.msra.mxu0 0.0
      %1925 = vmatprep.subr.mxu0 0.0
      %1926 = vmatpush2.msra.mxu0 0.0
      %1927 = vmatprep.subr.mxu0 0.0
      %1928 = vmatpush2.msra.mxu0 0.0
      %1929 = vmatprep.mubr.f32.mxu0 0.0
      %1930 = vmatmul.mubr.f32.gmra.mxu0 %v1863
      %v1931 = vpop.f32.mrf.mxu0
      %v1932 = vadd.f32 0.0, %v1931
      %v1933 = vpop.f32.mrf.mxu0
      %1934 = vdwg.mxu0
      %v1936 = vsel %vm1282, %v1855, 0
      %v1939 = vsel %vm1282, %v1932, 0
      %1941 = vmatprep.subr.mxu0 0.0
      %1942 = vmatpush1.msra.mxu0 0.0
      %1943 = vmatprep.subr.mxu0 0.0
      %1944 = vmatpush1.msra.mxu0 0.0
      %1945 = vmatprep.subr.mxu0 0.0
      %1946 = vmatpush1.msra.mxu0 0.0
      %1947 = vmatprep.subr.mxu0 0.0
      %1948 = vmatpush1.msra.mxu0 0.0
      %1949 = vmatprep.subr.mxu0 0.0
      %1950 = vmatpush1.msra.mxu0 0.0
      %1951 = vmatprep.subr.mxu0 0.0
      %1952 = vmatpush1.msra.mxu0 0.0
      %1953 = vmatprep.subr.mxu0 0.0
      %1954 = vmatpush1.msra.mxu0 0.0
      %1955 = vmatprep.subr.mxu0 0.0
      %1956 = vmatpush1.msra.mxu0 0.0
      %1957 = vmatprep.subr.mxu0 0.0
      %1958 = vmatpush1.msra.mxu0 0.0
      %1959 = vmatprep.subr.mxu0 0.0
      %1960 = vmatpush1.msra.mxu0 0.0
      %1961 = vmatprep.subr.mxu0 0.0
      %1962 = vmatpush1.msra.mxu0 0.0
      %1963 = vmatprep.subr.mxu0 0.0
      %1964 = vmatpush1.msra.mxu0 0.0
      %1965 = vmatprep.subr.mxu0 0.0
      %1966 = vmatpush1.msra.mxu0 0.0
      %1967 = vmatprep.subr.mxu0 0.0
      %1968 = vmatpush1.msra.mxu0 0.0
      %1969 = vmatprep.subr.mxu0 0.0
      %1970 = vmatpush1.msra.mxu0 0.0
      %1971 = vmatprep.subr.mxu0 0.0
      %1972 = vmatpush1.msra.mxu0 %v1279
      %1973 = vmatprep.subr.mxu0 0.0
      %1974 = vmatpush2.msra.mxu0 0.0
      %1975 = vmatprep.subr.mxu0 0.0
      %1976 = vmatpush2.msra.mxu0 0.0
      %1977 = vmatprep.subr.mxu0 0.0
      %1978 = vmatpush2.msra.mxu0 0.0
      %1979 = vmatprep.subr.mxu0 0.0
      %1980 = vmatpush2.msra.mxu0 0.0
      %1981 = vmatprep.subr.mxu0 0.0
      %1982 = vmatpush2.msra.mxu0 0.0
      %1983 = vmatprep.subr.mxu0 0.0
      %1984 = vmatpush2.msra.mxu0 0.0
      %1985 = vmatprep.subr.mxu0 0.0
      %1986 = vmatpush2.msra.mxu0 0.0
      %1987 = vmatprep.subr.mxu0 0.0
      %1988 = vmatpush2.msra.mxu0 0.0
      %1989 = vmatprep.subr.mxu0 0.0
      %1990 = vmatpush2.msra.mxu0 0.0
      %1991 = vmatprep.subr.mxu0 0.0
      %1992 = vmatpush2.msra.mxu0 0.0
      %1993 = vmatprep.subr.mxu0 0.0
      %1994 = vmatpush2.msra.mxu0 0.0
      %1995 = vmatprep.subr.mxu0 0.0
      %1996 = vmatpush2.msra.mxu0 0.0
      %1997 = vmatprep.subr.mxu0 0.0
      %1998 = vmatpush2.msra.mxu0 0.0
      %1999 = vmatprep.subr.mxu0 0.0
      %2000 = vmatpush2.msra.mxu0 0.0
      %2001 = vmatprep.subr.mxu0 0.0
      %2002 = vmatpush2.msra.mxu0 0.0
      %2003 = vmatprep.subr.mxu0 0.0
      %2004 = vmatpush2.msra.mxu0 0.0
      %2005 = vmatprep.mubr.f32.mxu0 0.0
      %2006 = vmatmul.mubr.f32.gmra.mxu0 %v1936
      %v2007 = vpop.f32.mrf.mxu0
      %v2008 = vadd.f32 0.0, %v2007
      %v2009 = vpop.f32.mrf.mxu0
      %2010 = vmatprep.mubr.f32.mxu0 0.0
      %2011 = vmatmul.mubr.f32.gmra.mxu0 %v1939
      %v2012 = vpop.f32.mrf.mxu0
      %v2013 = vadd.f32 0.0, %v2012
      %v2014 = vpop.f32.mrf.mxu0
      %2015 = vdwg.mxu0
      %v2017 = vsel %vm1282, %v1527, 0
      %v2020 = vsel %vm1282, %v1600, 0
      %2022 = vmatprep.subr.mxu0 0.0
      %2023 = vmatpush1.msra.mxu0 0.0
      %2024 = vmatprep.subr.mxu0 0.0
      %2025 = vmatpush1.msra.mxu0 0.0
      %2026 = vmatprep.subr.mxu0 0.0
      %2027 = vmatpush1.msra.mxu0 0.0
      %2028 = vmatprep.subr.mxu0 0.0
      %2029 = vmatpush1.msra.mxu0 0.0
      %2030 = vmatprep.subr.mxu0 0.0
      %2031 = vmatpush1.msra.mxu0 0.0
      %2032 = vmatprep.subr.mxu0 0.0
      %2033 = vmatpush1.msra.mxu0 0.0
      %2034 = vmatprep.subr.mxu0 0.0
      %2035 = vmatpush1.msra.mxu0 0.0
      %2036 = vmatprep.subr.mxu0 0.0
      %2037 = vmatpush1.msra.mxu0 0.0
      %2038 = vmatprep.subr.mxu0 0.0
      %2039 = vmatpush1.msra.mxu0 0.0
      %2040 = vmatprep.subr.mxu0 0.0
      %2041 = vmatpush1.msra.mxu0 0.0
      %2042 = vmatprep.subr.mxu0 0.0
      %2043 = vmatpush1.msra.mxu0 0.0
      %2044 = vmatprep.subr.mxu0 0.0
      %2045 = vmatpush1.msra.mxu0 0.0
      %2046 = vmatprep.subr.mxu0 0.0
      %2047 = vmatpush1.msra.mxu0 0.0
      %2048 = vmatprep.subr.mxu0 0.0
      %2049 = vmatpush1.msra.mxu0 0.0
      %2050 = vmatprep.subr.mxu0 0.0
      %2051 = vmatpush1.msra.mxu0 0.0
      %2052 = vmatprep.subr.mxu0 0.0
      %2053 = vmatpush1.msra.mxu0 %v1278
      %2054 = vmatprep.subr.mxu0 0.0
      %2055 = vmatpush2.msra.mxu0 0.0
      %2056 = vmatprep.subr.mxu0 0.0
      %2057 = vmatpush2.msra.mxu0 0.0
      %2058 = vmatprep.subr.mxu0 0.0
      %2059 = vmatpush2.msra.mxu0 0.0
      %2060 = vmatprep.subr.mxu0 0.0
      %2061 = vmatpush2.msra.mxu0 0.0
      %2062 = vmatprep.subr.mxu0 0.0
      %2063 = vmatpush2.msra.mxu0 0.0
      %2064 = vmatprep.subr.mxu0 0.0
      %2065 = vmatpush2.msra.mxu0 0.0
      %2066 = vmatprep.subr.mxu0 0.0
      %2067 = vmatpush2.msra.mxu0 0.0
      %2068 = vmatprep.subr.mxu0 0.0
      %2069 = vmatpush2.msra.mxu0 0.0
      %2070 = vmatprep.subr.mxu0 0.0
      %2071 = vmatpush2.msra.mxu0 0.0
      %2072 = vmatprep.subr.mxu0 0.0
      %2073 = vmatpush2.msra.mxu0 0.0
      %2074 = vmatprep.subr.mxu0 0.0
      %2075 = vmatpush2.msra.mxu0 0.0
      %2076 = vmatprep.subr.mxu0 0.0
      %2077 = vmatpush2.msra.mxu0 0.0
      %2078 = vmatprep.subr.mxu0 0.0
      %2079 = vmatpush2.msra.mxu0 0.0
      %2080 = vmatprep.subr.mxu0 0.0
      %2081 = vmatpush2.msra.mxu0 0.0
      %2082 = vmatprep.subr.mxu0 0.0
      %2083 = vmatpush2.msra.mxu0 0.0
      %2084 = vmatprep.subr.mxu0 0.0
      %2085 = vmatpush2.msra.mxu0 0.0
      %2086 = vmatprep.mubr.f32.mxu0 0.0
      %2087 = vmatmul.mubr.f32.gmra.mxu0 %v2017
      %v2088 = vpop.f32.mrf.mxu0
      %v2089 = vadd.f32 %v2008, %v2088
      %v2090 = vpop.f32.mrf.mxu0
      %2091 = vmatprep.mubr.f32.mxu0 0.0
      %2092 = vmatmul.mubr.f32.gmra.mxu0 %v2020
      %v2093 = vpop.f32.mrf.mxu0
      %v2094 = vadd.f32 %v2013, %v2093
      %v2095 = vpop.f32.mrf.mxu0
      %2096 = vdwg.mxu0
      %2097 = vrot.lane.b32.xlu0 %v1096, 112
      %v2098 = vpop.permute.xlu0 %2097
      %2099 = vrot.lane.b32.xlu0 %v1178, 112
      %v2100 = vpop.permute.xlu0 %2099
      %v2101 = vsel %vm1282, %v2098, 0
      %v2103 = vsel %vm1282, %v2100, 0
      %2105 = vmatprep.subr.mxu0 0.0
      %2106 = vmatpush1.xpose.msra.mxu0 0.0
      %2107 = vmatprep.subr.mxu0 0.0
      %2108 = vmatpush1.xpose.msra.mxu0 0.0
      %2109 = vmatprep.subr.mxu0 0.0
      %2110 = vmatpush1.xpose.msra.mxu0 0.0
      %2111 = vmatprep.subr.mxu0 0.0
      %2112 = vmatpush1.xpose.msra.mxu0 0.0
      %2113 = vmatprep.subr.mxu0 0.0
      %2114 = vmatpush1.xpose.msra.mxu0 0.0
      %2115 = vmatprep.subr.mxu0 0.0
      %2116 = vmatpush1.xpose.msra.mxu0 0.0
      %2117 = vmatprep.subr.mxu0 0.0
      %2118 = vmatpush1.xpose.msra.mxu0 0.0
      %2119 = vmatprep.subr.mxu0 0.0
      %2120 = vmatpush1.xpose.msra.mxu0 0.0
      %2121 = vmatprep.subr.mxu0 0.0
      %2122 = vmatpush1.xpose.msra.mxu0 0.0
      %2123 = vmatprep.subr.mxu0 0.0
      %2124 = vmatpush1.xpose.msra.mxu0 0.0
      %2125 = vmatprep.subr.mxu0 0.0
      %2126 = vmatpush1.xpose.msra.mxu0 0.0
      %2127 = vmatprep.subr.mxu0 0.0
      %2128 = vmatpush1.xpose.msra.mxu0 0.0
      %2129 = vmatprep.subr.mxu0 0.0
      %2130 = vmatpush1.xpose.msra.mxu0 0.0
      %2131 = vmatprep.subr.mxu0 0.0
      %2132 = vmatpush1.xpose.msra.mxu0 0.0
      %2133 = vmatprep.subr.mxu0 0.0
      %2134 = vmatpush1.xpose.msra.mxu0 0.0
      %2135 = vmatprep.subr.mxu0 0.0
      %2136 = vmatpush1.xpose.msra.mxu0 %v2103
      %2137 = vmatprep.subr.mxu0 0.0
      %2138 = vmatpush2.xpose.msra.mxu0 0.0
      %2139 = vmatprep.subr.mxu0 0.0
      %2140 = vmatpush2.xpose.msra.mxu0 0.0
      %2141 = vmatprep.subr.mxu0 0.0
      %2142 = vmatpush2.xpose.msra.mxu0 0.0
      %2143 = vmatprep.subr.mxu0 0.0
      %2144 = vmatpush2.xpose.msra.mxu0 0.0
      %2145 = vmatprep.subr.mxu0 0.0
      %2146 = vmatpush2.xpose.msra.mxu0 0.0
      %2147 = vmatprep.subr.mxu0 0.0
      %2148 = vmatpush2.xpose.msra.mxu0 0.0
      %2149 = vmatprep.subr.mxu0 0.0
      %2150 = vmatpush2.xpose.msra.mxu0 0.0
      %2151 = vmatprep.subr.mxu0 0.0
      %2152 = vmatpush2.xpose.msra.mxu0 0.0
      %2153 = vmatprep.subr.mxu0 0.0
      %2154 = vmatpush2.xpose.msra.mxu0 0.0
      %2155 = vmatprep.subr.mxu0 0.0
      %2156 = vmatpush2.xpose.msra.mxu0 0.0
      %2157 = vmatprep.subr.mxu0 0.0
      %2158 = vmatpush2.xpose.msra.mxu0 0.0
      %2159 = vmatprep.subr.mxu0 0.0
      %2160 = vmatpush2.xpose.msra.mxu0 0.0
      %2161 = vmatprep.subr.mxu0 0.0
      %2162 = vmatpush2.xpose.msra.mxu0 0.0
      %2163 = vmatprep.subr.mxu0 0.0
      %2164 = vmatpush2.xpose.msra.mxu0 0.0
      %2165 = vmatprep.subr.mxu0 0.0
      %2166 = vmatpush2.xpose.msra.mxu0 0.0
      %2167 = vmatprep.subr.mxu0 0.0
      %2168 = vmatpush2.xpose.msra.mxu0 0.0
      %2169 = vmatprep.mubr.f32.mxu0 0.0
      %2170 = vmatmul.mubr.f32.gmra.mxu0 %v2101
      %v2171 = vpop.f32.mrf.mxu0
      %v2172 = vadd.f32 %v1277, %v2171
      %v2173 = vpop.f32.mrf.mxu0
      %2174 = vdwg.mxu0
      %2175 = vrot.lane.b32.xlu0 %v1097, 112
      %v2176 = vpop.permute.xlu0 %2175
      %2177 = vrot.lane.b32.xlu0 %v1183, 112
      %v2178 = vpop.permute.xlu0 %2177
      %v2179 = vsel %vm1282, %v2176, 0
      %v2181 = vsel %vm1282, %v2178, 0
      %2183 = vmatprep.subr.mxu0 0.0
      %2184 = vmatpush1.xpose.msra.mxu0 0.0
      %2185 = vmatprep.subr.mxu0 0.0
      %2186 = vmatpush1.xpose.msra.mxu0 0.0
      %2187 = vmatprep.subr.mxu0 0.0
      %2188 = vmatpush1.xpose.msra.mxu0 0.0
      %2189 = vmatprep.subr.mxu0 0.0
      %2190 = vmatpush1.xpose.msra.mxu0 0.0
      %2191 = vmatprep.subr.mxu0 0.0
      %2192 = vmatpush1.xpose.msra.mxu0 0.0
      %2193 = vmatprep.subr.mxu0 0.0
      %2194 = vmatpush1.xpose.msra.mxu0 0.0
      %2195 = vmatprep.subr.mxu0 0.0
      %2196 = vmatpush1.xpose.msra.mxu0 0.0
      %2197 = vmatprep.subr.mxu0 0.0
      %2198 = vmatpush1.xpose.msra.mxu0 0.0
      %2199 = vmatprep.subr.mxu0 0.0
      %2200 = vmatpush1.xpose.msra.mxu0 0.0
      %2201 = vmatprep.subr.mxu0 0.0
      %2202 = vmatpush1.xpose.msra.mxu0 0.0
      %2203 = vmatprep.subr.mxu0 0.0
      %2204 = vmatpush1.xpose.msra.mxu0 0.0
      %2205 = vmatprep.subr.mxu0 0.0
      %2206 = vmatpush1.xpose.msra.mxu0 0.0
      %2207 = vmatprep.subr.mxu0 0.0
      %2208 = vmatpush1.xpose.msra.mxu0 0.0
      %2209 = vmatprep.subr.mxu0 0.0
      %2210 = vmatpush1.xpose.msra.mxu0 0.0
      %2211 = vmatprep.subr.mxu0 0.0
      %2212 = vmatpush1.xpose.msra.mxu0 0.0
      %2213 = vmatprep.subr.mxu0 0.0
      %2214 = vmatpush1.xpose.msra.mxu0 %v2181
      %2215 = vmatprep.subr.mxu0 0.0
      %2216 = vmatpush2.xpose.msra.mxu0 0.0
      %2217 = vmatprep.subr.mxu0 0.0
      %2218 = vmatpush2.xpose.msra.mxu0 0.0
      %2219 = vmatprep.subr.mxu0 0.0
      %2220 = vmatpush2.xpose.msra.mxu0 0.0
      %2221 = vmatprep.subr.mxu0 0.0
      %2222 = vmatpush2.xpose.msra.mxu0 0.0
      %2223 = vmatprep.subr.mxu0 0.0
      %2224 = vmatpush2.xpose.msra.mxu0 0.0
      %2225 = vmatprep.subr.mxu0 0.0
      %2226 = vmatpush2.xpose.msra.mxu0 0.0
      %2227 = vmatprep.subr.mxu0 0.0
      %2228 = vmatpush2.xpose.msra.mxu0 0.0
      %2229 = vmatprep.subr.mxu0 0.0
      %2230 = vmatpush2.xpose.msra.mxu0 0.0
      %2231 = vmatprep.subr.mxu0 0.0
      %2232 = vmatpush2.xpose.msra.mxu0 0.0
      %2233 = vmatprep.subr.mxu0 0.0
      %2234 = vmatpush2.xpose.msra.mxu0 0.0
      %2235 = vmatprep.subr.mxu0 0.0
      %2236 = vmatpush2.xpose.msra.mxu0 0.0
      %2237 = vmatprep.subr.mxu0 0.0
      %2238 = vmatpush2.xpose.msra.mxu0 0.0
      %2239 = vmatprep.subr.mxu0 0.0
      %2240 = vmatpush2.xpose.msra.mxu0 0.0
      %2241 = vmatprep.subr.mxu0 0.0
      %2242 = vmatpush2.xpose.msra.mxu0 0.0
      %2243 = vmatprep.subr.mxu0 0.0
      %2244 = vmatpush2.xpose.msra.mxu0 0.0
      %2245 = vmatprep.subr.mxu0 0.0
      %2246 = vmatpush2.xpose.msra.mxu0 0.0
      %2247 = vmatprep.mubr.f32.mxu0 0.0
      %2248 = vmatmul.mubr.f32.gmra.mxu0 %v2179
      %v2249 = vpop.f32.mrf.mxu0
      %v2250 = vadd.f32 %v1277, %v2249
      %v2251 = vpop.f32.mrf.mxu0
      %2252 = vdwg.mxu0
      %v2253 = vsel %vm1282, %v2172, -inf
      %2254 = vmax.xlane.f32.xlu0 %v2253
      %v2255 = vpop.xlane.xlu0 %2254
      %v2256 = vsel %vm1282, %v2250, -inf
      %2257 = vmax.xlane.f32.xlu0 %v2256
      %v2258 = vpop.xlane.xlu0 %2257
      %v2259 = vsub.f32 %v2172, %v2255
      %v2260 = vsub.f32 %v2250, %v2258
      %v2261 = vmul.f32 %v2259, 1.442695
      %v2262 = vpow.pop %v2261
      %v2263 = vmul.f32 %v2260, 1.442695
      %v2264 = vpow.pop %v2263
      %v2265 = vsel %vm1282, %v2262, 0.0
      %2266 = vadd.xlane.f32.xlu0 %v2265
      %v2267 = vpop.xlane.xlu0 %2266
      %v2268 = vsel %vm1282, %v2264, 0.0
      %2269 = vadd.xlane.f32.xlu0 %v2268
      %v2270 = vpop.xlane.xlu0 %2269
      %v2271 = vrcp.pop %v2267
      %v2272 = vrcp.pop %v2270
      %v2273 = vmul.f32 %v2262, %v2271
      %v2274 = vmul.f32 %v2264, %v2272
      %2275 = vrot.lane.b32.xlu0 %v1266, 112
      %v2276 = vpop.permute.xlu0 %2275
      %v2279 = vsel %vm1282, %v2273, 0
      %2281 = vmatprep.subr.mxu0 0.0
      %2282 = vmatpush1.msra.mxu0 0.0
      %2283 = vmatprep.subr.mxu0 0.0
      %2284 = vmatpush1.msra.mxu0 0.0
      %2285 = vmatprep.subr.mxu0 0.0
      %2286 = vmatpush1.msra.mxu0 0.0
      %2287 = vmatprep.subr.mxu0 0.0
      %2288 = vmatpush1.msra.mxu0 0.0
      %2289 = vmatprep.subr.mxu0 0.0
      %2290 = vmatpush1.msra.mxu0 0.0
      %2291 = vmatprep.subr.mxu0 0.0
      %2292 = vmatpush1.msra.mxu0 0.0
      %2293 = vmatprep.subr.mxu0 0.0
      %2294 = vmatpush1.msra.mxu0 0.0
      %2295 = vmatprep.subr.mxu0 0.0
      %2296 = vmatpush1.msra.mxu0 0.0
      %2297 = vmatprep.subr.mxu0 0.0
      %2298 = vmatpush1.msra.mxu0 0.0
      %2299 = vmatprep.subr.mxu0 0.0
      %2300 = vmatpush1.msra.mxu0 0.0
      %2301 = vmatprep.subr.mxu0 0.0
      %2302 = vmatpush1.msra.mxu0 0.0
      %2303 = vmatprep.subr.mxu0 0.0
      %2304 = vmatpush1.msra.mxu0 0.0
      %2305 = vmatprep.subr.mxu0 0.0
      %2306 = vmatpush1.msra.mxu0 0.0
      %2307 = vmatprep.subr.mxu0 0.0
      %2308 = vmatpush1.msra.mxu0 0.0
      %2309 = vmatprep.subr.mxu0 0.0
      %2310 = vmatpush1.msra.mxu0 0.0
      %2311 = vmatprep.subr.mxu0 0.0
      %2312 = vmatpush1.msra.mxu0 %v2276
      %2313 = vmatprep.subr.mxu0 0.0
      %2314 = vmatpush2.msra.mxu0 0.0
      %2315 = vmatprep.subr.mxu0 0.0
      %2316 = vmatpush2.msra.mxu0 0.0
      %2317 = vmatprep.subr.mxu0 0.0
      %2318 = vmatpush2.msra.mxu0 0.0
      %2319 = vmatprep.subr.mxu0 0.0
      %2320 = vmatpush2.msra.mxu0 0.0
      %2321 = vmatprep.subr.mxu0 0.0
      %2322 = vmatpush2.msra.mxu0 0.0
      %2323 = vmatprep.subr.mxu0 0.0
      %2324 = vmatpush2.msra.mxu0 0.0
      %2325 = vmatprep.subr.mxu0 0.0
      %2326 = vmatpush2.msra.mxu0 0.0
      %2327 = vmatprep.subr.mxu0 0.0
      %2328 = vmatpush2.msra.mxu0 0.0
      %2329 = vmatprep.subr.mxu0 0.0
      %2330 = vmatpush2.msra.mxu0 0.0
      %2331 = vmatprep.subr.mxu0 0.0
      %2332 = vmatpush2.msra.mxu0 0.0
      %2333 = vmatprep.subr.mxu0 0.0
      %2334 = vmatpush2.msra.mxu0 0.0
      %2335 = vmatprep.subr.mxu0 0.0
      %2336 = vmatpush2.msra.mxu0 0.0
      %2337 = vmatprep.subr.mxu0 0.0
      %2338 = vmatpush2.msra.mxu0 0.0
      %2339 = vmatprep.subr.mxu0 0.0
      %2340 = vmatpush2.msra.mxu0 0.0
      %2341 = vmatprep.subr.mxu0 0.0
      %2342 = vmatpush2.msra.mxu0 0.0
      %2343 = vmatprep.subr.mxu0 0.0
      %2344 = vmatpush2.msra.mxu0 0.0
      %2345 = vmatprep.mubr.f32.mxu0 0.0
      %2346 = vmatmul.mubr.f32.gmra.mxu0 %v2279
      %v2347 = vpop.f32.mrf.mxu0
      %v2348 = vadd.f32 0.0, %v2347
      %v2349 = vpop.f32.mrf.mxu0
      %2350 = vdwg.mxu0
      %2351 = vrot.lane.b32.xlu0 %v1271, 112
      %v2352 = vpop.permute.xlu0 %2351
      %v2355 = vsel %vm1282, %v2274, 0
      %2357 = vmatprep.subr.mxu0 0.0
      %2358 = vmatpush1.msra.mxu0 0.0
      %2359 = vmatprep.subr.mxu0 0.0
      %2360 = vmatpush1.msra.mxu0 0.0
      %2361 = vmatprep.subr.mxu0 0.0
      %2362 = vmatpush1.msra.mxu0 0.0
      %2363 = vmatprep.subr.mxu0 0.0
      %2364 = vmatpush1.msra.mxu0 0.0
      %2365 = vmatprep.subr.mxu0 0.0
      %2366 = vmatpush1.msra.mxu0 0.0
      %2367 = vmatprep.subr.mxu0 0.0
      %2368 = vmatpush1.msra.mxu0 0.0
      %2369 = vmatprep.subr.mxu0 0.0
      %2370 = vmatpush1.msra.mxu0 0.0
      %2371 = vmatprep.subr.mxu0 0.0
      %2372 = vmatpush1.msra.mxu0 0.0
      %2373 = vmatprep.subr.mxu0 0.0
      %2374 = vmatpush1.msra.mxu0 0.0
      %2375 = vmatprep.subr.mxu0 0.0
      %2376 = vmatpush1.msra.mxu0 0.0
      %2377 = vmatprep.subr.mxu0 0.0
      %2378 = vmatpush1.msra.mxu0 0.0
      %2379 = vmatprep.subr.mxu0 0.0
      %2380 = vmatpush1.msra.mxu0 0.0
      %2381 = vmatprep.subr.mxu0 0.0
      %2382 = vmatpush1.msra.mxu0 0.0
      %2383 = vmatprep.subr.mxu0 0.0
      %2384 = vmatpush1.msra.mxu0 0.0
      %2385 = vmatprep.subr.mxu0 0.0
      %2386 = vmatpush1.msra.mxu0 0.0
      %2387 = vmatprep.subr.mxu0 0.0
      %2388 = vmatpush1.msra.mxu0 %v2352
      %2389 = vmatprep.subr.mxu0 0.0
      %2390 = vmatpush2.msra.mxu0 0.0
      %2391 = vmatprep.subr.mxu0 0.0
      %2392 = vmatpush2.msra.mxu0 0.0
      %2393 = vmatprep.subr.mxu0 0.0
      %2394 = vmatpush2.msra.mxu0 0.0
      %2395 = vmatprep.subr.mxu0 0.0
      %2396 = vmatpush2.msra.mxu0 0.0
      %2397 = vmatprep.subr.mxu0 0.0
      %2398 = vmatpush2.msra.mxu0 0.0
      %2399 = vmatprep.subr.mxu0 0.0
      %2400 = vmatpush2.msra.mxu0 0.0
      %2401 = vmatprep.subr.mxu0 0.0
      %2402 = vmatpush2.msra.mxu0 0.0
      %2403 = vmatprep.subr.mxu0 0.0
      %2404 = vmatpush2.msra.mxu0 0.0
      %2405 = vmatprep.subr.mxu0 0.0
      %2406 = vmatpush2.msra.mxu0 0.0
      %2407 = vmatprep.subr.mxu0 0.0
      %2408 = vmatpush2.msra.mxu0 0.0
      %2409 = vmatprep.subr.mxu0 0.0
      %2410 = vmatpush2.msra.mxu0 0.0
      %2411 = vmatprep.subr.mxu0 0.0
      %2412 = vmatpush2.msra.mxu0 0.0
      %2413 = vmatprep.subr.mxu0 0.0
      %2414 = vmatpush2.msra.mxu0 0.0
      %2415 = vmatprep.subr.mxu0 0.0
      %2416 = vmatpush2.msra.mxu0 0.0
      %2417 = vmatprep.subr.mxu0 0.0
      %2418 = vmatpush2.msra.mxu0 0.0
      %2419 = vmatprep.subr.mxu0 0.0
      %2420 = vmatpush2.msra.mxu0 0.0
      %2421 = vmatprep.mubr.f32.mxu0 0.0
      %2422 = vmatmul.mubr.f32.gmra.mxu0 %v2355
      %v2423 = vpop.f32.mrf.mxu0
      %v2424 = vadd.f32 0.0, %v2423
      %v2425 = vpop.f32.mrf.mxu0
      %2426 = vdwg.mxu0
      %v2428 = vsel %vm1282, %v2348, 0
      %v2431 = vsel %vm1282, %v2424, 0
      %2433 = vmatprep.subr.mxu0 0.0
      %2434 = vmatpush1.msra.mxu0 0.0
      %2435 = vmatprep.subr.mxu0 0.0
      %2436 = vmatpush1.msra.mxu0 0.0
      %2437 = vmatprep.subr.mxu0 0.0
      %2438 = vmatpush1.msra.mxu0 0.0
      %2439 = vmatprep.subr.mxu0 0.0
      %2440 = vmatpush1.msra.mxu0 0.0
      %2441 = vmatprep.subr.mxu0 0.0
      %2442 = vmatpush1.msra.mxu0 0.0
      %2443 = vmatprep.subr.mxu0 0.0
      %2444 = vmatpush1.msra.mxu0 0.0
      %2445 = vmatprep.subr.mxu0 0.0
      %2446 = vmatpush1.msra.mxu0 0.0
      %2447 = vmatprep.subr.mxu0 0.0
      %2448 = vmatpush1.msra.mxu0 0.0
      %2449 = vmatprep.subr.mxu0 0.0
      %2450 = vmatpush1.msra.mxu0 0.0
      %2451 = vmatprep.subr.mxu0 0.0
      %2452 = vmatpush1.msra.mxu0 0.0
      %2453 = vmatprep.subr.mxu0 0.0
      %2454 = vmatpush1.msra.mxu0 0.0
      %2455 = vmatprep.subr.mxu0 0.0
      %2456 = vmatpush1.msra.mxu0 0.0
      %2457 = vmatprep.subr.mxu0 0.0
      %2458 = vmatpush1.msra.mxu0 0.0
      %2459 = vmatprep.subr.mxu0 0.0
      %2460 = vmatpush1.msra.mxu0 0.0
      %2461 = vmatprep.subr.mxu0 0.0
      %2462 = vmatpush1.msra.mxu0 0.0
      %2463 = vmatprep.subr.mxu0 0.0
      %2464 = vmatpush1.msra.mxu0 %v1280
      %2465 = vmatprep.subr.mxu0 0.0
      %2466 = vmatpush2.msra.mxu0 0.0
      %2467 = vmatprep.subr.mxu0 0.0
      %2468 = vmatpush2.msra.mxu0 0.0
      %2469 = vmatprep.subr.mxu0 0.0
      %2470 = vmatpush2.msra.mxu0 0.0
      %2471 = vmatprep.subr.mxu0 0.0
      %2472 = vmatpush2.msra.mxu0 0.0
      %2473 = vmatprep.subr.mxu0 0.0
      %2474 = vmatpush2.msra.mxu0 0.0
      %2475 = vmatprep.subr.mxu0 0.0
      %2476 = vmatpush2.msra.mxu0 0.0
      %2477 = vmatprep.subr.mxu0 0.0
      %2478 = vmatpush2.msra.mxu0 0.0
      %2479 = vmatprep.subr.mxu0 0.0
      %2480 = vmatpush2.msra.mxu0 0.0
      %2481 = vmatprep.subr.mxu0 0.0
      %2482 = vmatpush2.msra.mxu0 0.0
      %2483 = vmatprep.subr.mxu0 0.0
      %2484 = vmatpush2.msra.mxu0 0.0
      %2485 = vmatprep.subr.mxu0 0.0
      %2486 = vmatpush2.msra.mxu0 0.0
      %2487 = vmatprep.subr.mxu0 0.0
      %2488 = vmatpush2.msra.mxu0 0.0
      %2489 = vmatprep.subr.mxu0 0.0
      %2490 = vmatpush2.msra.mxu0 0.0
      %2491 = vmatprep.subr.mxu0 0.0
      %2492 = vmatpush2.msra.mxu0 0.0
      %2493 = vmatprep.subr.mxu0 0.0
      %2494 = vmatpush2.msra.mxu0 0.0
      %2495 = vmatprep.subr.mxu0 0.0
      %2496 = vmatpush2.msra.mxu0 0.0
      %2497 = vmatprep.mubr.f32.mxu0 0.0
      %2498 = vmatmul.mubr.f32.gmra.mxu0 %v2428
      %v2499 = vpop.f32.mrf.mxu0
      %v2500 = vadd.f32 0.0, %v2499
      %v2501 = vpop.f32.mrf.mxu0
      %2502 = vmatprep.mubr.f32.mxu0 0.0
      %2503 = vmatmul.mubr.f32.gmra.mxu0 %v2431
      %v2504 = vpop.f32.mrf.mxu0
      %v2505 = vadd.f32 0.0, %v2504
      %v2506 = vpop.f32.mrf.mxu0
      %2507 = vdwg.mxu0
      %v2508 = vadd.f32 %v2089, %v2500
      %v2509 = vadd.f32 %v2094, %v2505
      %2510 = vrot.lane.b32.xlu0 %v1096, 104
      %v2511 = vpop.permute.xlu0 %2510
      %2512 = vrot.lane.b32.xlu0 %v1178, 104
      %v2513 = vpop.permute.xlu0 %2512
      %v2514 = vsel %vm1282, %v2511, 0
      %v2516 = vsel %vm1282, %v2513, 0
      %2518 = vmatprep.subr.mxu0 0.0
      %2519 = vmatpush1.xpose.msra.mxu0 0.0
      %2520 = vmatprep.subr.mxu0 0.0
      %2521 = vmatpush1.xpose.msra.mxu0 0.0
      %2522 = vmatprep.subr.mxu0 0.0
      %2523 = vmatpush1.xpose.msra.mxu0 0.0
      %2524 = vmatprep.subr.mxu0 0.0
      %2525 = vmatpush1.xpose.msra.mxu0 0.0
      %2526 = vmatprep.subr.mxu0 0.0
      %2527 = vmatpush1.xpose.msra.mxu0 0.0
      %2528 = vmatprep.subr.mxu0 0.0
      %2529 = vmatpush1.xpose.msra.mxu0 0.0
      %2530 = vmatprep.subr.mxu0 0.0
      %2531 = vmatpush1.xpose.msra.mxu0 0.0
      %2532 = vmatprep.subr.mxu0 0.0
      %2533 = vmatpush1.xpose.msra.mxu0 0.0
      %2534 = vmatprep.subr.mxu0 0.0
      %2535 = vmatpush1.xpose.msra.mxu0 0.0
      %2536 = vmatprep.subr.mxu0 0.0
      %2537 = vmatpush1.xpose.msra.mxu0 0.0
      %2538 = vmatprep.subr.mxu0 0.0
      %2539 = vmatpush1.xpose.msra.mxu0 0.0
      %2540 = vmatprep.subr.mxu0 0.0
      %2541 = vmatpush1.xpose.msra.mxu0 0.0
      %2542 = vmatprep.subr.mxu0 0.0
      %2543 = vmatpush1.xpose.msra.mxu0 0.0
      %2544 = vmatprep.subr.mxu0 0.0
      %2545 = vmatpush1.xpose.msra.mxu0 0.0
      %2546 = vmatprep.subr.mxu0 0.0
      %2547 = vmatpush1.xpose.msra.mxu0 0.0
      %2548 = vmatprep.subr.mxu0 0.0
      %2549 = vmatpush1.xpose.msra.mxu0 %v2516
      %2550 = vmatprep.subr.mxu0 0.0
      %2551 = vmatpush2.xpose.msra.mxu0 0.0
      %2552 = vmatprep.subr.mxu0 0.0
      %2553 = vmatpush2.xpose.msra.mxu0 0.0
      %2554 = vmatprep.subr.mxu0 0.0
      %2555 = vmatpush2.xpose.msra.mxu0 0.0
      %2556 = vmatprep.subr.mxu0 0.0
      %2557 = vmatpush2.xpose.msra.mxu0 0.0
      %2558 = vmatprep.subr.mxu0 0.0
      %2559 = vmatpush2.xpose.msra.mxu0 0.0
      %2560 = vmatprep.subr.mxu0 0.0
      %2561 = vmatpush2.xpose.msra.mxu0 0.0
      %2562 = vmatprep.subr.mxu0 0.0
      %2563 = vmatpush2.xpose.msra.mxu0 0.0
      %2564 = vmatprep.subr.mxu0 0.0
      %2565 = vmatpush2.xpose.msra.mxu0 0.0
      %2566 = vmatprep.subr.mxu0 0.0
      %2567 = vmatpush2.xpose.msra.mxu0 0.0
      %2568 = vmatprep.subr.mxu0 0.0
      %2569 = vmatpush2.xpose.msra.mxu0 0.0
      %2570 = vmatprep.subr.mxu0 0.0
      %2571 = vmatpush2.xpose.msra.mxu0 0.0
      %2572 = vmatprep.subr.mxu0 0.0
      %2573 = vmatpush2.xpose.msra.mxu0 0.0
      %2574 = vmatprep.subr.mxu0 0.0
      %2575 = vmatpush2.xpose.msra.mxu0 0.0
      %2576 = vmatprep.subr.mxu0 0.0
      %2577 = vmatpush2.xpose.msra.mxu0 0.0
      %2578 = vmatprep.subr.mxu0 0.0
      %2579 = vmatpush2.xpose.msra.mxu0 0.0
      %2580 = vmatprep.subr.mxu0 0.0
      %2581 = vmatpush2.xpose.msra.mxu0 0.0
      %2582 = vmatprep.mubr.f32.mxu0 0.0
      %2583 = vmatmul.mubr.f32.gmra.mxu0 %v2514
      %v2584 = vpop.f32.mrf.mxu0
      %v2585 = vadd.f32 %v1277, %v2584
      %v2586 = vpop.f32.mrf.mxu0
      %2587 = vdwg.mxu0
      %2588 = vrot.lane.b32.xlu0 %v1097, 104
      %v2589 = vpop.permute.xlu0 %2588
      %2590 = vrot.lane.b32.xlu0 %v1183, 104
      %v2591 = vpop.permute.xlu0 %2590
      %v2592 = vsel %vm1282, %v2589, 0
      %v2594 = vsel %vm1282, %v2591, 0
      %2596 = vmatprep.subr.mxu0 0.0
      %2597 = vmatpush1.xpose.msra.mxu0 0.0
      %2598 = vmatprep.subr.mxu0 0.0
      %2599 = vmatpush1.xpose.msra.mxu0 0.0
      %2600 = vmatprep.subr.mxu0 0.0
      %2601 = vmatpush1.xpose.msra.mxu0 0.0
      %2602 = vmatprep.subr.mxu0 0.0
      %2603 = vmatpush1.xpose.msra.mxu0 0.0
      %2604 = vmatprep.subr.mxu0 0.0
      %2605 = vmatpush1.xpose.msra.mxu0 0.0
      %2606 = vmatprep.subr.mxu0 0.0
      %2607 = vmatpush1.xpose.msra.mxu0 0.0
      %2608 = vmatprep.subr.mxu0 0.0
      %2609 = vmatpush1.xpose.msra.mxu0 0.0
      %2610 = vmatprep.subr.mxu0 0.0
      %2611 = vmatpush1.xpose.msra.mxu0 0.0
      %2612 = vmatprep.subr.mxu0 0.0
      %2613 = vmatpush1.xpose.msra.mxu0 0.0
      %2614 = vmatprep.subr.mxu0 0.0
      %2615 = vmatpush1.xpose.msra.mxu0 0.0
      %2616 = vmatprep.subr.mxu0 0.0
      %2617 = vmatpush1.xpose.msra.mxu0 0.0
      %2618 = vmatprep.subr.mxu0 0.0
      %2619 = vmatpush1.xpose.msra.mxu0 0.0
      %2620 = vmatprep.subr.mxu0 0.0
      %2621 = vmatpush1.xpose.msra.mxu0 0.0
      %2622 = vmatprep.subr.mxu0 0.0
      %2623 = vmatpush1.xpose.msra.mxu0 0.0
      %2624 = vmatprep.subr.mxu0 0.0
      %2625 = vmatpush1.xpose.msra.mxu0 0.0
      %2626 = vmatprep.subr.mxu0 0.0
      %2627 = vmatpush1.xpose.msra.mxu0 %v2594
      %2628 = vmatprep.subr.mxu0 0.0
      %2629 = vmatpush2.xpose.msra.mxu0 0.0
      %2630 = vmatprep.subr.mxu0 0.0
      %2631 = vmatpush2.xpose.msra.mxu0 0.0
      %2632 = vmatprep.subr.mxu0 0.0
      %2633 = vmatpush2.xpose.msra.mxu0 0.0
      %2634 = vmatprep.subr.mxu0 0.0
      %2635 = vmatpush2.xpose.msra.mxu0 0.0
      %2636 = vmatprep.subr.mxu0 0.0
      %2637 = vmatpush2.xpose.msra.mxu0 0.0
      %2638 = vmatprep.subr.mxu0 0.0
      %2639 = vmatpush2.xpose.msra.mxu0 0.0
      %2640 = vmatprep.subr.mxu0 0.0
      %2641 = vmatpush2.xpose.msra.mxu0 0.0
      %2642 = vmatprep.subr.mxu0 0.0
      %2643 = vmatpush2.xpose.msra.mxu0 0.0
      %2644 = vmatprep.subr.mxu0 0.0
      %2645 = vmatpush2.xpose.msra.mxu0 0.0
      %2646 = vmatprep.subr.mxu0 0.0
      %2647 = vmatpush2.xpose.msra.mxu0 0.0
      %2648 = vmatprep.subr.mxu0 0.0
      %2649 = vmatpush2.xpose.msra.mxu0 0.0
      %2650 = vmatprep.subr.mxu0 0.0
      %2651 = vmatpush2.xpose.msra.mxu0 0.0
      %2652 = vmatprep.subr.mxu0 0.0
      %2653 = vmatpush2.xpose.msra.mxu0 0.0
      %2654 = vmatprep.subr.mxu0 0.0
      %2655 = vmatpush2.xpose.msra.mxu0 0.0
      %2656 = vmatprep.subr.mxu0 0.0
      %2657 = vmatpush2.xpose.msra.mxu0 0.0
      %2658 = vmatprep.subr.mxu0 0.0
      %2659 = vmatpush2.xpose.msra.mxu0 0.0
      %2660 = vmatprep.mubr.f32.mxu0 0.0
      %2661 = vmatmul.mubr.f32.gmra.mxu0 %v2592
      %v2662 = vpop.f32.mrf.mxu0
      %v2663 = vadd.f32 %v1277, %v2662
      %v2664 = vpop.f32.mrf.mxu0
      %2665 = vdwg.mxu0
      %v2666 = vsel %vm1282, %v2585, -inf
      %2667 = vmax.xlane.f32.xlu0 %v2666
      %v2668 = vpop.xlane.xlu0 %2667
      %v2669 = vsel %vm1282, %v2663, -inf
      %2670 = vmax.xlane.f32.xlu0 %v2669
      %v2671 = vpop.xlane.xlu0 %2670
      %v2672 = vsub.f32 %v2585, %v2668
      %v2673 = vsub.f32 %v2663, %v2671
      %v2674 = vmul.f32 %v2672, 1.442695
      %v2675 = vpow.pop %v2674
      %v2676 = vmul.f32 %v2673, 1.442695
      %v2677 = vpow.pop %v2676
      %v2678 = vsel %vm1282, %v2675, 0.0
      %2679 = vadd.xlane.f32.xlu0 %v2678
      %v2680 = vpop.xlane.xlu0 %2679
      %v2681 = vsel %vm1282, %v2677, 0.0
      %2682 = vadd.xlane.f32.xlu0 %v2681
      %v2683 = vpop.xlane.xlu0 %2682
      %v2684 = vrcp.pop %v2680
      %v2685 = vrcp.pop %v2683
      %v2686 = vmul.f32 %v2675, %v2684
      %v2687 = vmul.f32 %v2677, %v2685
      %2688 = vrot.lane.b32.xlu0 %v1266, 104
      %v2689 = vpop.permute.xlu0 %2688
      %v2692 = vsel %vm1282, %v2686, 0
      %2694 = vmatprep.subr.mxu0 0.0
      %2695 = vmatpush1.msra.mxu0 0.0
      %2696 = vmatprep.subr.mxu0 0.0
      %2697 = vmatpush1.msra.mxu0 0.0
      %2698 = vmatprep.subr.mxu0 0.0
      %2699 = vmatpush1.msra.mxu0 0.0
      %2700 = vmatprep.subr.mxu0 0.0
      %2701 = vmatpush1.msra.mxu0 0.0
      %2702 = vmatprep.subr.mxu0 0.0
      %2703 = vmatpush1.msra.mxu0 0.0
      %2704 = vmatprep.subr.mxu0 0.0
      %2705 = vmatpush1.msra.mxu0 0.0
      %2706 = vmatprep.subr.mxu0 0.0
      %2707 = vmatpush1.msra.mxu0 0.0
      %2708 = vmatprep.subr.mxu0 0.0
      %2709 = vmatpush1.msra.mxu0 0.0
      %2710 = vmatprep.subr.mxu0 0.0
      %2711 = vmatpush1.msra.mxu0 0.0
      %2712 = vmatprep.subr.mxu0 0.0
      %2713 = vmatpush1.msra.mxu0 0.0
      %2714 = vmatprep.subr.mxu0 0.0
      %2715 = vmatpush1.msra.mxu0 0.0
      %2716 = vmatprep.subr.mxu0 0.0
      %2717 = vmatpush1.msra.mxu0 0.0
      %2718 = vmatprep.subr.mxu0 0.0
      %2719 = vmatpush1.msra.mxu0 0.0
      %2720 = vmatprep.subr.mxu0 0.0
      %2721 = vmatpush1.msra.mxu0 0.0
      %2722 = vmatprep.subr.mxu0 0.0
      %2723 = vmatpush1.msra.mxu0 0.0
      %2724 = vmatprep.subr.mxu0 0.0
      %2725 = vmatpush1.msra.mxu0 %v2689
      %2726 = vmatprep.subr.mxu0 0.0
      %2727 = vmatpush2.msra.mxu0 0.0
      %2728 = vmatprep.subr.mxu0 0.0
      %2729 = vmatpush2.msra.mxu0 0.0
      %2730 = vmatprep.subr.mxu0 0.0
      %2731 = vmatpush2.msra.mxu0 0.0
      %2732 = vmatprep.subr.mxu0 0.0
      %2733 = vmatpush2.msra.mxu0 0.0
      %2734 = vmatprep.subr.mxu0 0.0
      %2735 = vmatpush2.msra.mxu0 0.0
      %2736 = vmatprep.subr.mxu0 0.0
      %2737 = vmatpush2.msra.mxu0 0.0
      %2738 = vmatprep.subr.mxu0 0.0
      %2739 = vmatpush2.msra.mxu0 0.0
      %2740 = vmatprep.subr.mxu0 0.0
      %2741 = vmatpush2.msra.mxu0 0.0
      %2742 = vmatprep.subr.mxu0 0.0
      %2743 = vmatpush2.msra.mxu0 0.0
      %2744 = vmatprep.subr.mxu0 0.0
      %2745 = vmatpush2.msra.mxu0 0.0
      %2746 = vmatprep.subr.mxu0 0.0
      %2747 = vmatpush2.msra.mxu0 0.0
      %2748 = vmatprep.subr.mxu0 0.0
      %2749 = vmatpush2.msra.mxu0 0.0
      %2750 = vmatprep.subr.mxu0 0.0
      %2751 = vmatpush2.msra.mxu0 0.0
      %2752 = vmatprep.subr.mxu0 0.0
      %2753 = vmatpush2.msra.mxu0 0.0
      %2754 = vmatprep.subr.mxu0 0.0
      %2755 = vmatpush2.msra.mxu0 0.0
      %2756 = vmatprep.subr.mxu0 0.0
      %2757 = vmatpush2.msra.mxu0 0.0
      %2758 = vmatprep.mubr.f32.mxu0 0.0
      %2759 = vmatmul.mubr.f32.gmra.mxu0 %v2692
      %v2760 = vpop.f32.mrf.mxu0
      %v2761 = vadd.f32 0.0, %v2760
      %v2762 = vpop.f32.mrf.mxu0
      %2763 = vdwg.mxu0
      %2764 = vrot.lane.b32.xlu0 %v1271, 104
      %v2765 = vpop.permute.xlu0 %2764
      %v2768 = vsel %vm1282, %v2687, 0
      %2770 = vmatprep.subr.mxu0 0.0
      %2771 = vmatpush1.msra.mxu0 0.0
      %2772 = vmatprep.subr.mxu0 0.0
      %2773 = vmatpush1.msra.mxu0 0.0
      %2774 = vmatprep.subr.mxu0 0.0
      %2775 = vmatpush1.msra.mxu0 0.0
      %2776 = vmatprep.subr.mxu0 0.0
      %2777 = vmatpush1.msra.mxu0 0.0
      %2778 = vmatprep.subr.mxu0 0.0
      %2779 = vmatpush1.msra.mxu0 0.0
      %2780 = vmatprep.subr.mxu0 0.0
      %2781 = vmatpush1.msra.mxu0 0.0
      %2782 = vmatprep.subr.mxu0 0.0
      %2783 = vmatpush1.msra.mxu0 0.0
      %2784 = vmatprep.subr.mxu0 0.0
      %2785 = vmatpush1.msra.mxu0 0.0
      %2786 = vmatprep.subr.mxu0 0.0
      %2787 = vmatpush1.msra.mxu0 0.0
      %2788 = vmatprep.subr.mxu0 0.0
      %2789 = vmatpush1.msra.mxu0 0.0
      %2790 = vmatprep.subr.mxu0 0.0
      %2791 = vmatpush1.msra.mxu0 0.0
      %2792 = vmatprep.subr.mxu0 0.0
      %2793 = vmatpush1.msra.mxu0 0.0
      %2794 = vmatprep.subr.mxu0 0.0
      %2795 = vmatpush1.msra.mxu0 0.0
      %2796 = vmatprep.subr.mxu0 0.0
      %2797 = vmatpush1.msra.mxu0 0.0
      %2798 = vmatprep.subr.mxu0 0.0
      %2799 = vmatpush1.msra.mxu0 0.0
      %2800 = vmatprep.subr.mxu0 0.0
      %2801 = vmatpush1.msra.mxu0 %v2765
      %2802 = vmatprep.subr.mxu0 0.0
      %2803 = vmatpush2.msra.mxu0 0.0
      %2804 = vmatprep.subr.mxu0 0.0
      %2805 = vmatpush2.msra.mxu0 0.0
      %2806 = vmatprep.subr.mxu0 0.0
      %2807 = vmatpush2.msra.mxu0 0.0
      %2808 = vmatprep.subr.mxu0 0.0
      %2809 = vmatpush2.msra.mxu0 0.0
      %2810 = vmatprep.subr.mxu0 0.0
      %2811 = vmatpush2.msra.mxu0 0.0
      %2812 = vmatprep.subr.mxu0 0.0
      %2813 = vmatpush2.msra.mxu0 0.0
      %2814 = vmatprep.subr.mxu0 0.0
      %2815 = vmatpush2.msra.mxu0 0.0
      %2816 = vmatprep.subr.mxu0 0.0
      %2817 = vmatpush2.msra.mxu0 0.0
      %2818 = vmatprep.subr.mxu0 0.0
      %2819 = vmatpush2.msra.mxu0 0.0
      %2820 = vmatprep.subr.mxu0 0.0
      %2821 = vmatpush2.msra.mxu0 0.0
      %2822 = vmatprep.subr.mxu0 0.0
      %2823 = vmatpush2.msra.mxu0 0.0
      %2824 = vmatprep.subr.mxu0 0.0
      %2825 = vmatpush2.msra.mxu0 0.0
      %2826 = vmatprep.subr.mxu0 0.0
      %2827 = vmatpush2.msra.mxu0 0.0
      %2828 = vmatprep.subr.mxu0 0.0
      %2829 = vmatpush2.msra.mxu0 0.0
      %2830 = vmatprep.subr.mxu0 0.0
      %2831 = vmatpush2.msra.mxu0 0.0
      %2832 = vmatprep.subr.mxu0 0.0
      %2833 = vmatpush2.msra.mxu0 0.0
      %2834 = vmatprep.mubr.f32.mxu0 0.0
      %2835 = vmatmul.mubr.f32.gmra.mxu0 %v2768
      %v2836 = vpop.f32.mrf.mxu0
      %v2837 = vadd.f32 0.0, %v2836
      %v2838 = vpop.f32.mrf.mxu0
      %2839 = vdwg.mxu0
      %v2841 = vsel %vm1282, %v2761, 0
      %v2844 = vsel %vm1282, %v2837, 0
      %2846 = vmatprep.subr.mxu0 0.0
      %2847 = vmatpush1.msra.mxu0 0.0
      %2848 = vmatprep.subr.mxu0 0.0
      %2849 = vmatpush1.msra.mxu0 0.0
      %2850 = vmatprep.subr.mxu0 0.0
      %2851 = vmatpush1.msra.mxu0 0.0
      %2852 = vmatprep.subr.mxu0 0.0
      %2853 = vmatpush1.msra.mxu0 0.0
      %2854 = vmatprep.subr.mxu0 0.0
      %2855 = vmatpush1.msra.mxu0 0.0
      %2856 = vmatprep.subr.mxu0 0.0
      %2857 = vmatpush1.msra.mxu0 0.0
      %2858 = vmatprep.subr.mxu0 0.0
      %2859 = vmatpush1.msra.mxu0 0.0
      %2860 = vmatprep.subr.mxu0 0.0
      %2861 = vmatpush1.msra.mxu0 0.0
      %2862 = vmatprep.subr.mxu0 0.0
      %2863 = vmatpush1.msra.mxu0 0.0
      %2864 = vmatprep.subr.mxu0 0.0
      %2865 = vmatpush1.msra.mxu0 0.0
      %2866 = vmatprep.subr.mxu0 0.0
      %2867 = vmatpush1.msra.mxu0 0.0
      %2868 = vmatprep.subr.mxu0 0.0
      %2869 = vmatpush1.msra.mxu0 0.0
      %2870 = vmatprep.subr.mxu0 0.0
      %2871 = vmatpush1.msra.mxu0 0.0
      %2872 = vmatprep.subr.mxu0 0.0
      %2873 = vmatpush1.msra.mxu0 0.0
      %2874 = vmatprep.subr.mxu0 0.0
      %2875 = vmatpush1.msra.mxu0 0.0
      %2876 = vmatprep.subr.mxu0 0.0
      %2877 = vmatpush1.msra.mxu0 %v1281
      %2878 = vmatprep.subr.mxu0 0.0
      %2879 = vmatpush2.msra.mxu0 0.0
      %2880 = vmatprep.subr.mxu0 0.0
      %2881 = vmatpush2.msra.mxu0 0.0
      %2882 = vmatprep.subr.mxu0 0.0
      %2883 = vmatpush2.msra.mxu0 0.0
      %2884 = vmatprep.subr.mxu0 0.0
      %2885 = vmatpush2.msra.mxu0 0.0
      %2886 = vmatprep.subr.mxu0 0.0
      %2887 = vmatpush2.msra.mxu0 0.0
      %2888 = vmatprep.subr.mxu0 0.0
      %2889 = vmatpush2.msra.mxu0 0.0
      %2890 = vmatprep.subr.mxu0 0.0
      %2891 = vmatpush2.msra.mxu0 0.0
      %2892 = vmatprep.subr.mxu0 0.0
      %2893 = vmatpush2.msra.mxu0 0.0
      %2894 = vmatprep.subr.mxu0 0.0
      %2895 = vmatpush2.msra.mxu0 0.0
      %2896 = vmatprep.subr.mxu0 0.0
      %2897 = vmatpush2.msra.mxu0 0.0
      %2898 = vmatprep.subr.mxu0 0.0
      %2899 = vmatpush2.msra.mxu0 0.0
      %2900 = vmatprep.subr.mxu0 0.0
      %2901 = vmatpush2.msra.mxu0 0.0
      %2902 = vmatprep.subr.mxu0 0.0
      %2903 = vmatpush2.msra.mxu0 0.0
      %2904 = vmatprep.subr.mxu0 0.0
      %2905 = vmatpush2.msra.mxu0 0.0
      %2906 = vmatprep.subr.mxu0 0.0
      %2907 = vmatpush2.msra.mxu0 0.0
      %2908 = vmatprep.subr.mxu0 0.0
      %2909 = vmatpush2.msra.mxu0 0.0
      %2910 = vmatprep.mubr.f32.mxu0 0.0
      %2911 = vmatmul.mubr.f32.gmra.mxu0 %v2841
      %v2912 = vpop.f32.mrf.mxu0
      %v2913 = vadd.f32 0.0, %v2912
      %v2914 = vpop.f32.mrf.mxu0
      %2915 = vmatprep.mubr.f32.mxu0 0.0
      %2916 = vmatmul.mubr.f32.gmra.mxu0 %v2844
      %v2917 = vpop.f32.mrf.mxu0
      %v2918 = vadd.f32 0.0, %v2917
      %v2919 = vpop.f32.mrf.mxu0
      %2920 = vdwg.mxu0
      %v2921 = vadd.f32 %v2508, %v2913
      %v2922 = vadd.f32 %v2509, %v2918
      %v2923 = vadd.f32 %v956, %v2921
      %v2924 = vadd.f32 %v957, %v2922
      %v2925 = vld [vmem:[%s767] sm:$0x1]
      %v2927 = vlaneseq
      %v2928 = vshrl.u32 %v2927, 7
      %v2929 = vsub.s32 0, %v2928
      %v2930 = vrot.slane %v2925, %v2929
      %v2932 = vadd.f32 %v2923, %v2930
      %v2933 = vadd.f32 %v2924, %v2930
      %v2934 = vld [vmem:[%s770] sm:$0x1]
      %v2935 = vld [vmem:[%s773] sm:$0x1]
      %v2936 = vsel %vm960, %v2932, 0.0
      %2937 = vadd.xlane.f32.xlu0 %v2936
      %v2938 = vpop.xlane.xlu0 %2937
      %v2939 = vsel %vm960, %v2933, 0.0
      %2940 = vadd.xlane.f32.xlu0 %v2939
      %v2941 = vpop.xlane.xlu0 %2940
      %v2942 = vmul.f32 %v2938, %v967
      %v2943 = vmul.f32 %v2941, %v967
      %v2944 = vsub.f32 %v2932, %v2942
      %v2945 = vsub.f32 %v2933, %v2943
      %v2946 = vmul.f32 %v2944, %v2944
      %v2947 = vmul.f32 %v2945, %v2945
      %v2948 = vsel %vm960, %v2946, 0.0
      %2949 = vadd.xlane.f32.xlu0 %v2948
      %v2950 = vpop.xlane.xlu0 %2949
      %v2951 = vsel %vm960, %v2947, 0.0
      %2952 = vadd.xlane.f32.xlu0 %v2951
      %v2953 = vpop.xlane.xlu0 %2952
      %v2954 = vmul.f32 %v2950, %v967
      %v2955 = vmul.f32 %v2953, %v967
      %v2956 = vadd.f32 %v2954, 1e-05
      %v2957 = vadd.f32 %v2955, 1e-05
      %v2958 = vrsqrt.pop %v2956
      %v2959 = vrsqrt.pop %v2957
      %v2960 = vmul.f32 %v2944, %v2958
      %v2961 = vmul.f32 %v2945, %v2959
      %v2963 = vlaneseq
      %v2964 = vshrl.u32 %v2963, 7
      %v2965 = vsub.s32 0, %v2964
      %v2966 = vrot.slane %v2934, %v2965
      %v2968 = vmul.f32 %v2960, %v2966
      %v2969 = vmul.f32 %v2961, %v2966
      %v2971 = vlaneseq
      %v2972 = vshrl.u32 %v2971, 7
      %v2973 = vsub.s32 0, %v2972
      %v2974 = vrot.slane %v2935, %v2973
      %v2976 = vadd.f32 %v2968, %v2974
      %v2977 = vadd.f32 %v2969, %v2974
      %v2978 = vld [vmem:[%s778] sm:$0xff]
      %v2979 = vld [vmem:[%s778 + $0x8] sm:$0xff]
      %v2980 = vld [vmem:[%s778 + $0x10] sm:$0xff]
      %v2981 = vld [vmem:[%s778 + $0x18] sm:$0xff]
      %v2982 = vld [vmem:[%s781] sm:$0x1]
      %v2984 = vlaneseq
      %v2985 = vshrl.u32 %v2984, 7
      %v2986 = vsub.s32 0, %v2985
      %v2987 = vrot.slane %v2982, %v2986
      %v2990 = vsel %vm960, %v2976, 0
      %v2993 = vsel %vm960, %v2977, 0
      %2995 = vmatprep.subr.mxu0 0.0
      %2996 = vmatpush1.msra.mxu0 0.0
      %2997 = vmatprep.subr.mxu0 0.0
      %2998 = vmatpush1.msra.mxu0 0.0
      %2999 = vmatprep.subr.mxu0 0.0
      %3000 = vmatpush1.msra.mxu0 0.0
      %3001 = vmatprep.subr.mxu0 0.0
      %3002 = vmatpush1.msra.mxu0 0.0
      %3003 = vmatprep.subr.mxu0 0.0
      %3004 = vmatpush1.msra.mxu0 0.0
      %3005 = vmatprep.subr.mxu0 0.0
      %3006 = vmatpush1.msra.mxu0 0.0
      %3007 = vmatprep.subr.mxu0 0.0
      %3008 = vmatpush1.msra.mxu0 0.0
      %3009 = vmatprep.subr.mxu0 0.0
      %3010 = vmatpush1.msra.mxu0 0.0
      %3011 = vmatprep.subr.mxu0 0.0
      %3012 = vmatpush1.msra.mxu0 0.0
      %3013 = vmatprep.subr.mxu0 0.0
      %3014 = vmatpush1.msra.mxu0 0.0
      %3015 = vmatprep.subr.mxu0 0.0
      %3016 = vmatpush1.msra.mxu0 0.0
      %3017 = vmatprep.subr.mxu0 0.0
      %3018 = vmatpush1.msra.mxu0 0.0
      %3019 = vmatprep.subr.mxu0 0.0
      %3020 = vmatpush1.msra.mxu0 %v2981
      %3021 = vmatprep.subr.mxu0 0.0
      %3022 = vmatpush1.msra.mxu0 %v2980
      %3023 = vmatprep.subr.mxu0 0.0
      %3024 = vmatpush1.msra.mxu0 %v2979
      %3025 = vmatprep.subr.mxu0 0.0
      %3026 = vmatpush1.msra.mxu0 %v2978
      %3027 = vmatprep.subr.mxu0 0.0
      %3028 = vmatpush2.msra.mxu0 0.0
      %3029 = vmatprep.subr.mxu0 0.0
      %3030 = vmatpush2.msra.mxu0 0.0
      %3031 = vmatprep.subr.mxu0 0.0
      %3032 = vmatpush2.msra.mxu0 0.0
      %3033 = vmatprep.subr.mxu0 0.0
      %3034 = vmatpush2.msra.mxu0 0.0
      %3035 = vmatprep.subr.mxu0 0.0
      %3036 = vmatpush2.msra.mxu0 0.0
      %3037 = vmatprep.subr.mxu0 0.0
      %3038 = vmatpush2.msra.mxu0 0.0
      %3039 = vmatprep.subr.mxu0 0.0
      %3040 = vmatpush2.msra.mxu0 0.0
      %3041 = vmatprep.subr.mxu0 0.0
      %3042 = vmatpush2.msra.mxu0 0.0
      %3043 = vmatprep.subr.mxu0 0.0
      %3044 = vmatpush2.msra.mxu0 0.0
      %3045 = vmatprep.subr.mxu0 0.0
      %3046 = vmatpush2.msra.mxu0 0.0
      %3047 = vmatprep.subr.mxu0 0.0
      %3048 = vmatpush2.msra.mxu0 0.0
      %3049 = vmatprep.subr.mxu0 0.0
      %3050 = vmatpush2.msra.mxu0 0.0
      %3051 = vmatprep.subr.mxu0 0.0
      %3052 = vmatpush2.msra.mxu0 0.0
      %3053 = vmatprep.subr.mxu0 0.0
      %3054 = vmatpush2.msra.mxu0 0.0
      %3055 = vmatprep.subr.mxu0 0.0
      %3056 = vmatpush2.msra.mxu0 0.0
      %3057 = vmatprep.subr.mxu0 0.0
      %3058 = vmatpush2.msra.mxu0 0.0
      %3059 = vmatprep.mubr.f32.mxu0 0.0
      %3060 = vmatmul.mubr.f32.gmra.mxu0 %v2990
      %v3061 = vpop.f32.mrf.mxu0
      %v3062 = vadd.f32 %v2987, %v3061
      %v3063 = vpop.f32.mrf.mxu0
      %3064 = vmatprep.mubr.f32.mxu0 0.0
      %3065 = vmatmul.mubr.f32.gmra.mxu0 %v2993
      %v3066 = vpop.f32.mrf.mxu0
      %v3067 = vadd.f32 %v2987, %v3066
      %v3068 = vpop.f32.mrf.mxu0
      %3069 = vdwg.mxu0
      %v3070 = vmul.f32 %v3062, -1.702
      %v3071 = vmul.f32 %v3067, -1.702
      %v3072 = vmul.f32 %v3070, 1.442695
      %v3073 = vpow.pop %v3072
      %v3074 = vmul.f32 %v3071, 1.442695
      %v3075 = vpow.pop %v3074
      %v3076 = vadd.f32 %v3073, 1.0
      %v3077 = vadd.f32 %v3075, 1.0
      %v3078 = vrcp.pop %v3076
      %v3079 = vmul.f32 1.0, %v3078
      %v3080 = vrcp.pop %v3077
      %v3081 = vmul.f32 1.0, %v3080
      %v3082 = vmul.f32 %v3062, %v3079
      %v3083 = vmul.f32 %v3067, %v3081
      %v3084 = vld [vmem:[%s786] sm:$0xff]
      %v3085 = vld [vmem:[%s786 + $0x8] sm:$0xff]
      %v3086 = vld [vmem:[%s786 + $0x10] sm:$0xff]
      %v3087 = vld [vmem:[%s786 + $0x18] sm:$0xff]
      %v3088 = vld [vmem:[%s786 + $0x20] sm:$0xff]
      %v3089 = vld [vmem:[%s786 + $0x28] sm:$0xff]
      %v3090 = vld [vmem:[%s786 + $0x30] sm:$0xff]
      %v3091 = vld [vmem:[%s786 + $0x38] sm:$0xff]
      %v3092 = vld [vmem:[%s786 + $0x40] sm:$0xff]
      %v3093 = vld [vmem:[%s786 + $0x48] sm:$0xff]
      %v3094 = vld [vmem:[%s786 + $0x50] sm:$0xff]
      %v3095 = vld [vmem:[%s786 + $0x58] sm:$0xff]
      %v3096 = vld [vmem:[%s786 + $0x60] sm:$0xff]
      %v3097 = vld [vmem:[%s786 + $0x68] sm:$0xff]
      %v3098 = vld [vmem:[%s786 + $0x70] sm:$0xff]
      %v3099 = vld [vmem:[%s786 + $0x78] sm:$0xff]
      %3100 = vmatprep.subr.mxu0 0.0
      %3101 = vmatpush1.msra.mxu0 %v3099
      %3102 = vmatprep.subr.mxu0 0.0
      %3103 = vmatpush1.msra.mxu0 %v3098
      %3104 = vmatprep.subr.mxu0 0.0
      %3105 = vmatpush1.msra.mxu0 %v3097
      %3106 = vmatprep.subr.mxu0 0.0
      %3107 = vmatpush1.msra.mxu0 %v3096
      %3108 = vmatprep.subr.mxu0 0.0
      %3109 = vmatpush1.msra.mxu0 %v3095
      %3110 = vmatprep.subr.mxu0 0.0
      %3111 = vmatpush1.msra.mxu0 %v3094
      %3112 = vmatprep.subr.mxu0 0.0
      %3113 = vmatpush1.msra.mxu0 %v3093
      %3114 = vmatprep.subr.mxu0 0.0
      %3115 = vmatpush1.msra.mxu0 %v3092
      %3116 = vmatprep.subr.mxu0 0.0
      %3117 = vmatpush1.msra.mxu0 %v3091
      %3118 = vmatprep.subr.mxu0 0.0
      %3119 = vmatpush1.msra.mxu0 %v3090
      %3120 = vmatprep.subr.mxu0 0.0
      %3121 = vmatpush1.msra.mxu0 %v3089
      %3122 = vmatprep.subr.mxu0 0.0
      %3123 = vmatpush1.msra.mxu0 %v3088
      %3124 = vmatprep.subr.mxu0 0.0
      %3125 = vmatpush1.msra.mxu0 %v3087
      %3126 = vmatprep.subr.mxu0 0.0
      %3127 = vmatpush1.msra.mxu0 %v3086
      %3128 = vmatprep.subr.mxu0 0.0
      %3129 = vmatpush1.msra.mxu0 %v3085
      %3130 = vmatprep.subr.mxu0 0.0
      %3131 = vmatpush1.msra.mxu0 %v3084
      %3132 = vmatprep.subr.mxu0 0.0
      %3133 = vmatpush2.msra.mxu0 0.0
      %3134 = vmatprep.subr.mxu0 0.0
      %3135 = vmatpush2.msra.mxu0 0.0
      %3136 = vmatprep.subr.mxu0 0.0
      %3137 = vmatpush2.msra.mxu0 0.0
      %3138 = vmatprep.subr.mxu0 0.0
      %3139 = vmatpush2.msra.mxu0 0.0
      %3140 = vmatprep.subr.mxu0 0.0
      %3141 = vmatpush2.msra.mxu0 0.0
      %3142 = vmatprep.subr.mxu0 0.0
      %3143 = vmatpush2.msra.mxu0 0.0
      %3144 = vmatprep.subr.mxu0 0.0
      %3145 = vmatpush2.msra.mxu0 0.0
      %3146 = vmatprep.subr.mxu0 0.0
      %3147 = vmatpush2.msra.mxu0 0.0
      %3148 = vmatprep.subr.mxu0 0.0
      %3149 = vmatpush2.msra.mxu0 0.0
      %3150 = vmatprep.subr.mxu0 0.0
      %3151 = vmatpush2.msra.mxu0 0.0
      %3152 = vmatprep.subr.mxu0 0.0
      %3153 = vmatpush2.msra.mxu0 0.0
      %3154 = vmatprep.subr.mxu0 0.0
      %3155 = vmatpush2.msra.mxu0 0.0
      %3156 = vmatprep.subr.mxu0 0.0
      %3157 = vmatpush2.msra.mxu0 0.0
      %3158 = vmatprep.subr.mxu0 0.0
      %3159 = vmatpush2.msra.mxu0 0.0
      %3160 = vmatprep.subr.mxu0 0.0
      %3161 = vmatpush2.msra.mxu0 0.0
      %3162 = vmatprep.subr.mxu0 0.0
      %3163 = vmatpush2.msra.mxu0 0.0
      %3164 = vmatprep.mubr.f32.mxu0 0.0
      %3165 = vmatmul.mubr.f32.gmra.mxu0 %v3082
      %v3166 = vpop.f32.mrf.mxu0
      %v3167 = vadd.f32 0.0, %v3166
      %v3168 = vpop.f32.mrf.mxu0
      %3169 = vmatprep.mubr.f32.mxu0 0.0
      %3170 = vmatmul.mubr.f32.gmra.mxu0 %v3083
      %v3171 = vpop.f32.mrf.mxu0
      %v3172 = vadd.f32 0.0, %v3171
      %v3173 = vpop.f32.mrf.mxu0
      %3174 = vdwg.mxu0
      %v3175 = vadd.f32 %v2932, %v3167
      %v3176 = vadd.f32 %v2933, %v3172
      %v3177 = vld [vmem:[%s789] sm:$0x1]
      %v3179 = vlaneseq
      %v3180 = vshrl.u32 %v3179, 7
      %v3181 = vsub.s32 0, %v3180
      %v3182 = vrot.slane %v3177, %v3181
      %v3184 = vadd.f32 %v3175, %v3182
      %v3185 = vadd.f32 %v3176, %v3182
      %3186 = vst.msk [vmem:[#allocation2] sm:$0xff] %vm960, %v3184
      %3187 = vst.msk [vmem:[#allocation2 + $0x8] sm:$0xff] %vm960, %v3185
      %p3188 = scmp.eq.s32.totalorder %s31, 1
      // Predicated region
      $region105: #{clip_visual_forward.1} parent=99 // pred_check
        %p3189 = pneg %p3188
      $region106: #{clip_visual_forward.1} parent=99 // pred_check_branch
        %3191 = sbr.rel (%p3189) target = $region108
      $region107: #{clip_visual_forward.1} parent=99 // pred_region
        %v3192 = vld [vmem:[#allocation2] sm:$0xff]
        %v3193 = vld [vmem:[#allocation2 + $0x8] sm:$0xff]
        %v3194 = vld [vmem:[%s5] sm:$0x1]
        %v3195 = vld [vmem:[%s6] sm:$0x1]
        %v3196 = vsel %vm960, %v3192, 0.0
        %3197 = vadd.xlane.f32.xlu0 %v3196
        %v3198 = vpop.xlane.xlu0 %3197
        %v3199 = vsel %vm960, %v3193, 0.0
        %3200 = vadd.xlane.f32.xlu0 %v3199
        %v3201 = vpop.xlane.xlu0 %3200
        %v3202 = vmul.f32 %v3198, %v967
        %v3203 = vmul.f32 %v3201, %v967
        %v3204 = vsub.f32 %v3192, %v3202
        %v3205 = vsub.f32 %v3193, %v3203
        %v3206 = vmul.f32 %v3204, %v3204
        %v3207 = vmul.f32 %v3205, %v3205
        %v3208 = vsel %vm960, %v3206, 0.0
        %3209 = vadd.xlane.f32.xlu0 %v3208
        %v3210 = vpop.xlane.xlu0 %3209
        %v3211 = vsel %vm960, %v3207, 0.0
        %3212 = vadd.xlane.f32.xlu0 %v3211
        %v3213 = vpop.xlane.xlu0 %3212
        %v3214 = vmul.f32 %v3210, %v967
        %v3215 = vmul.f32 %v3213, %v967
        %v3216 = vadd.f32 %v3214, 1e-05
        %v3217 = vadd.f32 %v3215, 1e-05
        %v3218 = vrsqrt.pop %v3216
        %v3219 = vrsqrt.pop %v3217
        %v3220 = vmul.f32 %v3204, %v3218
        %v3221 = vmul.f32 %v3205, %v3219
        %v3223 = vlaneseq
        %v3224 = vshrl.u32 %v3223, 7
        %v3225 = vsub.s32 0, %v3224
        %v3226 = vrot.slane %v3194, %v3225
        %v3228 = vmul.f32 %v3220, %v3226
        %v3229 = vmul.f32 %v3221, %v3226
        %v3231 = vlaneseq
        %v3232 = vshrl.u32 %v3231, 7
        %v3233 = vsub.s32 0, %v3232
        %v3234 = vrot.slane %v3195, %v3233
        %v3236 = vadd.f32 %v3228, %v3234
        %v3237 = vadd.f32 %v3229, %v3234
        %v3238 = vld [vmem:[%s7] sm:$0xff]
        %v3239 = vld [vmem:[%s7 + $0x8] sm:$0xff]
        %v3240 = vld [vmem:[%s7 + $0x10] sm:$0xff]
        %v3241 = vld [vmem:[%s7 + $0x18] sm:$0xff]
        %v3243 = vsel %vm960, %v3236, 0
        %v3246 = vsel %vm960, %v3237, 0
        %3248 = vmatprep.subr.mxu0 0.0
        %3249 = vmatpush1.msra.mxu0 0.0
        %3250 = vmatprep.subr.mxu0 0.0
        %3251 = vmatpush1.msra.mxu0 0.0
        %3252 = vmatprep.subr.mxu0 0.0
        %3253 = vmatpush1.msra.mxu0 0.0
        %3254 = vmatprep.subr.mxu0 0.0
        %3255 = vmatpush1.msra.mxu0 0.0
        %3256 = vmatprep.subr.mxu0 0.0
        %3257 = vmatpush1.msra.mxu0 0.0
        %3258 = vmatprep.subr.mxu0 0.0
        %3259 = vmatpush1.msra.mxu0 0.0
        %3260 = vmatprep.subr.mxu0 0.0
        %3261 = vmatpush1.msra.mxu0 0.0
        %3262 = vmatprep.subr.mxu0 0.0
        %3263 = vmatpush1.msra.mxu0 0.0
        %3264 = vmatprep.subr.mxu0 0.0
        %3265 = vmatpush1.msra.mxu0 0.0
        %3266 = vmatprep.subr.mxu0 0.0
        %3267 = vmatpush1.msra.mxu0 0.0
        %3268 = vmatprep.subr.mxu0 0.0
        %3269 = vmatpush1.msra.mxu0 0.0
        %3270 = vmatprep.subr.mxu0 0.0
        %3271 = vmatpush1.msra.mxu0 0.0
        %3272 = vmatprep.subr.mxu0 0.0
        %3273 = vmatpush1.msra.mxu0 %v3241
        %3274 = vmatprep.subr.mxu0 0.0
        %3275 = vmatpush1.msra.mxu0 %v3240
        %3276 = vmatprep.subr.mxu0 0.0
        %3277 = vmatpush1.msra.mxu0 %v3239
        %3278 = vmatprep.subr.mxu0 0.0
        %3279 = vmatpush1.msra.mxu0 %v3238
        %3280 = vmatprep.subr.mxu0 0.0
        %3281 = vmatpush2.msra.mxu0 0.0
        %3282 = vmatprep.subr.mxu0 0.0
        %3283 = vmatpush2.msra.mxu0 0.0
        %3284 = vmatprep.subr.mxu0 0.0
        %3285 = vmatpush2.msra.mxu0 0.0
        %3286 = vmatprep.subr.mxu0 0.0
        %3287 = vmatpush2.msra.mxu0 0.0
        %3288 = vmatprep.subr.mxu0 0.0
        %3289 = vmatpush2.msra.mxu0 0.0
        %3290 = vmatprep.subr.mxu0 0.0
        %3291 = vmatpush2.msra.mxu0 0.0
        %3292 = vmatprep.subr.mxu0 0.0
        %3293 = vmatpush2.msra.mxu0 0.0
        %3294 = vmatprep.subr.mxu0 0.0
        %3295 = vmatpush2.msra.mxu0 0.0
        %3296 = vmatprep.subr.mxu0 0.0
        %3297 = vmatpush2.msra.mxu0 0.0
        %3298 = vmatprep.subr.mxu0 0.0
        %3299 = vmatpush2.msra.mxu0 0.0
        %3300 = vmatprep.subr.mxu0 0.0
        %3301 = vmatpush2.msra.mxu0 0.0
        %3302 = vmatprep.subr.mxu0 0.0
        %3303 = vmatpush2.msra.mxu0 0.0
        %3304 = vmatprep.subr.mxu0 0.0
        %3305 = vmatpush2.msra.mxu0 0.0
        %3306 = vmatprep.subr.mxu0 0.0
        %3307 = vmatpush2.msra.mxu0 0.0
        %3308 = vmatprep.subr.mxu0 0.0
        %3309 = vmatpush2.msra.mxu0 0.0
        %3310 = vmatprep.subr.mxu0 0.0
        %3311 = vmatpush2.msra.mxu0 0.0
        %3312 = vmatprep.mubr.f32.mxu0 0.0
        %3313 = vmatmul.mubr.f32.gmra.mxu0 %v3243
        %v3314 = vpop.f32.mrf.mxu0
        %v3315 = vadd.f32 0.0, %v3314
        %v3316 = vpop.f32.mrf.mxu0
        %3317 = vmatprep.mubr.f32.mxu0 0.0
        %3318 = vmatmul.mubr.f32.gmra.mxu0 %v3246
        %v3319 = vpop.f32.mrf.mxu0
        %v3320 = vadd.f32 0.0, %v3319
        %v3321 = vpop.f32.mrf.mxu0
        %3322 = vdwg.mxu0
        %3323 = vst [vmem:[%s20] sm:$0xff] %v3315
        %3324 = vst [vmem:[%s20 + $0x8] sm:$0xff] %v3320
      $region108: #{clip_visual_forward.1} parent=99 // pred_fallthru
        _
      // Predicated region
      $region109: #{clip_visual_forward.1} parent=99 // pred_check
        %p3325 = pneg %p524
      $region110: #{clip_visual_forward.1} parent=99 // pred_check_branch
        %3327 = sbr.rel (%p3325) target = $region112
      $region111: #{clip_visual_forward.1} parent=99 // pred_region
        _
      $region112: #{clip_visual_forward.1} parent=99 // pred_fallthru
        _
      // Predicated region
      $region113: #{clip_visual_forward.1} parent=99 // pred_check
        %p3328 = pneg %p524
      $region114: #{clip_visual_forward.1} parent=99 // pred_check_branch
        %3330 = sbr.rel (%p3328) target = $region116
      $region115: #{clip_visual_forward.1} parent=99 // pred_region
        _
      $region116: #{clip_visual_forward.1} parent=99 // pred_fallthru
        _
    $region100: #{clip_visual_forward.1} parent=5 // pred_fallthru
      _
    %p3331 = scmp.le.s32.totalorder 2, %s26
    // Predicated region
    $region117: #{clip_visual_forward.1} parent=5 // pred_check
      %p3332 = pneg %p3331
    $region118: #{clip_visual_forward.1} parent=5 // pred_check_branch
      %3334 = sbr.rel (%p3332) target = $region120
    $region119: #{clip_visual_forward.1} parent=5 // pred_region
      %s3335 = ssub.s32 %s26, 2
    $region120: #{clip_visual_forward.1} parent=5 // pred_fallthru
      _
  $region6: #{clip_visual_forward.1} parent=0 // loop_footer
    %s30 = sadd.s32 1, %s26
  $region7: #{clip_visual_forward.1} parent=0 // loop_footer_branch
    %25 = sbr.rel target = $region3
  $region8: #{clip_visual_forward.1} parent=0 // loop_exit
    _

</llo_original>
